<compile_context>
chip_gen: v6e
topology: v6e:2x2x1
jax: 0.10.0
libtpu: 0.0.40
codegen_flags: <defaults>
</compile_context>

<pallas_src>
import functools

import jax
import jax.numpy as jnp
from jax.experimental import pallas as pl
from jax.experimental.pallas import tpu as pltpu

LANE = 128
MIN_TILE_M = 16     # sublane multiple that is safe for bf16-packed rows


def _round_up(x, m):
    return ((x + m - 1) // m) * m


def mlp_head_kernel(x_ref, w1_ref, w2_ref, w3_ref, b_ref, o_ref, *,
                    h1_dim, h2_dim):
    """Fused 3-layer MLP head on one [TILE_M, 768] batch tile.

    x_ref : [TILE_M, 768]           bf16 (cast in-kernel only if given f32)
    w1    : [768, 1024]             bf16
    w2    : [1024, 512]             bf16
    w3    : [512, Lp]               bf16   (Lp = num_labels padded to 128)
    b_ref : [1, 1024 + 512 + Lp]    f32    (b1 | b2 | b3 packed, lane-aligned)
    o_ref : [TILE_M, Lp]            f32
    """
    x = x_ref[...]
    if x.dtype != jnp.bfloat16:           # trace-time branch; normally a no-op
        x = x.astype(jnp.bfloat16)

    b1 = b_ref[:, :h1_dim]
    b2 = b_ref[:, h1_dim:h1_dim + h2_dim]
    b3 = b_ref[:, h1_dim + h2_dim:]

    h1 = jnp.dot(x, w1_ref[...], preferred_element_type=jnp.float32)
    h1 = jnp.maximum(h1 + b1, 0.0).astype(jnp.bfloat16)       # ReLU

    h2 = jnp.dot(h1, w2_ref[...], preferred_element_type=jnp.float32)
    h2 = jnp.maximum(h2 + b2, 0.0).astype(jnp.bfloat16)       # ReLU

    out = jnp.dot(h2, w3_ref[...], preferred_element_type=jnp.float32)
    o_ref[...] = out + b3                                      # final linear


@functools.partial(jax.jit, static_argnames=("num_labels",))
def openclip_classifier_head(image_features, kparams, num_labels):
    """Runs the classification head on [B, 768] CLIP image features (bf16)."""
    w1, w2, w3p, b_packed = kparams
    B, F = image_features.shape
    H1 = w1.shape[1]
    H2 = w2.shape[1]
    Lp = w3p.shape[1]

    # Single grid step for serving-size batches; 256-row tiles for large B
    # (amortizes ~0.35 us/step overhead and keeps the MXU drain deep).
    tile_m = 256 if B > 256 else _round_up(max(B, 1), MIN_TILE_M)
    b_pad = _round_up(B, tile_m)
    x = image_features
    if b_pad != B:
        x = jnp.pad(x, ((0, b_pad - B), (0, 0)))

    grid = (b_pad // tile_m,)
    single_buf = pl.Buffered(1)   # constant-index operands: no double buffer

    out = pl.pallas_call(
        functools.partial(mlp_head_kernel, h1_dim=H1, h2_dim=H2),
        out_shape=jax.ShapeDtypeStruct((b_pad, Lp), jnp.float32),
        grid_spec=pltpu.PrefetchScalarGridSpec(
            num_scalar_prefetch=0,
            grid=grid,
            in_specs=[
                pl.BlockSpec((tile_m, F), lambda i: (i, 0)),   # x tiles stream
                pl.BlockSpec(w1.shape, lambda i: (0, 0),       # weights resident
                             pipeline_mode=single_buf),
                pl.BlockSpec(w2.shape, lambda i: (0, 0),
                             pipeline_mode=single_buf),
                pl.BlockSpec(w3p.shape, lambda i: (0, 0),
                             pipeline_mode=single_buf),
                pl.BlockSpec(b_packed.shape, lambda i: (0, 0),
                             pipeline_mode=single_buf),
            ],
            out_specs=pl.BlockSpec((tile_m, Lp), lambda i: (i, 0)),
        ),
        compiler_params=pltpu.CompilerParams(
            dimension_semantics=("parallel",),   # v7x: 2 TCs share batch axis
            vmem_limit_bytes=32 << 20,
        ),
    )(x, w1, w2, w3p, b_packed)

    return out[:B, :num_labels]


def init_params(key, num_labels=2):
    """PyTorch-style init (uniform +-1/sqrt(fan_in)), weights stored (out, in)."""
    def linear(k, fan_in, fan_out):
        kw, kb = jax.random.split(k)
        bound = 1.0 / jnp.sqrt(fan_in)
        w_pt = jax.random.uniform(kw, (fan_out, fan_in), jnp.float32,
                                  minval=-bound, maxval=bound)
        b = jax.random.uniform(kb, (fan_out,), jnp.float32,
                               minval=-bound, maxval=bound)
        return w_pt, b

    k1, k2, k3 = jax.random.split(key, 3)
    return (*linear(k1, 768, 1024), *linear(k2, 1024, 512),
            *linear(k3, 512, num_labels))


def prepare_kernel_params(pt_params, num_labels):
    """(out,in) f32 PyTorch params -> kernel layout:
       weights transposed to (in,out) and cast bf16; final layer zero-padded
       on the label axis to a 128-lane multiple; biases packed into one
       lane-aligned f32 row [1, 1024+512+Lp]."""
    w1, b1, w2, b2, w3, b3 = pt_params
    lp = _round_up(max(num_labels, 1), LANE)
    w3p = jnp.zeros((w3.shape[1], lp), jnp.float32).at[:, :num_labels].set(w3.T)
    b3p = jnp.zeros((lp,), jnp.float32).at[:num_labels].set(b3)
    b_packed = jnp.concatenate([b1, b2, b3p]).reshape(1, -1).astype(jnp.float32)
    return (w1.T.astype(jnp.bfloat16),
            w2.T.astype(jnp.bfloat16),
            w3p.astype(jnp.bfloat16),
            b_packed)


def reference_head(image_features_f32, pt_params):
    """Pure-JAX f32 reference matching the PyTorch module."""
    w1, b1, w2, b2, w3, b3 = pt_params
    h = jnp.maximum(image_features_f32 @ w1.T + b1, 0.0)
    h = jnp.maximum(h @ w2.T + b2, 0.0)
    return h @ w3.T + b3


if __name__ == "__main__":
    key = jax.random.PRNGKey(0)
    k_feat, k_params = jax.random.split(key)

    B, FEAT_DIM, NUM_LABELS = 2, 768, 2
    # Stand-in for model.encode_image(inputs): 768-d CLIP image features,
    # emitted in bf16 by the upstream vision tower (no extra cast pass here).
    image_features = jax.random.normal(
        k_feat, (B, FEAT_DIM), jnp.float32).astype(jnp.bfloat16)

    pt_params = init_params(k_params, num_labels=NUM_LABELS)
    kparams = prepare_kernel_params(pt_params, NUM_LABELS)

    out = openclip_classifier_head(image_features, kparams, NUM_LABELS)
    out = jax.block_until_ready(out)

    ref = reference_head(image_features.astype(jnp.float32), pt_params)
    assert out.shape == (B, NUM_LABELS), out.shape
    # bf16 weights/activations in the kernel -> compare against f32 reference
    # with a correspondingly loose tolerance.
    assert jnp.allclose(out, ref, atol=5e-2, rtol=5e-2), "mismatch vs reference"

    print("KERNEL_OK")
</pallas_src>

<mosaic_0001>
module attributes {stable_mosaic.version = 11 : i64} {
  func.func @mlp_head_kernel(%arg0: i32, %arg1: memref<16x768xbf16, #tpu.memory_space<vmem>>, %arg2: memref<768x1024xbf16, #tpu.memory_space<vmem>>, %arg3: memref<1024x512xbf16, #tpu.memory_space<vmem>>, %arg4: memref<512x128xbf16, #tpu.memory_space<vmem>>, %arg5: memref<1x1664xf32, #tpu.memory_space<vmem>>, %arg6: memref<16x128xf32, #tpu.memory_space<vmem>>) attributes {dimension_semantics = [#tpu.dimension_semantics<parallel>], iteration_bounds = array<i64: 1>, scalar_prefetch = 0 : i64, scratch_operands = 0 : i64, tpu.core_type = #tpu.core_type<tc>, window_params = [{transform_indices = @transform_0, window_bounds = array<i64: 16, 768>}, {pipeline_mode = #tpu.pipeline_mode<synchronous>, transform_indices = @transform_1, window_bounds = array<i64: 768, 1024>}, {pipeline_mode = #tpu.pipeline_mode<synchronous>, transform_indices = @transform_2, window_bounds = array<i64: 1024, 512>}, {pipeline_mode = #tpu.pipeline_mode<synchronous>, transform_indices = @transform_3, window_bounds = array<i64: 512, 128>}, {pipeline_mode = #tpu.pipeline_mode<synchronous>, transform_indices = @transform_4, window_bounds = array<i64: 1, 1664>}, {transform_indices = @transform_5, window_bounds = array<i64: 16, 128>}]} {
    %c0 = arith.constant 0 : index
    %c0_0 = arith.constant 0 : index
    %0 = vector.load %arg1[%c0, %c0_0] : memref<16x768xbf16, #tpu.memory_space<vmem>>, vector<16x768xbf16>
    %c0_1 = arith.constant 0 : index
    %c0_2 = arith.constant 0 : index
    %1 = vector.load %arg5[%c0_1, %c0_2] : memref<1x1664xf32, #tpu.memory_space<vmem>>, vector<1x1024xf32>
    %c0_3 = arith.constant 0 : index
    %c1024 = arith.constant 1024 : index
    %2 = vector.load %arg5[%c0_3, %c1024] : memref<1x1664xf32, #tpu.memory_space<vmem>>, vector<1x512xf32>
    %c0_4 = arith.constant 0 : index
    %c1536 = arith.constant 1536 : index
    %3 = vector.load %arg5[%c0_4, %c1536] : memref<1x1664xf32, #tpu.memory_space<vmem>>, vector<1x128xf32>
    %c0_5 = arith.constant 0 : index
    %c0_6 = arith.constant 0 : index
    %4 = vector.load %arg2[%c0_5, %c0_6] : memref<768x1024xbf16, #tpu.memory_space<vmem>>, vector<768x1024xbf16>
    %cst = arith.constant dense<0.000000e+00> : vector<16x1024xf32>
    %5 = tpu.matmul %0, %4, %cst {dimension_numbers = #tpu.dot_dimension_numbers<[1], [0], [0], [1], [0, 0, 1, 1], [], []>} : vector<16x768xbf16>, vector<768x1024xbf16>, vector<16x1024xf32> -> vector<16x1024xf32>
    %6 = vector.broadcast %1 : vector<1x1024xf32> to vector<16x1024xf32>
    %7 = arith.addf %5, %6 : vector<16x1024xf32>
    %cst_7 = arith.constant 0.000000e+00 : f32
    %8 = vector.broadcast %cst_7 : f32 to vector<16x1024xf32>
    %9 = arith.maximumf %7, %8 : vector<16x1024xf32>
    %10 = arith.truncf %9 : vector<16x1024xf32> to vector<16x1024xbf16>
    %c0_8 = arith.constant 0 : index
    %c0_9 = arith.constant 0 : index
    %11 = vector.load %arg3[%c0_8, %c0_9] : memref<1024x512xbf16, #tpu.memory_space<vmem>>, vector<1024x512xbf16>
    %cst_10 = arith.constant dense<0.000000e+00> : vector<16x512xf32>
    %12 = tpu.matmul %10, %11, %cst_10 {dimension_numbers = #tpu.dot_dimension_numbers<[1], [0], [0], [1], [0, 0, 1, 1], [], []>} : vector<16x1024xbf16>, vector<1024x512xbf16>, vector<16x512xf32> -> vector<16x512xf32>
    %13 = vector.broadcast %2 : vector<1x512xf32> to vector<16x512xf32>
    %14 = arith.addf %12, %13 : vector<16x512xf32>
    %cst_11 = arith.constant 0.000000e+00 : f32
    %15 = vector.broadcast %cst_11 : f32 to vector<16x512xf32>
    %16 = arith.maximumf %14, %15 : vector<16x512xf32>
    %17 = arith.truncf %16 : vector<16x512xf32> to vector<16x512xbf16>
    %c0_12 = arith.constant 0 : index
    %c0_13 = arith.constant 0 : index
    %18 = vector.load %arg4[%c0_12, %c0_13] : memref<512x128xbf16, #tpu.memory_space<vmem>>, vector<512x128xbf16>
    %cst_14 = arith.constant dense<0.000000e+00> : vector<16x128xf32>
    %19 = tpu.matmul %17, %18, %cst_14 {dimension_numbers = #tpu.dot_dimension_numbers<[1], [0], [0], [1], [0, 0, 1, 1], [], []>} : vector<16x512xbf16>, vector<512x128xbf16>, vector<16x128xf32> -> vector<16x128xf32>
    %20 = vector.broadcast %3 : vector<1x128xf32> to vector<16x128xf32>
    %21 = arith.addf %19, %20 : vector<16x128xf32>
    %c0_15 = arith.constant 0 : index
    %c0_16 = arith.constant 0 : index
    %22 = vector.load %arg6[%c0_15, %c0_16] : memref<16x128xf32, #tpu.memory_space<vmem>>, vector<16x128xf32>
    tpu.vector_store %arg6[%c0_15, %c0_16], %21 {strides = array<i32>} : memref<16x128xf32, #tpu.memory_space<vmem>>, vector<16x128xf32>,
    return
  }
  func.func @transform_0(%arg0: i32) -> (i32, i32) {
    %c0_i32 = arith.constant 0 : i32
    %c0_i32_0 = arith.constant 0 : i32
    return %arg0, %c0_i32 : i32, i32
  }
  func.func @transform_1(%arg0: i32) -> (i32, i32) {
    %c0_i32 = arith.constant 0 : i32
    %c0_i32_0 = arith.constant 0 : i32
    %c0_i32_1 = arith.constant 0 : i32
    return %c0_i32, %c0_i32_0 : i32, i32
  }
  func.func @transform_2(%arg0: i32) -> (i32, i32) {
    %c0_i32 = arith.constant 0 : i32
    %c0_i32_0 = arith.constant 0 : i32
    %c0_i32_1 = arith.constant 0 : i32
    return %c0_i32, %c0_i32_0 : i32, i32
  }
  func.func @transform_3(%arg0: i32) -> (i32, i32) {
    %c0_i32 = arith.constant 0 : i32
    %c0_i32_0 = arith.constant 0 : i32
    %c0_i32_1 = arith.constant 0 : i32
    return %c0_i32, %c0_i32_0 : i32, i32
  }
  func.func @transform_4(%arg0: i32) -> (i32, i32) {
    %c0_i32 = arith.constant 0 : i32
    %c0_i32_0 = arith.constant 0 : i32
    %c0_i32_1 = arith.constant 0 : i32
    return %c0_i32, %c0_i32_0 : i32, i32
  }
  func.func @transform_5(%arg0: i32) -> (i32, i32) {
    %c0_i32 = arith.constant 0 : i32
    %c0_i32_0 = arith.constant 0 : i32
    return %arg0, %c0_i32 : i32, i32
  }
}

</mosaic_0001>

<llo_original>
// kernel: openclip_classifier_head.1
$region0: #{openclip_classifier_head.1}
  #allocation0 [shape = 'u32[]', space=smem, size = 0x4, offset = 0x4, fixed_abs, tag = 'smem constant byte address 0x4 - core index']
  #allocation1 [shape = 'u32[144,128]{1,0:T(1,128)}', space=vmem, size = 0x12000, scoped, tag = 'internal scratch']
  %s0 = inlined_call_operand.vmem [shape: bf16[16,768], index: 0, kind: input, shape index: {}]
  %s1 = inlined_call_operand.hbm [shape: bf16[768,1024], index: 1, kind: input, shape index: {}]
  %s2 = inlined_call_operand.hbm [shape: bf16[1024,512], index: 2, kind: input, shape index: {}]
  %s3 = inlined_call_operand.hbm [shape: bf16[512,128], index: 3, kind: input, shape index: {}]
  %s4 = inlined_call_operand.hbm [shape: f32[1,1664], index: 4, kind: input, shape index: {}]
  %s5 = inlined_call_operand.vmem [shape: f32[16,128], index: 5, kind: output, shape index: {}]
  %s6 = sld [smem:[#allocation0]]
  $region46: #{openclip_classifier_head.1} parent=0
    _
  %s8 = ssub.s32 1, %s6
  %s9 = scalar_select 0, %s8, %s6
  $region1: #{openclip_classifier_head.1} parent=0
    #allocation2 [shape = 'u8[1572864]{0}', space=vmem, size = 0x180000, scoped, tag = 'input window, operand 1, single buffered']
    #allocation3 [shape = 's32[1]{0}', space=sflag, size = 0x4, scoped, tag = 'scoped memory for openclip_classifier_head.1']
    #allocation4 [shape = 'u8[1048576]{0}', space=vmem, size = 0x100000, scoped, tag = 'input window, operand 2, single buffered']
    #allocation5 [shape = 's32[1]{0}', space=sflag, size = 0x4, scoped, tag = 'scoped memory for openclip_classifier_head.1']
    #allocation6 [shape = 'u8[131072]{0}', space=vmem, size = 0x20000, scoped, tag = 'input window, operand 3, single buffered']
    #allocation7 [shape = 'u8[6656]{0}', space=vmem, size = 0x1c00, scoped, tag = 'input window, operand 4, single buffered']
    #allocation8 [shape = 's32[1]{0}', space=sflag, size = 0x4, scoped, tag = 'scoped memory for openclip_classifier_head.1']
    %10 = vsyncpa [#allocation3], 0
    %11 = vsyncpa [#allocation5], 0
    %12 = vsyncpa [#allocation8], 0
    // Predicated region
    $region2: #{openclip_classifier_head.1} parent=1 // pred_check
      _
    $region3: #{openclip_classifier_head.1} parent=1 // pred_check_branch
      %14 = sbr.rel (0) target = $region5
    $region4: #{openclip_classifier_head.1} parent=1 // pred_region
      _
    $region5: #{openclip_classifier_head.1} parent=1 // pred_fallthru
      _
    // Predicated region
    $region6: #{openclip_classifier_head.1} parent=1 // pred_check
      _
    $region7: #{openclip_classifier_head.1} parent=1 // pred_check_branch
      %16 = sbr.rel (0) target = $region9
    $region8: #{openclip_classifier_head.1} parent=1 // pred_region
      %s18 = ssub.s32 49152, 49152
      %19 = vsyncadd [#allocation3], %s18
      %s20 = sshll.u32 [#allocation2], 4
      %s21 = int_to_ptr.vmem [resolvable:$true] %s20
      %26 = dma.hbm_to_vmem [thread:$0]  %s1, 49152, %s21, [#allocation3], 512, 512, 32
    $region9: #{openclip_classifier_head.1} parent=1 // pred_fallthru
      _
    // Predicated region
    $region10: #{openclip_classifier_head.1} parent=1 // pred_check
      _
    $region11: #{openclip_classifier_head.1} parent=1 // pred_check_branch
      %28 = sbr.rel (0) target = $region13
    $region12: #{openclip_classifier_head.1} parent=1 // pred_region
      %s30 = ssub.s32 32768, 32768
      %31 = vsyncadd [#allocation5], %s30
      %s32 = sshll.u32 [#allocation4], 4
      %s33 = int_to_ptr.vmem [resolvable:$true] %s32
      %38 = dma.hbm_to_vmem [thread:$0]  %s2, 32768, %s33, [#allocation5], 256, 256, 16
    $region13: #{openclip_classifier_head.1} parent=1 // pred_fallthru
      _
    // Predicated region
    $region14: #{openclip_classifier_head.1} parent=1 // pred_check
      _
    $region15: #{openclip_classifier_head.1} parent=1 // pred_check_branch
      %40 = sbr.rel (0) target = $region17
    $region16: #{openclip_classifier_head.1} parent=1 // pred_region
      %s42 = ssub.s32 4096, 4096
      %43 = vsyncadd [#allocation5], %s42
      %s44 = sshll.u32 [#allocation6], 4
      %s45 = int_to_ptr.vmem [resolvable:$true] %s44
      %50 = dma.hbm_to_vmem [thread:$0]  %s3, 4096, %s45, [#allocation5], 64, 64, 4
    $region17: #{openclip_classifier_head.1} parent=1 // pred_fallthru
      _
    // Predicated region
    $region18: #{openclip_classifier_head.1} parent=1 // pred_check
      _
    $region19: #{openclip_classifier_head.1} parent=1 // pred_check_branch
      %52 = sbr.rel (0) target = $region21
    $region20: #{openclip_classifier_head.1} parent=1 // pred_region
      %s54 = ssub.s32 208, 208
      %55 = vsyncadd [#allocation8], %s54
      %s57 = sshll.u32 [#allocation7], 4
      %s58 = int_to_ptr.vmem [resolvable:$true] %s57
      %60 = dma.hbm_to_vmem [thread:$0]  %s4, 208, %s58, [#allocation8]
    $region21: #{openclip_classifier_head.1} parent=1 // pred_fallthru
      _
    // Predicated region
    $region22: #{openclip_classifier_head.1} parent=1 // pred_check
      _
    $region23: #{openclip_classifier_head.1} parent=1 // pred_check_branch
      %62 = sbr.rel (0) target = $region25
    $region24: #{openclip_classifier_head.1} parent=1 // pred_region
      %63 = dma.done [#allocation3], 49152
    $region25: #{openclip_classifier_head.1} parent=1 // pred_fallthru
      _
    // Predicated region
    $region26: #{openclip_classifier_head.1} parent=1 // pred_check
      _
    $region27: #{openclip_classifier_head.1} parent=1 // pred_check_branch
      %65 = sbr.rel (0) target = $region29
    $region28: #{openclip_classifier_head.1} parent=1 // pred_region
      %66 = dma.done [#allocation5], 32768
    $region29: #{openclip_classifier_head.1} parent=1 // pred_fallthru
      _
    // Predicated region
    $region30: #{openclip_classifier_head.1} parent=1 // pred_check
      _
    $region31: #{openclip_classifier_head.1} parent=1 // pred_check_branch
      %68 = sbr.rel (0) target = $region33
    $region32: #{openclip_classifier_head.1} parent=1 // pred_region
      %69 = dma.done [#allocation5], 4096
    $region33: #{openclip_classifier_head.1} parent=1 // pred_fallthru
      _
    // Predicated region
    $region34: #{openclip_classifier_head.1} parent=1 // pred_check
      _
    $region35: #{openclip_classifier_head.1} parent=1 // pred_check_branch
      %71 = sbr.rel (0) target = $region37
    $region36: #{openclip_classifier_head.1} parent=1 // pred_region
      %72 = dma.done [#allocation8], 208
    $region37: #{openclip_classifier_head.1} parent=1 // pred_fallthru
      _
    %v74 = vld [vmem:[%s0] sm:$0xff]
    %v75 = vld [vmem:[%s0 + $0x8] sm:$0xff]
    %v76 = vld [vmem:[%s0 + $0x10] sm:$0xff]
    %v77 = vld [vmem:[%s0 + $0x18] sm:$0xff]
    %v78 = vld [vmem:[%s0 + $0x20] sm:$0xff]
    %v79 = vld [vmem:[%s0 + $0x28] sm:$0xff]
    %v80 = vld [vmem:[#allocation7] sm:$0xff]
    %v81 = vld [vmem:[#allocation7 + $0x8] sm:$0xf]
    %v82 = vld [vmem:[#allocation7 + $0xc] sm:$0x1]
    %v83 = vld [vmem:[#allocation2] sm:$0xff]
    %v84 = vld [vmem:[#allocation2 + $0x8] sm:$0xff]
    %v85 = vld [vmem:[#allocation2 + $0x10] sm:$0xff]
    %v86 = vld [vmem:[#allocation2 + $0x18] sm:$0xff]
    %v87 = vld [vmem:[#allocation2 + $0x20] sm:$0xff]
    %v88 = vld [vmem:[#allocation2 + $0x28] sm:$0xff]
    %v89 = vld [vmem:[#allocation2 + $0x30] sm:$0xff]
    %v90 = vld [vmem:[#allocation2 + $0x38] sm:$0xff]
    %v91 = vld [vmem:[#allocation2 + $0x40] sm:$0xff]
    %v92 = vld [vmem:[#allocation2 + $0x48] sm:$0xff]
    %v93 = vld [vmem:[#allocation2 + $0x50] sm:$0xff]
    %v94 = vld [vmem:[#allocation2 + $0x58] sm:$0xff]
    %v95 = vld [vmem:[#allocation2 + $0x60] sm:$0xff]
    %v96 = vld [vmem:[#allocation2 + $0x68] sm:$0xff]
    %v97 = vld [vmem:[#allocation2 + $0x70] sm:$0xff]
    %v98 = vld [vmem:[#allocation2 + $0x78] sm:$0xff]
    %v99 = vld [vmem:[#allocation2 + $0x80] sm:$0xff]
    %v100 = vld [vmem:[#allocation2 + $0x88] sm:$0xff]
    %v101 = vld [vmem:[#allocation2 + $0x90] sm:$0xff]
    %v102 = vld [vmem:[#allocation2 + $0x98] sm:$0xff]
    %v103 = vld [vmem:[#allocation2 + $0xa0] sm:$0xff]
    %v104 = vld [vmem:[#allocation2 + $0xa8] sm:$0xff]
    %v105 = vld [vmem:[#allocation2 + $0xb0] sm:$0xff]
    %v106 = vld [vmem:[#allocation2 + $0xb8] sm:$0xff]
    %v107 = vld [vmem:[#allocation2 + $0xc0] sm:$0xff]
    %v108 = vld [vmem:[#allocation2 + $0xc8] sm:$0xff]
    %v109 = vld [vmem:[#allocation2 + $0xd0] sm:$0xff]
    %v110 = vld [vmem:[#allocation2 + $0xd8] sm:$0xff]
    %v111 = vld [vmem:[#allocation2 + $0xe0] sm:$0xff]
    %v112 = vld [vmem:[#allocation2 + $0xe8] sm:$0xff]
    %v113 = vld [vmem:[#allocation2 + $0xf0] sm:$0xff]
    %v114 = vld [vmem:[#allocation2 + $0xf8] sm:$0xff]
    %v115 = vld [vmem:[#allocation2 + $0x100] sm:$0xff]
    %v116 = vld [vmem:[#allocation2 + $0x108] sm:$0xff]
    %v117 = vld [vmem:[#allocation2 + $0x110] sm:$0xff]
    %v118 = vld [vmem:[#allocation2 + $0x118] sm:$0xff]
    %v119 = vld [vmem:[#allocation2 + $0x120] sm:$0xff]
    %v120 = vld [vmem:[#allocation2 + $0x128] sm:$0xff]
    %v121 = vld [vmem:[#allocation2 + $0x130] sm:$0xff]
    %v122 = vld [vmem:[#allocation2 + $0x138] sm:$0xff]
    %v123 = vld [vmem:[#allocation2 + $0x140] sm:$0xff]
    %v124 = vld [vmem:[#allocation2 + $0x148] sm:$0xff]
    %v125 = vld [vmem:[#allocation2 + $0x150] sm:$0xff]
    %v126 = vld [vmem:[#allocation2 + $0x158] sm:$0xff]
    %v127 = vld [vmem:[#allocation2 + $0x160] sm:$0xff]
    %v128 = vld [vmem:[#allocation2 + $0x168] sm:$0xff]
    %v129 = vld [vmem:[#allocation2 + $0x170] sm:$0xff]
    %v130 = vld [vmem:[#allocation2 + $0x178] sm:$0xff]
    %v131 = vld [vmem:[#allocation2 + $0x180] sm:$0xff]
    %v132 = vld [vmem:[#allocation2 + $0x188] sm:$0xff]
    %v133 = vld [vmem:[#allocation2 + $0x190] sm:$0xff]
    %v134 = vld [vmem:[#allocation2 + $0x198] sm:$0xff]
    %v135 = vld [vmem:[#allocation2 + $0x1a0] sm:$0xff]
    %v136 = vld [vmem:[#allocation2 + $0x1a8] sm:$0xff]
    %v137 = vld [vmem:[#allocation2 + $0x1b0] sm:$0xff]
    %v138 = vld [vmem:[#allocation2 + $0x1b8] sm:$0xff]
    %v139 = vld [vmem:[#allocation2 + $0x1c0] sm:$0xff]
    %v140 = vld [vmem:[#allocation2 + $0x1c8] sm:$0xff]
    %v141 = vld [vmem:[#allocation2 + $0x1d0] sm:$0xff]
    %v142 = vld [vmem:[#allocation2 + $0x1d8] sm:$0xff]
    %v143 = vld [vmem:[#allocation2 + $0x1e0] sm:$0xff]
    %v144 = vld [vmem:[#allocation2 + $0x1e8] sm:$0xff]
    %v145 = vld [vmem:[#allocation2 + $0x1f0] sm:$0xff]
    %v146 = vld [vmem:[#allocation2 + $0x1f8] sm:$0xff]
    %v147 = vld [vmem:[#allocation2 + $0x200] sm:$0xff]
    %v148 = vld [vmem:[#allocation2 + $0x208] sm:$0xff]
    %v149 = vld [vmem:[#allocation2 + $0x210] sm:$0xff]
    %v150 = vld [vmem:[#allocation2 + $0x218] sm:$0xff]
    %v151 = vld [vmem:[#allocation2 + $0x220] sm:$0xff]
    %v152 = vld [vmem:[#allocation2 + $0x228] sm:$0xff]
    %v153 = vld [vmem:[#allocation2 + $0x230] sm:$0xff]
    %v154 = vld [vmem:[#allocation2 + $0x238] sm:$0xff]
    %v155 = vld [vmem:[#allocation2 + $0x240] sm:$0xff]
    %v156 = vld [vmem:[#allocation2 + $0x248] sm:$0xff]
    %v157 = vld [vmem:[#allocation2 + $0x250] sm:$0xff]
    %v158 = vld [vmem:[#allocation2 + $0x258] sm:$0xff]
    %v159 = vld [vmem:[#allocation2 + $0x260] sm:$0xff]
    %v160 = vld [vmem:[#allocation2 + $0x268] sm:$0xff]
    %v161 = vld [vmem:[#allocation2 + $0x270] sm:$0xff]
    %v162 = vld [vmem:[#allocation2 + $0x278] sm:$0xff]
    %v163 = vld [vmem:[#allocation2 + $0x280] sm:$0xff]
    %v164 = vld [vmem:[#allocation2 + $0x288] sm:$0xff]
    %v165 = vld [vmem:[#allocation2 + $0x290] sm:$0xff]
    %v166 = vld [vmem:[#allocation2 + $0x298] sm:$0xff]
    %v167 = vld [vmem:[#allocation2 + $0x2a0] sm:$0xff]
    %v168 = vld [vmem:[#allocation2 + $0x2a8] sm:$0xff]
    %v169 = vld [vmem:[#allocation2 + $0x2b0] sm:$0xff]
    %v170 = vld [vmem:[#allocation2 + $0x2b8] sm:$0xff]
    %v171 = vld [vmem:[#allocation2 + $0x2c0] sm:$0xff]
    %v172 = vld [vmem:[#allocation2 + $0x2c8] sm:$0xff]
    %v173 = vld [vmem:[#allocation2 + $0x2d0] sm:$0xff]
    %v174 = vld [vmem:[#allocation2 + $0x2d8] sm:$0xff]
    %v175 = vld [vmem:[#allocation2 + $0x2e0] sm:$0xff]
    %v176 = vld [vmem:[#allocation2 + $0x2e8] sm:$0xff]
    %v177 = vld [vmem:[#allocation2 + $0x2f0] sm:$0xff]
    %v178 = vld [vmem:[#allocation2 + $0x2f8] sm:$0xff]
    %v179 = vld [vmem:[#allocation2 + $0x300] sm:$0xff]
    %v180 = vld [vmem:[#allocation2 + $0x308] sm:$0xff]
    %v181 = vld [vmem:[#allocation2 + $0x310] sm:$0xff]
    %v182 = vld [vmem:[#allocation2 + $0x318] sm:$0xff]
    %v183 = vld [vmem:[#allocation2 + $0x320] sm:$0xff]
    %v184 = vld [vmem:[#allocation2 + $0x328] sm:$0xff]
    %v185 = vld [vmem:[#allocation2 + $0x330] sm:$0xff]
    %v186 = vld [vmem:[#allocation2 + $0x338] sm:$0xff]
    %v187 = vld [vmem:[#allocation2 + $0x340] sm:$0xff]
    %v188 = vld [vmem:[#allocation2 + $0x348] sm:$0xff]
    %v189 = vld [vmem:[#allocation2 + $0x350] sm:$0xff]
    %v190 = vld [vmem:[#allocation2 + $0x358] sm:$0xff]
    %v191 = vld [vmem:[#allocation2 + $0x360] sm:$0xff]
    %v192 = vld [vmem:[#allocation2 + $0x368] sm:$0xff]
    %v193 = vld [vmem:[#allocation2 + $0x370] sm:$0xff]
    %v194 = vld [vmem:[#allocation2 + $0x378] sm:$0xff]
    %v195 = vld [vmem:[#allocation2 + $0x380] sm:$0xff]
    %v196 = vld [vmem:[#allocation2 + $0x388] sm:$0xff]
    %v197 = vld [vmem:[#allocation2 + $0x390] sm:$0xff]
    %v198 = vld [vmem:[#allocation2 + $0x398] sm:$0xff]
    %v199 = vld [vmem:[#allocation2 + $0x3a0] sm:$0xff]
    %v200 = vld [vmem:[#allocation2 + $0x3a8] sm:$0xff]
    %v201 = vld [vmem:[#allocation2 + $0x3b0] sm:$0xff]
    %v202 = vld [vmem:[#allocation2 + $0x3b8] sm:$0xff]
    %v203 = vld [vmem:[#allocation2 + $0x3c0] sm:$0xff]
    %v204 = vld [vmem:[#allocation2 + $0x3c8] sm:$0xff]
    %v205 = vld [vmem:[#allocation2 + $0x3d0] sm:$0xff]
    %v206 = vld [vmem:[#allocation2 + $0x3d8] sm:$0xff]
    %v207 = vld [vmem:[#allocation2 + $0x3e0] sm:$0xff]
    %v208 = vld [vmem:[#allocation2 + $0x3e8] sm:$0xff]
    %v209 = vld [vmem:[#allocation2 + $0x3f0] sm:$0xff]
    %v210 = vld [vmem:[#allocation2 + $0x3f8] sm:$0xff]
    %v211 = vld [vmem:[#allocation2 + $0x400] sm:$0xff]
    %v212 = vld [vmem:[#allocation2 + $0x408] sm:$0xff]
    %v213 = vld [vmem:[#allocation2 + $0x410] sm:$0xff]
    %v214 = vld [vmem:[#allocation2 + $0x418] sm:$0xff]
    %v215 = vld [vmem:[#allocation2 + $0x420] sm:$0xff]
    %v216 = vld [vmem:[#allocation2 + $0x428] sm:$0xff]
    %v217 = vld [vmem:[#allocation2 + $0x430] sm:$0xff]
    %v218 = vld [vmem:[#allocation2 + $0x438] sm:$0xff]
    %v219 = vld [vmem:[#allocation2 + $0x440] sm:$0xff]
    %v220 = vld [vmem:[#allocation2 + $0x448] sm:$0xff]
    %v221 = vld [vmem:[#allocation2 + $0x450] sm:$0xff]
    %v222 = vld [vmem:[#allocation2 + $0x458] sm:$0xff]
    %v223 = vld [vmem:[#allocation2 + $0x460] sm:$0xff]
    %v224 = vld [vmem:[#allocation2 + $0x468] sm:$0xff]
    %v225 = vld [vmem:[#allocation2 + $0x470] sm:$0xff]
    %v226 = vld [vmem:[#allocation2 + $0x478] sm:$0xff]
    %v227 = vld [vmem:[#allocation2 + $0x480] sm:$0xff]
    %v228 = vld [vmem:[#allocation2 + $0x488] sm:$0xff]
    %v229 = vld [vmem:[#allocation2 + $0x490] sm:$0xff]
    %v230 = vld [vmem:[#allocation2 + $0x498] sm:$0xff]
    %v231 = vld [vmem:[#allocation2 + $0x4a0] sm:$0xff]
    %v232 = vld [vmem:[#allocation2 + $0x4a8] sm:$0xff]
    %v233 = vld [vmem:[#allocation2 + $0x4b0] sm:$0xff]
    %v234 = vld [vmem:[#allocation2 + $0x4b8] sm:$0xff]
    %v235 = vld [vmem:[#allocation2 + $0x4c0] sm:$0xff]
    %v236 = vld [vmem:[#allocation2 + $0x4c8] sm:$0xff]
    %v237 = vld [vmem:[#allocation2 + $0x4d0] sm:$0xff]
    %v238 = vld [vmem:[#allocation2 + $0x4d8] sm:$0xff]
    %v239 = vld [vmem:[#allocation2 + $0x4e0] sm:$0xff]
    %v240 = vld [vmem:[#allocation2 + $0x4e8] sm:$0xff]
    %v241 = vld [vmem:[#allocation2 + $0x4f0] sm:$0xff]
    %v242 = vld [vmem:[#allocation2 + $0x4f8] sm:$0xff]
    %v243 = vld [vmem:[#allocation2 + $0x500] sm:$0xff]
    %v244 = vld [vmem:[#allocation2 + $0x508] sm:$0xff]
    %v245 = vld [vmem:[#allocation2 + $0x510] sm:$0xff]
    %v246 = vld [vmem:[#allocation2 + $0x518] sm:$0xff]
    %v247 = vld [vmem:[#allocation2 + $0x520] sm:$0xff]
    %v248 = vld [vmem:[#allocation2 + $0x528] sm:$0xff]
    %v249 = vld [vmem:[#allocation2 + $0x530] sm:$0xff]
    %v250 = vld [vmem:[#allocation2 + $0x538] sm:$0xff]
    %v251 = vld [vmem:[#allocation2 + $0x540] sm:$0xff]
    %v252 = vld [vmem:[#allocation2 + $0x548] sm:$0xff]
    %v253 = vld [vmem:[#allocation2 + $0x550] sm:$0xff]
    %v254 = vld [vmem:[#allocation2 + $0x558] sm:$0xff]
    %v255 = vld [vmem:[#allocation2 + $0x560] sm:$0xff]
    %v256 = vld [vmem:[#allocation2 + $0x568] sm:$0xff]
    %v257 = vld [vmem:[#allocation2 + $0x570] sm:$0xff]
    %v258 = vld [vmem:[#allocation2 + $0x578] sm:$0xff]
    %v259 = vld [vmem:[#allocation2 + $0x580] sm:$0xff]
    %v260 = vld [vmem:[#allocation2 + $0x588] sm:$0xff]
    %v261 = vld [vmem:[#allocation2 + $0x590] sm:$0xff]
    %v262 = vld [vmem:[#allocation2 + $0x598] sm:$0xff]
    %v263 = vld [vmem:[#allocation2 + $0x5a0] sm:$0xff]
    %v264 = vld [vmem:[#allocation2 + $0x5a8] sm:$0xff]
    %v265 = vld [vmem:[#allocation2 + $0x5b0] sm:$0xff]
    %v266 = vld [vmem:[#allocation2 + $0x5b8] sm:$0xff]
    %v267 = vld [vmem:[#allocation2 + $0x5c0] sm:$0xff]
    %v268 = vld [vmem:[#allocation2 + $0x5c8] sm:$0xff]
    %v269 = vld [vmem:[#allocation2 + $0x5d0] sm:$0xff]
    %v270 = vld [vmem:[#allocation2 + $0x5d8] sm:$0xff]
    %v271 = vld [vmem:[#allocation2 + $0x5e0] sm:$0xff]
    %v272 = vld [vmem:[#allocation2 + $0x5e8] sm:$0xff]
    %v273 = vld [vmem:[#allocation2 + $0x5f0] sm:$0xff]
    %v274 = vld [vmem:[#allocation2 + $0x5f8] sm:$0xff]
    %v275 = vld [vmem:[#allocation2 + $0x600] sm:$0xff]
    %v276 = vld [vmem:[#allocation2 + $0x608] sm:$0xff]
    %v277 = vld [vmem:[#allocation2 + $0x610] sm:$0xff]
    %v278 = vld [vmem:[#allocation2 + $0x618] sm:$0xff]
    %v279 = vld [vmem:[#allocation2 + $0x620] sm:$0xff]
    %v280 = vld [vmem:[#allocation2 + $0x628] sm:$0xff]
    %v281 = vld [vmem:[#allocation2 + $0x630] sm:$0xff]
    %v282 = vld [vmem:[#allocation2 + $0x638] sm:$0xff]
    %v283 = vld [vmem:[#allocation2 + $0x640] sm:$0xff]
    %v284 = vld [vmem:[#allocation2 + $0x648] sm:$0xff]
    %v285 = vld [vmem:[#allocation2 + $0x650] sm:$0xff]
    %v286 = vld [vmem:[#allocation2 + $0x658] sm:$0xff]
    %v287 = vld [vmem:[#allocation2 + $0x660] sm:$0xff]
    %v288 = vld [vmem:[#allocation2 + $0x668] sm:$0xff]
    %v289 = vld [vmem:[#allocation2 + $0x670] sm:$0xff]
    %v290 = vld [vmem:[#allocation2 + $0x678] sm:$0xff]
    %v291 = vld [vmem:[#allocation2 + $0x680] sm:$0xff]
    %v292 = vld [vmem:[#allocation2 + $0x688] sm:$0xff]
    %v293 = vld [vmem:[#allocation2 + $0x690] sm:$0xff]
    %v294 = vld [vmem:[#allocation2 + $0x698] sm:$0xff]
    %v295 = vld [vmem:[#allocation2 + $0x6a0] sm:$0xff]
    %v296 = vld [vmem:[#allocation2 + $0x6a8] sm:$0xff]
    %v297 = vld [vmem:[#allocation2 + $0x6b0] sm:$0xff]
    %v298 = vld [vmem:[#allocation2 + $0x6b8] sm:$0xff]
    %v299 = vld [vmem:[#allocation2 + $0x6c0] sm:$0xff]
    %v300 = vld [vmem:[#allocation2 + $0x6c8] sm:$0xff]
    %v301 = vld [vmem:[#allocation2 + $0x6d0] sm:$0xff]
    %v302 = vld [vmem:[#allocation2 + $0x6d8] sm:$0xff]
    %v303 = vld [vmem:[#allocation2 + $0x6e0] sm:$0xff]
    %v304 = vld [vmem:[#allocation2 + $0x6e8] sm:$0xff]
    %v305 = vld [vmem:[#allocation2 + $0x6f0] sm:$0xff]
    %v306 = vld [vmem:[#allocation2 + $0x6f8] sm:$0xff]
    %v307 = vld [vmem:[#allocation2 + $0x700] sm:$0xff]
    %v308 = vld [vmem:[#allocation2 + $0x708] sm:$0xff]
    %v309 = vld [vmem:[#allocation2 + $0x710] sm:$0xff]
    %v310 = vld [vmem:[#allocation2 + $0x718] sm:$0xff]
    %v311 = vld [vmem:[#allocation2 + $0x720] sm:$0xff]
    %v312 = vld [vmem:[#allocation2 + $0x728] sm:$0xff]
    %v313 = vld [vmem:[#allocation2 + $0x730] sm:$0xff]
    %v314 = vld [vmem:[#allocation2 + $0x738] sm:$0xff]
    %v315 = vld [vmem:[#allocation2 + $0x740] sm:$0xff]
    %v316 = vld [vmem:[#allocation2 + $0x748] sm:$0xff]
    %v317 = vld [vmem:[#allocation2 + $0x750] sm:$0xff]
    %v318 = vld [vmem:[#allocation2 + $0x758] sm:$0xff]
    %v319 = vld [vmem:[#allocation2 + $0x760] sm:$0xff]
    %v320 = vld [vmem:[#allocation2 + $0x768] sm:$0xff]
    %v321 = vld [vmem:[#allocation2 + $0x770] sm:$0xff]
    %v322 = vld [vmem:[#allocation2 + $0x778] sm:$0xff]
    %v323 = vld [vmem:[#allocation2 + $0x780] sm:$0xff]
    %v324 = vld [vmem:[#allocation2 + $0x788] sm:$0xff]
    %v325 = vld [vmem:[#allocation2 + $0x790] sm:$0xff]
    %v326 = vld [vmem:[#allocation2 + $0x798] sm:$0xff]
    %v327 = vld [vmem:[#allocation2 + $0x7a0] sm:$0xff]
    %v328 = vld [vmem:[#allocation2 + $0x7a8] sm:$0xff]
    %v329 = vld [vmem:[#allocation2 + $0x7b0] sm:$0xff]
    %v330 = vld [vmem:[#allocation2 + $0x7b8] sm:$0xff]
    %v331 = vld [vmem:[#allocation2 + $0x7c0] sm:$0xff]
    %v332 = vld [vmem:[#allocation2 + $0x7c8] sm:$0xff]
    %v333 = vld [vmem:[#allocation2 + $0x7d0] sm:$0xff]
    %v334 = vld [vmem:[#allocation2 + $0x7d8] sm:$0xff]
    %v335 = vld [vmem:[#allocation2 + $0x7e0] sm:$0xff]
    %v336 = vld [vmem:[#allocation2 + $0x7e8] sm:$0xff]
    %v337 = vld [vmem:[#allocation2 + $0x7f0] sm:$0xff]
    %v338 = vld [vmem:[#allocation2 + $0x7f8] sm:$0xff]
    %v339 = vld [vmem:[#allocation2 + $0x800] sm:$0xff]
    %v340 = vld [vmem:[#allocation2 + $0x808] sm:$0xff]
    %v341 = vld [vmem:[#allocation2 + $0x810] sm:$0xff]
    %v342 = vld [vmem:[#allocation2 + $0x818] sm:$0xff]
    %v343 = vld [vmem:[#allocation2 + $0x820] sm:$0xff]
    %v344 = vld [vmem:[#allocation2 + $0x828] sm:$0xff]
    %v345 = vld [vmem:[#allocation2 + $0x830] sm:$0xff]
    %v346 = vld [vmem:[#allocation2 + $0x838] sm:$0xff]
    %v347 = vld [vmem:[#allocation2 + $0x840] sm:$0xff]
    %v348 = vld [vmem:[#allocation2 + $0x848] sm:$0xff]
    %v349 = vld [vmem:[#allocation2 + $0x850] sm:$0xff]
    %v350 = vld [vmem:[#allocation2 + $0x858] sm:$0xff]
    %v351 = vld [vmem:[#allocation2 + $0x860] sm:$0xff]
    %v352 = vld [vmem:[#allocation2 + $0x868] sm:$0xff]
    %v353 = vld [vmem:[#allocation2 + $0x870] sm:$0xff]
    %v354 = vld [vmem:[#allocation2 + $0x878] sm:$0xff]
    %v355 = vld [vmem:[#allocation2 + $0x880] sm:$0xff]
    %v356 = vld [vmem:[#allocation2 + $0x888] sm:$0xff]
    %v357 = vld [vmem:[#allocation2 + $0x890] sm:$0xff]
    %v358 = vld [vmem:[#allocation2 + $0x898] sm:$0xff]
    %v359 = vld [vmem:[#allocation2 + $0x8a0] sm:$0xff]
    %v360 = vld [vmem:[#allocation2 + $0x8a8] sm:$0xff]
    %v361 = vld [vmem:[#allocation2 + $0x8b0] sm:$0xff]
    %v362 = vld [vmem:[#allocation2 + $0x8b8] sm:$0xff]
    %v363 = vld [vmem:[#allocation2 + $0x8c0] sm:$0xff]
    %v364 = vld [vmem:[#allocation2 + $0x8c8] sm:$0xff]
    %v365 = vld [vmem:[#allocation2 + $0x8d0] sm:$0xff]
    %v366 = vld [vmem:[#allocation2 + $0x8d8] sm:$0xff]
    %v367 = vld [vmem:[#allocation2 + $0x8e0] sm:$0xff]
    %v368 = vld [vmem:[#allocation2 + $0x8e8] sm:$0xff]
    %v369 = vld [vmem:[#allocation2 + $0x8f0] sm:$0xff]
    %v370 = vld [vmem:[#allocation2 + $0x8f8] sm:$0xff]
    %v371 = vld [vmem:[#allocation2 + $0x900] sm:$0xff]
    %v372 = vld [vmem:[#allocation2 + $0x908] sm:$0xff]
    %v373 = vld [vmem:[#allocation2 + $0x910] sm:$0xff]
    %v374 = vld [vmem:[#allocation2 + $0x918] sm:$0xff]
    %v375 = vld [vmem:[#allocation2 + $0x920] sm:$0xff]
    %v376 = vld [vmem:[#allocation2 + $0x928] sm:$0xff]
    %v377 = vld [vmem:[#allocation2 + $0x930] sm:$0xff]
    %v378 = vld [vmem:[#allocation2 + $0x938] sm:$0xff]
    %v379 = vld [vmem:[#allocation2 + $0x940] sm:$0xff]
    %v380 = vld [vmem:[#allocation2 + $0x948] sm:$0xff]
    %v381 = vld [vmem:[#allocation2 + $0x950] sm:$0xff]
    %v382 = vld [vmem:[#allocation2 + $0x958] sm:$0xff]
    %v383 = vld [vmem:[#allocation2 + $0x960] sm:$0xff]
    %v384 = vld [vmem:[#allocation2 + $0x968] sm:$0xff]
    %v385 = vld [vmem:[#allocation2 + $0x970] sm:$0xff]
    %v386 = vld [vmem:[#allocation2 + $0x978] sm:$0xff]
    %v387 = vld [vmem:[#allocation2 + $0x980] sm:$0xff]
    %v388 = vld [vmem:[#allocation2 + $0x988] sm:$0xff]
    %v389 = vld [vmem:[#allocation2 + $0x990] sm:$0xff]
    %v390 = vld [vmem:[#allocation2 + $0x998] sm:$0xff]
    %v391 = vld [vmem:[#allocation2 + $0x9a0] sm:$0xff]
    %v392 = vld [vmem:[#allocation2 + $0x9a8] sm:$0xff]
    %v393 = vld [vmem:[#allocation2 + $0x9b0] sm:$0xff]
    %v394 = vld [vmem:[#allocation2 + $0x9b8] sm:$0xff]
    %v395 = vld [vmem:[#allocation2 + $0x9c0] sm:$0xff]
    %v396 = vld [vmem:[#allocation2 + $0x9c8] sm:$0xff]
    %v397 = vld [vmem:[#allocation2 + $0x9d0] sm:$0xff]
    %v398 = vld [vmem:[#allocation2 + $0x9d8] sm:$0xff]
    %v399 = vld [vmem:[#allocation2 + $0x9e0] sm:$0xff]
    %v400 = vld [vmem:[#allocation2 + $0x9e8] sm:$0xff]
    %v401 = vld [vmem:[#allocation2 + $0x9f0] sm:$0xff]
    %v402 = vld [vmem:[#allocation2 + $0x9f8] sm:$0xff]
    %v403 = vld [vmem:[#allocation2 + $0xa00] sm:$0xff]
    %v404 = vld [vmem:[#allocation2 + $0xa08] sm:$0xff]
    %v405 = vld [vmem:[#allocation2 + $0xa10] sm:$0xff]
    %v406 = vld [vmem:[#allocation2 + $0xa18] sm:$0xff]
    %v407 = vld [vmem:[#allocation2 + $0xa20] sm:$0xff]
    %v408 = vld [vmem:[#allocation2 + $0xa28] sm:$0xff]
    %v409 = vld [vmem:[#allocation2 + $0xa30] sm:$0xff]
    %v410 = vld [vmem:[#allocation2 + $0xa38] sm:$0xff]
    %v411 = vld [vmem:[#allocation2 + $0xa40] sm:$0xff]
    %v412 = vld [vmem:[#allocation2 + $0xa48] sm:$0xff]
    %v413 = vld [vmem:[#allocation2 + $0xa50] sm:$0xff]
    %v414 = vld [vmem:[#allocation2 + $0xa58] sm:$0xff]
    %v415 = vld [vmem:[#allocation2 + $0xa60] sm:$0xff]
    %v416 = vld [vmem:[#allocation2 + $0xa68] sm:$0xff]
    %v417 = vld [vmem:[#allocation2 + $0xa70] sm:$0xff]
    %v418 = vld [vmem:[#allocation2 + $0xa78] sm:$0xff]
    %v419 = vld [vmem:[#allocation2 + $0xa80] sm:$0xff]
    %v420 = vld [vmem:[#allocation2 + $0xa88] sm:$0xff]
    %v421 = vld [vmem:[#allocation2 + $0xa90] sm:$0xff]
    %v422 = vld [vmem:[#allocation2 + $0xa98] sm:$0xff]
    %v423 = vld [vmem:[#allocation2 + $0xaa0] sm:$0xff]
    %v424 = vld [vmem:[#allocation2 + $0xaa8] sm:$0xff]
    %v425 = vld [vmem:[#allocation2 + $0xab0] sm:$0xff]
    %v426 = vld [vmem:[#allocation2 + $0xab8] sm:$0xff]
    %v427 = vld [vmem:[#allocation2 + $0xac0] sm:$0xff]
    %v428 = vld [vmem:[#allocation2 + $0xac8] sm:$0xff]
    %v429 = vld [vmem:[#allocation2 + $0xad0] sm:$0xff]
    %v430 = vld [vmem:[#allocation2 + $0xad8] sm:$0xff]
    %v431 = vld [vmem:[#allocation2 + $0xae0] sm:$0xff]
    %v432 = vld [vmem:[#allocation2 + $0xae8] sm:$0xff]
    %v433 = vld [vmem:[#allocation2 + $0xaf0] sm:$0xff]
    %v434 = vld [vmem:[#allocation2 + $0xaf8] sm:$0xff]
    %v435 = vld [vmem:[#allocation2 + $0xb00] sm:$0xff]
    %v436 = vld [vmem:[#allocation2 + $0xb08] sm:$0xff]
    %v437 = vld [vmem:[#allocation2 + $0xb10] sm:$0xff]
    %v438 = vld [vmem:[#allocation2 + $0xb18] sm:$0xff]
    %v439 = vld [vmem:[#allocation2 + $0xb20] sm:$0xff]
    %v440 = vld [vmem:[#allocation2 + $0xb28] sm:$0xff]
    %v441 = vld [vmem:[#allocation2 + $0xb30] sm:$0xff]
    %v442 = vld [vmem:[#allocation2 + $0xb38] sm:$0xff]
    %v443 = vld [vmem:[#allocation2 + $0xb40] sm:$0xff]
    %v444 = vld [vmem:[#allocation2 + $0xb48] sm:$0xff]
    %v445 = vld [vmem:[#allocation2 + $0xb50] sm:$0xff]
    %v446 = vld [vmem:[#allocation2 + $0xb58] sm:$0xff]
    %v447 = vld [vmem:[#allocation2 + $0xb60] sm:$0xff]
    %v448 = vld [vmem:[#allocation2 + $0xb68] sm:$0xff]
    %v449 = vld [vmem:[#allocation2 + $0xb70] sm:$0xff]
    %v450 = vld [vmem:[#allocation2 + $0xb78] sm:$0xff]
    %v451 = vld [vmem:[#allocation2 + $0xb80] sm:$0xff]
    %v452 = vld [vmem:[#allocation2 + $0xb88] sm:$0xff]
    %v453 = vld [vmem:[#allocation2 + $0xb90] sm:$0xff]
    %v454 = vld [vmem:[#allocation2 + $0xb98] sm:$0xff]
    %v455 = vld [vmem:[#allocation2 + $0xba0] sm:$0xff]
    %v456 = vld [vmem:[#allocation2 + $0xba8] sm:$0xff]
    %v457 = vld [vmem:[#allocation2 + $0xbb0] sm:$0xff]
    %v458 = vld [vmem:[#allocation2 + $0xbb8] sm:$0xff]
    %v459 = vld [vmem:[#allocation2 + $0xbc0] sm:$0xff]
    %v460 = vld [vmem:[#allocation2 + $0xbc8] sm:$0xff]
    %v461 = vld [vmem:[#allocation2 + $0xbd0] sm:$0xff]
    %v462 = vld [vmem:[#allocation2 + $0xbd8] sm:$0xff]
    %v463 = vld [vmem:[#allocation2 + $0xbe0] sm:$0xff]
    %v464 = vld [vmem:[#allocation2 + $0xbe8] sm:$0xff]
    %v465 = vld [vmem:[#allocation2 + $0xbf0] sm:$0xff]
    %v466 = vld [vmem:[#allocation2 + $0xbf8] sm:$0xff]
    %v468 = vlaneseq
    %v469 = vshrl.u32 %v468, 7
    %v470 = vsub.s32 0, %v469
    %v471 = vrot.slane %v80, %v470
    %v472 = vlaneseq
    %v473 = vshrl.u32 %v472, 7
    %v474 = vsub.s32 1, %v473
    %v475 = vrot.slane %v80, %v474
    %v476 = vlaneseq
    %v477 = vshrl.u32 %v476, 7
    %v478 = vsub.s32 2, %v477
    %v479 = vrot.slane %v80, %v478
    %v480 = vlaneseq
    %v481 = vshrl.u32 %v480, 7
    %v482 = vsub.s32 3, %v481
    %v483 = vrot.slane %v80, %v482
    %v484 = vlaneseq
    %v485 = vshrl.u32 %v484, 7
    %v486 = vsub.s32 4, %v485
    %v487 = vrot.slane %v80, %v486
    %v488 = vlaneseq
    %v489 = vshrl.u32 %v488, 7
    %v490 = vsub.s32 5, %v489
    %v491 = vrot.slane %v80, %v490
    %v492 = vlaneseq
    %v493 = vshrl.u32 %v492, 7
    %v494 = vsub.s32 6, %v493
    %v495 = vrot.slane %v80, %v494
    %v496 = vlaneseq
    %v497 = vshrl.u32 %v496, 7
    %v498 = vsub.s32 7, %v497
    %v499 = vrot.slane %v80, %v498
    %v514 = vunpack.c.l.b16 %v74
    %v515 = vunpack.c.h.b16 %v74
    %v516 = vunpack.c.l.b16 %v75
    %v517 = vunpack.c.h.b16 %v75
    %v518 = vunpack.c.l.b16 %v76
    %v519 = vunpack.c.h.b16 %v76
    %v520 = vunpack.c.l.b16 %v77
    %v521 = vunpack.c.h.b16 %v77
    %v522 = vunpack.c.l.b16 %v78
    %v523 = vunpack.c.h.b16 %v78
    %v524 = vunpack.c.l.b16 %v79
    %v525 = vunpack.c.h.b16 %v79
    %v526 = vpack.c.b16 %v520, %v514
    %v527 = vpack.c.b16 %v521, %v515
    %v528 = vpack.c.b16 %v522, %v516
    %v529 = vpack.c.b16 %v523, %v517
    %v530 = vpack.c.b16 %v524, %v518
    %v531 = vpack.c.b16 %v525, %v519
    %v922 = vunpack.c.l.b16 %v83
    %v923 = vunpack.c.h.b16 %v83
    %v924 = vunpack.c.l.b16 %v84
    %v925 = vunpack.c.h.b16 %v84
    %v926 = vunpack.c.l.b16 %v85
    %v927 = vunpack.c.h.b16 %v85
    %v928 = vunpack.c.l.b16 %v86
    %v929 = vunpack.c.h.b16 %v86
    %v930 = vunpack.c.l.b16 %v87
    %v931 = vunpack.c.h.b16 %v87
    %v932 = vunpack.c.l.b16 %v88
    %v933 = vunpack.c.h.b16 %v88
    %v934 = vunpack.c.l.b16 %v89
    %v935 = vunpack.c.h.b16 %v89
    %v936 = vunpack.c.l.b16 %v90
    %v937 = vunpack.c.h.b16 %v90
    %v938 = vunpack.c.l.b16 %v91
    %v939 = vunpack.c.h.b16 %v91
    %v940 = vunpack.c.l.b16 %v92
    %v941 = vunpack.c.h.b16 %v92
    %v942 = vunpack.c.l.b16 %v93
    %v943 = vunpack.c.h.b16 %v93
    %v944 = vunpack.c.l.b16 %v94
    %v945 = vunpack.c.h.b16 %v94
    %v946 = vunpack.c.l.b16 %v95
    %v947 = vunpack.c.h.b16 %v95
    %v948 = vunpack.c.l.b16 %v96
    %v949 = vunpack.c.h.b16 %v96
    %v950 = vunpack.c.l.b16 %v97
    %v951 = vunpack.c.h.b16 %v97
    %v952 = vunpack.c.l.b16 %v98
    %v953 = vunpack.c.h.b16 %v98
    %v954 = vunpack.c.l.b16 %v99
    %v955 = vunpack.c.h.b16 %v99
    %v956 = vunpack.c.l.b16 %v100
    %v957 = vunpack.c.h.b16 %v100
    %v958 = vunpack.c.l.b16 %v101
    %v959 = vunpack.c.h.b16 %v101
    %v960 = vunpack.c.l.b16 %v102
    %v961 = vunpack.c.h.b16 %v102
    %v962 = vunpack.c.l.b16 %v103
    %v963 = vunpack.c.h.b16 %v103
    %v964 = vunpack.c.l.b16 %v104
    %v965 = vunpack.c.h.b16 %v104
    %v966 = vunpack.c.l.b16 %v105
    %v967 = vunpack.c.h.b16 %v105
    %v968 = vunpack.c.l.b16 %v106
    %v969 = vunpack.c.h.b16 %v106
    %v970 = vunpack.c.l.b16 %v107
    %v971 = vunpack.c.h.b16 %v107
    %v972 = vunpack.c.l.b16 %v108
    %v973 = vunpack.c.h.b16 %v108
    %v974 = vunpack.c.l.b16 %v109
    %v975 = vunpack.c.h.b16 %v109
    %v976 = vunpack.c.l.b16 %v110
    %v977 = vunpack.c.h.b16 %v110
    %v978 = vunpack.c.l.b16 %v111
    %v979 = vunpack.c.h.b16 %v111
    %v980 = vunpack.c.l.b16 %v112
    %v981 = vunpack.c.h.b16 %v112
    %v982 = vunpack.c.l.b16 %v113
    %v983 = vunpack.c.h.b16 %v113
    %v984 = vunpack.c.l.b16 %v114
    %v985 = vunpack.c.h.b16 %v114
    %v986 = vunpack.c.l.b16 %v115
    %v987 = vunpack.c.h.b16 %v115
    %v988 = vunpack.c.l.b16 %v116
    %v989 = vunpack.c.h.b16 %v116
    %v990 = vunpack.c.l.b16 %v117
    %v991 = vunpack.c.h.b16 %v117
    %v992 = vunpack.c.l.b16 %v118
    %v993 = vunpack.c.h.b16 %v118
    %v994 = vunpack.c.l.b16 %v119
    %v995 = vunpack.c.h.b16 %v119
    %v996 = vunpack.c.l.b16 %v120
    %v997 = vunpack.c.h.b16 %v120
    %v998 = vunpack.c.l.b16 %v121
    %v999 = vunpack.c.h.b16 %v121
    %v1000 = vunpack.c.l.b16 %v122
    %v1001 = vunpack.c.h.b16 %v122
    %v1002 = vunpack.c.l.b16 %v123
    %v1003 = vunpack.c.h.b16 %v123
    %v1004 = vunpack.c.l.b16 %v124
    %v1005 = vunpack.c.h.b16 %v124
    %v1006 = vunpack.c.l.b16 %v125
    %v1007 = vunpack.c.h.b16 %v125
    %v1008 = vunpack.c.l.b16 %v126
    %v1009 = vunpack.c.h.b16 %v126
    %v1010 = vunpack.c.l.b16 %v127
    %v1011 = vunpack.c.h.b16 %v127
    %v1012 = vunpack.c.l.b16 %v128
    %v1013 = vunpack.c.h.b16 %v128
    %v1014 = vunpack.c.l.b16 %v129
    %v1015 = vunpack.c.h.b16 %v129
    %v1016 = vunpack.c.l.b16 %v130
    %v1017 = vunpack.c.h.b16 %v130
    %v1018 = vunpack.c.l.b16 %v131
    %v1019 = vunpack.c.h.b16 %v131
    %v1020 = vunpack.c.l.b16 %v132
    %v1021 = vunpack.c.h.b16 %v132
    %v1022 = vunpack.c.l.b16 %v133
    %v1023 = vunpack.c.h.b16 %v133
    %v1024 = vunpack.c.l.b16 %v134
    %v1025 = vunpack.c.h.b16 %v134
    %v1026 = vunpack.c.l.b16 %v135
    %v1027 = vunpack.c.h.b16 %v135
    %v1028 = vunpack.c.l.b16 %v136
    %v1029 = vunpack.c.h.b16 %v136
    %v1030 = vunpack.c.l.b16 %v137
    %v1031 = vunpack.c.h.b16 %v137
    %v1032 = vunpack.c.l.b16 %v138
    %v1033 = vunpack.c.h.b16 %v138
    %v1034 = vunpack.c.l.b16 %v139
    %v1035 = vunpack.c.h.b16 %v139
    %v1036 = vunpack.c.l.b16 %v140
    %v1037 = vunpack.c.h.b16 %v140
    %v1038 = vunpack.c.l.b16 %v141
    %v1039 = vunpack.c.h.b16 %v141
    %v1040 = vunpack.c.l.b16 %v142
    %v1041 = vunpack.c.h.b16 %v142
    %v1042 = vunpack.c.l.b16 %v143
    %v1043 = vunpack.c.h.b16 %v143
    %v1044 = vunpack.c.l.b16 %v144
    %v1045 = vunpack.c.h.b16 %v144
    %v1046 = vunpack.c.l.b16 %v145
    %v1047 = vunpack.c.h.b16 %v145
    %v1048 = vunpack.c.l.b16 %v146
    %v1049 = vunpack.c.h.b16 %v146
    %v1050 = vunpack.c.l.b16 %v147
    %v1051 = vunpack.c.h.b16 %v147
    %v1052 = vunpack.c.l.b16 %v148
    %v1053 = vunpack.c.h.b16 %v148
    %v1054 = vunpack.c.l.b16 %v149
    %v1055 = vunpack.c.h.b16 %v149
    %v1056 = vunpack.c.l.b16 %v150
    %v1057 = vunpack.c.h.b16 %v150
    %v1058 = vunpack.c.l.b16 %v151
    %v1059 = vunpack.c.h.b16 %v151
    %v1060 = vunpack.c.l.b16 %v152
    %v1061 = vunpack.c.h.b16 %v152
    %v1062 = vunpack.c.l.b16 %v153
    %v1063 = vunpack.c.h.b16 %v153
    %v1064 = vunpack.c.l.b16 %v154
    %v1065 = vunpack.c.h.b16 %v154
    %v1066 = vunpack.c.l.b16 %v155
    %v1067 = vunpack.c.h.b16 %v155
    %v1068 = vunpack.c.l.b16 %v156
    %v1069 = vunpack.c.h.b16 %v156
    %v1070 = vunpack.c.l.b16 %v157
    %v1071 = vunpack.c.h.b16 %v157
    %v1072 = vunpack.c.l.b16 %v158
    %v1073 = vunpack.c.h.b16 %v158
    %v1074 = vunpack.c.l.b16 %v159
    %v1075 = vunpack.c.h.b16 %v159
    %v1076 = vunpack.c.l.b16 %v160
    %v1077 = vunpack.c.h.b16 %v160
    %v1078 = vunpack.c.l.b16 %v161
    %v1079 = vunpack.c.h.b16 %v161
    %v1080 = vunpack.c.l.b16 %v162
    %v1081 = vunpack.c.h.b16 %v162
    %v1082 = vunpack.c.l.b16 %v163
    %v1083 = vunpack.c.h.b16 %v163
    %v1084 = vunpack.c.l.b16 %v164
    %v1085 = vunpack.c.h.b16 %v164
    %v1086 = vunpack.c.l.b16 %v165
    %v1087 = vunpack.c.h.b16 %v165
    %v1088 = vunpack.c.l.b16 %v166
    %v1089 = vunpack.c.h.b16 %v166
    %v1090 = vunpack.c.l.b16 %v167
    %v1091 = vunpack.c.h.b16 %v167
    %v1092 = vunpack.c.l.b16 %v168
    %v1093 = vunpack.c.h.b16 %v168
    %v1094 = vunpack.c.l.b16 %v169
    %v1095 = vunpack.c.h.b16 %v169
    %v1096 = vunpack.c.l.b16 %v170
    %v1097 = vunpack.c.h.b16 %v170
    %v1098 = vunpack.c.l.b16 %v171
    %v1099 = vunpack.c.h.b16 %v171
    %v1100 = vunpack.c.l.b16 %v172
    %v1101 = vunpack.c.h.b16 %v172
    %v1102 = vunpack.c.l.b16 %v173
    %v1103 = vunpack.c.h.b16 %v173
    %v1104 = vunpack.c.l.b16 %v174
    %v1105 = vunpack.c.h.b16 %v174
    %v1106 = vunpack.c.l.b16 %v175
    %v1107 = vunpack.c.h.b16 %v175
    %v1108 = vunpack.c.l.b16 %v176
    %v1109 = vunpack.c.h.b16 %v176
    %v1110 = vunpack.c.l.b16 %v177
    %v1111 = vunpack.c.h.b16 %v177
    %v1112 = vunpack.c.l.b16 %v178
    %v1113 = vunpack.c.h.b16 %v178
    %v1114 = vunpack.c.l.b16 %v179
    %v1115 = vunpack.c.h.b16 %v179
    %v1116 = vunpack.c.l.b16 %v180
    %v1117 = vunpack.c.h.b16 %v180
    %v1118 = vunpack.c.l.b16 %v181
    %v1119 = vunpack.c.h.b16 %v181
    %v1120 = vunpack.c.l.b16 %v182
    %v1121 = vunpack.c.h.b16 %v182
    %v1122 = vunpack.c.l.b16 %v183
    %v1123 = vunpack.c.h.b16 %v183
    %v1124 = vunpack.c.l.b16 %v184
    %v1125 = vunpack.c.h.b16 %v184
    %v1126 = vunpack.c.l.b16 %v185
    %v1127 = vunpack.c.h.b16 %v185
    %v1128 = vunpack.c.l.b16 %v186
    %v1129 = vunpack.c.h.b16 %v186
    %v1130 = vunpack.c.l.b16 %v187
    %v1131 = vunpack.c.h.b16 %v187
    %v1132 = vunpack.c.l.b16 %v188
    %v1133 = vunpack.c.h.b16 %v188
    %v1134 = vunpack.c.l.b16 %v189
    %v1135 = vunpack.c.h.b16 %v189
    %v1136 = vunpack.c.l.b16 %v190
    %v1137 = vunpack.c.h.b16 %v190
    %v1138 = vunpack.c.l.b16 %v191
    %v1139 = vunpack.c.h.b16 %v191
    %v1140 = vunpack.c.l.b16 %v192
    %v1141 = vunpack.c.h.b16 %v192
    %v1142 = vunpack.c.l.b16 %v193
    %v1143 = vunpack.c.h.b16 %v193
    %v1144 = vunpack.c.l.b16 %v194
    %v1145 = vunpack.c.h.b16 %v194
    %v1146 = vunpack.c.l.b16 %v195
    %v1147 = vunpack.c.h.b16 %v195
    %v1148 = vunpack.c.l.b16 %v196
    %v1149 = vunpack.c.h.b16 %v196
    %v1150 = vunpack.c.l.b16 %v197
    %v1151 = vunpack.c.h.b16 %v197
    %v1152 = vunpack.c.l.b16 %v198
    %v1153 = vunpack.c.h.b16 %v198
    %v1154 = vunpack.c.l.b16 %v199
    %v1155 = vunpack.c.h.b16 %v199
    %v1156 = vunpack.c.l.b16 %v200
    %v1157 = vunpack.c.h.b16 %v200
    %v1158 = vunpack.c.l.b16 %v201
    %v1159 = vunpack.c.h.b16 %v201
    %v1160 = vunpack.c.l.b16 %v202
    %v1161 = vunpack.c.h.b16 %v202
    %v1162 = vunpack.c.l.b16 %v203
    %v1163 = vunpack.c.h.b16 %v203
    %v1164 = vunpack.c.l.b16 %v204
    %v1165 = vunpack.c.h.b16 %v204
    %v1166 = vunpack.c.l.b16 %v205
    %v1167 = vunpack.c.h.b16 %v205
    %v1168 = vunpack.c.l.b16 %v206
    %v1169 = vunpack.c.h.b16 %v206
    %v1170 = vunpack.c.l.b16 %v207
    %v1171 = vunpack.c.h.b16 %v207
    %v1172 = vunpack.c.l.b16 %v208
    %v1173 = vunpack.c.h.b16 %v208
    %v1174 = vunpack.c.l.b16 %v209
    %v1175 = vunpack.c.h.b16 %v209
    %v1176 = vunpack.c.l.b16 %v210
    %v1177 = vunpack.c.h.b16 %v210
    %v1178 = vunpack.c.l.b16 %v211
    %v1179 = vunpack.c.h.b16 %v211
    %v1180 = vunpack.c.l.b16 %v212
    %v1181 = vunpack.c.h.b16 %v212
    %v1182 = vunpack.c.l.b16 %v213
    %v1183 = vunpack.c.h.b16 %v213
    %v1184 = vunpack.c.l.b16 %v214
    %v1185 = vunpack.c.h.b16 %v214
    %v1186 = vunpack.c.l.b16 %v215
    %v1187 = vunpack.c.h.b16 %v215
    %v1188 = vunpack.c.l.b16 %v216
    %v1189 = vunpack.c.h.b16 %v216
    %v1190 = vunpack.c.l.b16 %v217
    %v1191 = vunpack.c.h.b16 %v217
    %v1192 = vunpack.c.l.b16 %v218
    %v1193 = vunpack.c.h.b16 %v218
    %v1194 = vunpack.c.l.b16 %v219
    %v1195 = vunpack.c.h.b16 %v219
    %v1196 = vunpack.c.l.b16 %v220
    %v1197 = vunpack.c.h.b16 %v220
    %v1198 = vunpack.c.l.b16 %v221
    %v1199 = vunpack.c.h.b16 %v221
    %v1200 = vunpack.c.l.b16 %v222
    %v1201 = vunpack.c.h.b16 %v222
    %v1202 = vunpack.c.l.b16 %v223
    %v1203 = vunpack.c.h.b16 %v223
    %v1204 = vunpack.c.l.b16 %v224
    %v1205 = vunpack.c.h.b16 %v224
    %v1206 = vunpack.c.l.b16 %v225
    %v1207 = vunpack.c.h.b16 %v225
    %v1208 = vunpack.c.l.b16 %v226
    %v1209 = vunpack.c.h.b16 %v226
    %v1210 = vunpack.c.l.b16 %v227
    %v1211 = vunpack.c.h.b16 %v227
    %v1212 = vunpack.c.l.b16 %v228
    %v1213 = vunpack.c.h.b16 %v228
    %v1214 = vunpack.c.l.b16 %v229
    %v1215 = vunpack.c.h.b16 %v229
    %v1216 = vunpack.c.l.b16 %v230
    %v1217 = vunpack.c.h.b16 %v230
    %v1218 = vunpack.c.l.b16 %v231
    %v1219 = vunpack.c.h.b16 %v231
    %v1220 = vunpack.c.l.b16 %v232
    %v1221 = vunpack.c.h.b16 %v232
    %v1222 = vunpack.c.l.b16 %v233
    %v1223 = vunpack.c.h.b16 %v233
    %v1224 = vunpack.c.l.b16 %v234
    %v1225 = vunpack.c.h.b16 %v234
    %v1226 = vunpack.c.l.b16 %v235
    %v1227 = vunpack.c.h.b16 %v235
    %v1228 = vunpack.c.l.b16 %v236
    %v1229 = vunpack.c.h.b16 %v236
    %v1230 = vunpack.c.l.b16 %v237
    %v1231 = vunpack.c.h.b16 %v237
    %v1232 = vunpack.c.l.b16 %v238
    %v1233 = vunpack.c.h.b16 %v238
    %v1234 = vunpack.c.l.b16 %v239
    %v1235 = vunpack.c.h.b16 %v239
    %v1236 = vunpack.c.l.b16 %v240
    %v1237 = vunpack.c.h.b16 %v240
    %v1238 = vunpack.c.l.b16 %v241
    %v1239 = vunpack.c.h.b16 %v241
    %v1240 = vunpack.c.l.b16 %v242
    %v1241 = vunpack.c.h.b16 %v242
    %v1242 = vunpack.c.l.b16 %v243
    %v1243 = vunpack.c.h.b16 %v243
    %v1244 = vunpack.c.l.b16 %v244
    %v1245 = vunpack.c.h.b16 %v244
    %v1246 = vunpack.c.l.b16 %v245
    %v1247 = vunpack.c.h.b16 %v245
    %v1248 = vunpack.c.l.b16 %v246
    %v1249 = vunpack.c.h.b16 %v246
    %v1250 = vunpack.c.l.b16 %v247
    %v1251 = vunpack.c.h.b16 %v247
    %v1252 = vunpack.c.l.b16 %v248
    %v1253 = vunpack.c.h.b16 %v248
    %v1254 = vunpack.c.l.b16 %v249
    %v1255 = vunpack.c.h.b16 %v249
    %v1256 = vunpack.c.l.b16 %v250
    %v1257 = vunpack.c.h.b16 %v250
    %v1258 = vunpack.c.l.b16 %v251
    %v1259 = vunpack.c.h.b16 %v251
    %v1260 = vunpack.c.l.b16 %v252
    %v1261 = vunpack.c.h.b16 %v252
    %v1262 = vunpack.c.l.b16 %v253
    %v1263 = vunpack.c.h.b16 %v253
    %v1264 = vunpack.c.l.b16 %v254
    %v1265 = vunpack.c.h.b16 %v254
    %v1266 = vunpack.c.l.b16 %v255
    %v1267 = vunpack.c.h.b16 %v255
    %v1268 = vunpack.c.l.b16 %v256
    %v1269 = vunpack.c.h.b16 %v256
    %v1270 = vunpack.c.l.b16 %v257
    %v1271 = vunpack.c.h.b16 %v257
    %v1272 = vunpack.c.l.b16 %v258
    %v1273 = vunpack.c.h.b16 %v258
    %v1274 = vunpack.c.l.b16 %v259
    %v1275 = vunpack.c.h.b16 %v259
    %v1276 = vunpack.c.l.b16 %v260
    %v1277 = vunpack.c.h.b16 %v260
    %v1278 = vunpack.c.l.b16 %v261
    %v1279 = vunpack.c.h.b16 %v261
    %v1280 = vunpack.c.l.b16 %v262
    %v1281 = vunpack.c.h.b16 %v262
    %v1282 = vunpack.c.l.b16 %v263
    %v1283 = vunpack.c.h.b16 %v263
    %v1284 = vunpack.c.l.b16 %v264
    %v1285 = vunpack.c.h.b16 %v264
    %v1286 = vunpack.c.l.b16 %v265
    %v1287 = vunpack.c.h.b16 %v265
    %v1288 = vunpack.c.l.b16 %v266
    %v1289 = vunpack.c.h.b16 %v266
    %v1290 = vunpack.c.l.b16 %v267
    %v1291 = vunpack.c.h.b16 %v267
    %v1292 = vunpack.c.l.b16 %v268
    %v1293 = vunpack.c.h.b16 %v268
    %v1294 = vunpack.c.l.b16 %v269
    %v1295 = vunpack.c.h.b16 %v269
    %v1296 = vunpack.c.l.b16 %v270
    %v1297 = vunpack.c.h.b16 %v270
    %v1298 = vunpack.c.l.b16 %v271
    %v1299 = vunpack.c.h.b16 %v271
    %v1300 = vunpack.c.l.b16 %v272
    %v1301 = vunpack.c.h.b16 %v272
    %v1302 = vunpack.c.l.b16 %v273
    %v1303 = vunpack.c.h.b16 %v273
    %v1304 = vunpack.c.l.b16 %v274
    %v1305 = vunpack.c.h.b16 %v274
    %v1306 = vunpack.c.l.b16 %v275
    %v1307 = vunpack.c.h.b16 %v275
    %v1308 = vunpack.c.l.b16 %v276
    %v1309 = vunpack.c.h.b16 %v276
    %v1310 = vunpack.c.l.b16 %v277
    %v1311 = vunpack.c.h.b16 %v277
    %v1312 = vunpack.c.l.b16 %v278
    %v1313 = vunpack.c.h.b16 %v278
    %v1314 = vunpack.c.l.b16 %v279
    %v1315 = vunpack.c.h.b16 %v279
    %v1316 = vunpack.c.l.b16 %v280
    %v1317 = vunpack.c.h.b16 %v280
    %v1318 = vunpack.c.l.b16 %v281
    %v1319 = vunpack.c.h.b16 %v281
    %v1320 = vunpack.c.l.b16 %v282
    %v1321 = vunpack.c.h.b16 %v282
    %v1322 = vunpack.c.l.b16 %v283
    %v1323 = vunpack.c.h.b16 %v283
    %v1324 = vunpack.c.l.b16 %v284
    %v1325 = vunpack.c.h.b16 %v284
    %v1326 = vunpack.c.l.b16 %v285
    %v1327 = vunpack.c.h.b16 %v285
    %v1328 = vunpack.c.l.b16 %v286
    %v1329 = vunpack.c.h.b16 %v286
    %v1330 = vunpack.c.l.b16 %v287
    %v1331 = vunpack.c.h.b16 %v287
    %v1332 = vunpack.c.l.b16 %v288
    %v1333 = vunpack.c.h.b16 %v288
    %v1334 = vunpack.c.l.b16 %v289
    %v1335 = vunpack.c.h.b16 %v289
    %v1336 = vunpack.c.l.b16 %v290
    %v1337 = vunpack.c.h.b16 %v290
    %v1338 = vunpack.c.l.b16 %v291
    %v1339 = vunpack.c.h.b16 %v291
    %v1340 = vunpack.c.l.b16 %v292
    %v1341 = vunpack.c.h.b16 %v292
    %v1342 = vunpack.c.l.b16 %v293
    %v1343 = vunpack.c.h.b16 %v293
    %v1344 = vunpack.c.l.b16 %v294
    %v1345 = vunpack.c.h.b16 %v294
    %v1346 = vunpack.c.l.b16 %v295
    %v1347 = vunpack.c.h.b16 %v295
    %v1348 = vunpack.c.l.b16 %v296
    %v1349 = vunpack.c.h.b16 %v296
    %v1350 = vunpack.c.l.b16 %v297
    %v1351 = vunpack.c.h.b16 %v297
    %v1352 = vunpack.c.l.b16 %v298
    %v1353 = vunpack.c.h.b16 %v298
    %v1354 = vunpack.c.l.b16 %v299
    %v1355 = vunpack.c.h.b16 %v299
    %v1356 = vunpack.c.l.b16 %v300
    %v1357 = vunpack.c.h.b16 %v300
    %v1358 = vunpack.c.l.b16 %v301
    %v1359 = vunpack.c.h.b16 %v301
    %v1360 = vunpack.c.l.b16 %v302
    %v1361 = vunpack.c.h.b16 %v302
    %v1362 = vunpack.c.l.b16 %v303
    %v1363 = vunpack.c.h.b16 %v303
    %v1364 = vunpack.c.l.b16 %v304
    %v1365 = vunpack.c.h.b16 %v304
    %v1366 = vunpack.c.l.b16 %v305
    %v1367 = vunpack.c.h.b16 %v305
    %v1368 = vunpack.c.l.b16 %v306
    %v1369 = vunpack.c.h.b16 %v306
    %v1370 = vunpack.c.l.b16 %v307
    %v1371 = vunpack.c.h.b16 %v307
    %v1372 = vunpack.c.l.b16 %v308
    %v1373 = vunpack.c.h.b16 %v308
    %v1374 = vunpack.c.l.b16 %v309
    %v1375 = vunpack.c.h.b16 %v309
    %v1376 = vunpack.c.l.b16 %v310
    %v1377 = vunpack.c.h.b16 %v310
    %v1378 = vunpack.c.l.b16 %v311
    %v1379 = vunpack.c.h.b16 %v311
    %v1380 = vunpack.c.l.b16 %v312
    %v1381 = vunpack.c.h.b16 %v312
    %v1382 = vunpack.c.l.b16 %v313
    %v1383 = vunpack.c.h.b16 %v313
    %v1384 = vunpack.c.l.b16 %v314
    %v1385 = vunpack.c.h.b16 %v314
    %v1386 = vunpack.c.l.b16 %v315
    %v1387 = vunpack.c.h.b16 %v315
    %v1388 = vunpack.c.l.b16 %v316
    %v1389 = vunpack.c.h.b16 %v316
    %v1390 = vunpack.c.l.b16 %v317
    %v1391 = vunpack.c.h.b16 %v317
    %v1392 = vunpack.c.l.b16 %v318
    %v1393 = vunpack.c.h.b16 %v318
    %v1394 = vunpack.c.l.b16 %v319
    %v1395 = vunpack.c.h.b16 %v319
    %v1396 = vunpack.c.l.b16 %v320
    %v1397 = vunpack.c.h.b16 %v320
    %v1398 = vunpack.c.l.b16 %v321
    %v1399 = vunpack.c.h.b16 %v321
    %v1400 = vunpack.c.l.b16 %v322
    %v1401 = vunpack.c.h.b16 %v322
    %v1402 = vunpack.c.l.b16 %v323
    %v1403 = vunpack.c.h.b16 %v323
    %v1404 = vunpack.c.l.b16 %v324
    %v1405 = vunpack.c.h.b16 %v324
    %v1406 = vunpack.c.l.b16 %v325
    %v1407 = vunpack.c.h.b16 %v325
    %v1408 = vunpack.c.l.b16 %v326
    %v1409 = vunpack.c.h.b16 %v326
    %v1410 = vunpack.c.l.b16 %v327
    %v1411 = vunpack.c.h.b16 %v327
    %v1412 = vunpack.c.l.b16 %v328
    %v1413 = vunpack.c.h.b16 %v328
    %v1414 = vunpack.c.l.b16 %v329
    %v1415 = vunpack.c.h.b16 %v329
    %v1416 = vunpack.c.l.b16 %v330
    %v1417 = vunpack.c.h.b16 %v330
    %v1418 = vunpack.c.l.b16 %v331
    %v1419 = vunpack.c.h.b16 %v331
    %v1420 = vunpack.c.l.b16 %v332
    %v1421 = vunpack.c.h.b16 %v332
    %v1422 = vunpack.c.l.b16 %v333
    %v1423 = vunpack.c.h.b16 %v333
    %v1424 = vunpack.c.l.b16 %v334
    %v1425 = vunpack.c.h.b16 %v334
    %v1426 = vunpack.c.l.b16 %v335
    %v1427 = vunpack.c.h.b16 %v335
    %v1428 = vunpack.c.l.b16 %v336
    %v1429 = vunpack.c.h.b16 %v336
    %v1430 = vunpack.c.l.b16 %v337
    %v1431 = vunpack.c.h.b16 %v337
    %v1432 = vunpack.c.l.b16 %v338
    %v1433 = vunpack.c.h.b16 %v338
    %v1434 = vunpack.c.l.b16 %v339
    %v1435 = vunpack.c.h.b16 %v339
    %v1436 = vunpack.c.l.b16 %v340
    %v1437 = vunpack.c.h.b16 %v340
    %v1438 = vunpack.c.l.b16 %v341
    %v1439 = vunpack.c.h.b16 %v341
    %v1440 = vunpack.c.l.b16 %v342
    %v1441 = vunpack.c.h.b16 %v342
    %v1442 = vunpack.c.l.b16 %v343
    %v1443 = vunpack.c.h.b16 %v343
    %v1444 = vunpack.c.l.b16 %v344
    %v1445 = vunpack.c.h.b16 %v344
    %v1446 = vunpack.c.l.b16 %v345
    %v1447 = vunpack.c.h.b16 %v345
    %v1448 = vunpack.c.l.b16 %v346
    %v1449 = vunpack.c.h.b16 %v346
    %v1450 = vunpack.c.l.b16 %v347
    %v1451 = vunpack.c.h.b16 %v347
    %v1452 = vunpack.c.l.b16 %v348
    %v1453 = vunpack.c.h.b16 %v348
    %v1454 = vunpack.c.l.b16 %v349
    %v1455 = vunpack.c.h.b16 %v349
    %v1456 = vunpack.c.l.b16 %v350
    %v1457 = vunpack.c.h.b16 %v350
    %v1458 = vunpack.c.l.b16 %v351
    %v1459 = vunpack.c.h.b16 %v351
    %v1460 = vunpack.c.l.b16 %v352
    %v1461 = vunpack.c.h.b16 %v352
    %v1462 = vunpack.c.l.b16 %v353
    %v1463 = vunpack.c.h.b16 %v353
    %v1464 = vunpack.c.l.b16 %v354
    %v1465 = vunpack.c.h.b16 %v354
    %v1466 = vunpack.c.l.b16 %v355
    %v1467 = vunpack.c.h.b16 %v355
    %v1468 = vunpack.c.l.b16 %v356
    %v1469 = vunpack.c.h.b16 %v356
    %v1470 = vunpack.c.l.b16 %v357
    %v1471 = vunpack.c.h.b16 %v357
    %v1472 = vunpack.c.l.b16 %v358
    %v1473 = vunpack.c.h.b16 %v358
    %v1474 = vunpack.c.l.b16 %v359
    %v1475 = vunpack.c.h.b16 %v359
    %v1476 = vunpack.c.l.b16 %v360
    %v1477 = vunpack.c.h.b16 %v360
    %v1478 = vunpack.c.l.b16 %v361
    %v1479 = vunpack.c.h.b16 %v361
    %v1480 = vunpack.c.l.b16 %v362
    %v1481 = vunpack.c.h.b16 %v362
    %v1482 = vunpack.c.l.b16 %v363
    %v1483 = vunpack.c.h.b16 %v363
    %v1484 = vunpack.c.l.b16 %v364
    %v1485 = vunpack.c.h.b16 %v364
    %v1486 = vunpack.c.l.b16 %v365
    %v1487 = vunpack.c.h.b16 %v365
    %v1488 = vunpack.c.l.b16 %v366
    %v1489 = vunpack.c.h.b16 %v366
    %v1490 = vunpack.c.l.b16 %v367
    %v1491 = vunpack.c.h.b16 %v367
    %v1492 = vunpack.c.l.b16 %v368
    %v1493 = vunpack.c.h.b16 %v368
    %v1494 = vunpack.c.l.b16 %v369
    %v1495 = vunpack.c.h.b16 %v369
    %v1496 = vunpack.c.l.b16 %v370
    %v1497 = vunpack.c.h.b16 %v370
    %v1498 = vunpack.c.l.b16 %v371
    %v1499 = vunpack.c.h.b16 %v371
    %v1500 = vunpack.c.l.b16 %v372
    %v1501 = vunpack.c.h.b16 %v372
    %v1502 = vunpack.c.l.b16 %v373
    %v1503 = vunpack.c.h.b16 %v373
    %v1504 = vunpack.c.l.b16 %v374
    %v1505 = vunpack.c.h.b16 %v374
    %v1506 = vunpack.c.l.b16 %v375
    %v1507 = vunpack.c.h.b16 %v375
    %v1508 = vunpack.c.l.b16 %v376
    %v1509 = vunpack.c.h.b16 %v376
    %v1510 = vunpack.c.l.b16 %v377
    %v1511 = vunpack.c.h.b16 %v377
    %v1512 = vunpack.c.l.b16 %v378
    %v1513 = vunpack.c.h.b16 %v378
    %v1514 = vunpack.c.l.b16 %v379
    %v1515 = vunpack.c.h.b16 %v379
    %v1516 = vunpack.c.l.b16 %v380
    %v1517 = vunpack.c.h.b16 %v380
    %v1518 = vunpack.c.l.b16 %v381
    %v1519 = vunpack.c.h.b16 %v381
    %v1520 = vunpack.c.l.b16 %v382
    %v1521 = vunpack.c.h.b16 %v382
    %v1522 = vunpack.c.l.b16 %v383
    %v1523 = vunpack.c.h.b16 %v383
    %v1524 = vunpack.c.l.b16 %v384
    %v1525 = vunpack.c.h.b16 %v384
    %v1526 = vunpack.c.l.b16 %v385
    %v1527 = vunpack.c.h.b16 %v385
    %v1528 = vunpack.c.l.b16 %v386
    %v1529 = vunpack.c.h.b16 %v386
    %v1530 = vunpack.c.l.b16 %v387
    %v1531 = vunpack.c.h.b16 %v387
    %v1532 = vunpack.c.l.b16 %v388
    %v1533 = vunpack.c.h.b16 %v388
    %v1534 = vunpack.c.l.b16 %v389
    %v1535 = vunpack.c.h.b16 %v389
    %v1536 = vunpack.c.l.b16 %v390
    %v1537 = vunpack.c.h.b16 %v390
    %v1538 = vunpack.c.l.b16 %v391
    %v1539 = vunpack.c.h.b16 %v391
    %v1540 = vunpack.c.l.b16 %v392
    %v1541 = vunpack.c.h.b16 %v392
    %v1542 = vunpack.c.l.b16 %v393
    %v1543 = vunpack.c.h.b16 %v393
    %v1544 = vunpack.c.l.b16 %v394
    %v1545 = vunpack.c.h.b16 %v394
    %v1546 = vunpack.c.l.b16 %v395
    %v1547 = vunpack.c.h.b16 %v395
    %v1548 = vunpack.c.l.b16 %v396
    %v1549 = vunpack.c.h.b16 %v396
    %v1550 = vunpack.c.l.b16 %v397
    %v1551 = vunpack.c.h.b16 %v397
    %v1552 = vunpack.c.l.b16 %v398
    %v1553 = vunpack.c.h.b16 %v398
    %v1554 = vunpack.c.l.b16 %v399
    %v1555 = vunpack.c.h.b16 %v399
    %v1556 = vunpack.c.l.b16 %v400
    %v1557 = vunpack.c.h.b16 %v400
    %v1558 = vunpack.c.l.b16 %v401
    %v1559 = vunpack.c.h.b16 %v401
    %v1560 = vunpack.c.l.b16 %v402
    %v1561 = vunpack.c.h.b16 %v402
    %v1562 = vunpack.c.l.b16 %v403
    %v1563 = vunpack.c.h.b16 %v403
    %v1564 = vunpack.c.l.b16 %v404
    %v1565 = vunpack.c.h.b16 %v404
    %v1566 = vunpack.c.l.b16 %v405
    %v1567 = vunpack.c.h.b16 %v405
    %v1568 = vunpack.c.l.b16 %v406
    %v1569 = vunpack.c.h.b16 %v406
    %v1570 = vunpack.c.l.b16 %v407
    %v1571 = vunpack.c.h.b16 %v407
    %v1572 = vunpack.c.l.b16 %v408
    %v1573 = vunpack.c.h.b16 %v408
    %v1574 = vunpack.c.l.b16 %v409
    %v1575 = vunpack.c.h.b16 %v409
    %v1576 = vunpack.c.l.b16 %v410
    %v1577 = vunpack.c.h.b16 %v410
    %v1578 = vunpack.c.l.b16 %v411
    %v1579 = vunpack.c.h.b16 %v411
    %v1580 = vunpack.c.l.b16 %v412
    %v1581 = vunpack.c.h.b16 %v412
    %v1582 = vunpack.c.l.b16 %v413
    %v1583 = vunpack.c.h.b16 %v413
    %v1584 = vunpack.c.l.b16 %v414
    %v1585 = vunpack.c.h.b16 %v414
    %v1586 = vunpack.c.l.b16 %v415
    %v1587 = vunpack.c.h.b16 %v415
    %v1588 = vunpack.c.l.b16 %v416
    %v1589 = vunpack.c.h.b16 %v416
    %v1590 = vunpack.c.l.b16 %v417
    %v1591 = vunpack.c.h.b16 %v417
    %v1592 = vunpack.c.l.b16 %v418
    %v1593 = vunpack.c.h.b16 %v418
    %v1594 = vunpack.c.l.b16 %v419
    %v1595 = vunpack.c.h.b16 %v419
    %v1596 = vunpack.c.l.b16 %v420
    %v1597 = vunpack.c.h.b16 %v420
    %v1598 = vunpack.c.l.b16 %v421
    %v1599 = vunpack.c.h.b16 %v421
    %v1600 = vunpack.c.l.b16 %v422
    %v1601 = vunpack.c.h.b16 %v422
    %v1602 = vunpack.c.l.b16 %v423
    %v1603 = vunpack.c.h.b16 %v423
    %v1604 = vunpack.c.l.b16 %v424
    %v1605 = vunpack.c.h.b16 %v424
    %v1606 = vunpack.c.l.b16 %v425
    %v1607 = vunpack.c.h.b16 %v425
    %v1608 = vunpack.c.l.b16 %v426
    %v1609 = vunpack.c.h.b16 %v426
    %v1610 = vunpack.c.l.b16 %v427
    %v1611 = vunpack.c.h.b16 %v427
    %v1612 = vunpack.c.l.b16 %v428
    %v1613 = vunpack.c.h.b16 %v428
    %v1614 = vunpack.c.l.b16 %v429
    %v1615 = vunpack.c.h.b16 %v429
    %v1616 = vunpack.c.l.b16 %v430
    %v1617 = vunpack.c.h.b16 %v430
    %v1618 = vunpack.c.l.b16 %v431
    %v1619 = vunpack.c.h.b16 %v431
    %v1620 = vunpack.c.l.b16 %v432
    %v1621 = vunpack.c.h.b16 %v432
    %v1622 = vunpack.c.l.b16 %v433
    %v1623 = vunpack.c.h.b16 %v433
    %v1624 = vunpack.c.l.b16 %v434
    %v1625 = vunpack.c.h.b16 %v434
    %v1626 = vunpack.c.l.b16 %v435
    %v1627 = vunpack.c.h.b16 %v435
    %v1628 = vunpack.c.l.b16 %v436
    %v1629 = vunpack.c.h.b16 %v436
    %v1630 = vunpack.c.l.b16 %v437
    %v1631 = vunpack.c.h.b16 %v437
    %v1632 = vunpack.c.l.b16 %v438
    %v1633 = vunpack.c.h.b16 %v438
    %v1634 = vunpack.c.l.b16 %v439
    %v1635 = vunpack.c.h.b16 %v439
    %v1636 = vunpack.c.l.b16 %v440
    %v1637 = vunpack.c.h.b16 %v440
    %v1638 = vunpack.c.l.b16 %v441
    %v1639 = vunpack.c.h.b16 %v441
    %v1640 = vunpack.c.l.b16 %v442
    %v1641 = vunpack.c.h.b16 %v442
    %v1642 = vunpack.c.l.b16 %v443
    %v1643 = vunpack.c.h.b16 %v443
    %v1644 = vunpack.c.l.b16 %v444
    %v1645 = vunpack.c.h.b16 %v444
    %v1646 = vunpack.c.l.b16 %v445
    %v1647 = vunpack.c.h.b16 %v445
    %v1648 = vunpack.c.l.b16 %v446
    %v1649 = vunpack.c.h.b16 %v446
    %v1650 = vunpack.c.l.b16 %v447
    %v1651 = vunpack.c.h.b16 %v447
    %v1652 = vunpack.c.l.b16 %v448
    %v1653 = vunpack.c.h.b16 %v448
    %v1654 = vunpack.c.l.b16 %v449
    %v1655 = vunpack.c.h.b16 %v449
    %v1656 = vunpack.c.l.b16 %v450
    %v1657 = vunpack.c.h.b16 %v450
    %v1658 = vunpack.c.l.b16 %v451
    %v1659 = vunpack.c.h.b16 %v451
    %v1660 = vunpack.c.l.b16 %v452
    %v1661 = vunpack.c.h.b16 %v452
    %v1662 = vunpack.c.l.b16 %v453
    %v1663 = vunpack.c.h.b16 %v453
    %v1664 = vunpack.c.l.b16 %v454
    %v1665 = vunpack.c.h.b16 %v454
    %v1666 = vunpack.c.l.b16 %v455
    %v1667 = vunpack.c.h.b16 %v455
    %v1668 = vunpack.c.l.b16 %v456
    %v1669 = vunpack.c.h.b16 %v456
    %v1670 = vunpack.c.l.b16 %v457
    %v1671 = vunpack.c.h.b16 %v457
    %v1672 = vunpack.c.l.b16 %v458
    %v1673 = vunpack.c.h.b16 %v458
    %v1674 = vunpack.c.l.b16 %v459
    %v1675 = vunpack.c.h.b16 %v459
    %v1676 = vunpack.c.l.b16 %v460
    %v1677 = vunpack.c.h.b16 %v460
    %v1678 = vunpack.c.l.b16 %v461
    %v1679 = vunpack.c.h.b16 %v461
    %v1680 = vunpack.c.l.b16 %v462
    %v1681 = vunpack.c.h.b16 %v462
    %v1682 = vunpack.c.l.b16 %v463
    %v1683 = vunpack.c.h.b16 %v463
    %v1684 = vunpack.c.l.b16 %v464
    %v1685 = vunpack.c.h.b16 %v464
    %v1686 = vunpack.c.l.b16 %v465
    %v1687 = vunpack.c.h.b16 %v465
    %v1688 = vunpack.c.l.b16 %v466
    %v1689 = vunpack.c.h.b16 %v466
    %v1690 = vpack.c.b16 %v930, %v922
    %v1691 = vpack.c.b16 %v931, %v923
    %v1692 = vpack.c.b16 %v932, %v924
    %v1693 = vpack.c.b16 %v933, %v925
    %v1694 = vpack.c.b16 %v934, %v926
    %v1695 = vpack.c.b16 %v935, %v927
    %v1696 = vpack.c.b16 %v936, %v928
    %v1697 = vpack.c.b16 %v937, %v929
    %v1698 = vpack.c.b16 %v946, %v938
    %v1699 = vpack.c.b16 %v947, %v939
    %v1700 = vpack.c.b16 %v948, %v940
    %v1701 = vpack.c.b16 %v949, %v941
    %v1702 = vpack.c.b16 %v950, %v942
    %v1703 = vpack.c.b16 %v951, %v943
    %v1704 = vpack.c.b16 %v952, %v944
    %v1705 = vpack.c.b16 %v953, %v945
    %v1706 = vpack.c.b16 %v962, %v954
    %v1707 = vpack.c.b16 %v963, %v955
    %v1708 = vpack.c.b16 %v964, %v956
    %v1709 = vpack.c.b16 %v965, %v957
    %v1710 = vpack.c.b16 %v966, %v958
    %v1711 = vpack.c.b16 %v967, %v959
    %v1712 = vpack.c.b16 %v968, %v960
    %v1713 = vpack.c.b16 %v969, %v961
    %v1714 = vpack.c.b16 %v978, %v970
    %v1715 = vpack.c.b16 %v979, %v971
    %v1716 = vpack.c.b16 %v980, %v972
    %v1717 = vpack.c.b16 %v981, %v973
    %v1718 = vpack.c.b16 %v982, %v974
    %v1719 = vpack.c.b16 %v983, %v975
    %v1720 = vpack.c.b16 %v984, %v976
    %v1721 = vpack.c.b16 %v985, %v977
    %v1722 = vpack.c.b16 %v994, %v986
    %v1723 = vpack.c.b16 %v995, %v987
    %v1724 = vpack.c.b16 %v996, %v988
    %v1725 = vpack.c.b16 %v997, %v989
    %v1726 = vpack.c.b16 %v998, %v990
    %v1727 = vpack.c.b16 %v999, %v991
    %v1728 = vpack.c.b16 %v1000, %v992
    %v1729 = vpack.c.b16 %v1001, %v993
    %v1730 = vpack.c.b16 %v1010, %v1002
    %v1731 = vpack.c.b16 %v1011, %v1003
    %v1732 = vpack.c.b16 %v1012, %v1004
    %v1733 = vpack.c.b16 %v1013, %v1005
    %v1734 = vpack.c.b16 %v1014, %v1006
    %v1735 = vpack.c.b16 %v1015, %v1007
    %v1736 = vpack.c.b16 %v1016, %v1008
    %v1737 = vpack.c.b16 %v1017, %v1009
    %v1738 = vpack.c.b16 %v1026, %v1018
    %v1739 = vpack.c.b16 %v1027, %v1019
    %v1740 = vpack.c.b16 %v1028, %v1020
    %v1741 = vpack.c.b16 %v1029, %v1021
    %v1742 = vpack.c.b16 %v1030, %v1022
    %v1743 = vpack.c.b16 %v1031, %v1023
    %v1744 = vpack.c.b16 %v1032, %v1024
    %v1745 = vpack.c.b16 %v1033, %v1025
    %v1746 = vpack.c.b16 %v1042, %v1034
    %v1747 = vpack.c.b16 %v1043, %v1035
    %v1748 = vpack.c.b16 %v1044, %v1036
    %v1749 = vpack.c.b16 %v1045, %v1037
    %v1750 = vpack.c.b16 %v1046, %v1038
    %v1751 = vpack.c.b16 %v1047, %v1039
    %v1752 = vpack.c.b16 %v1048, %v1040
    %v1753 = vpack.c.b16 %v1049, %v1041
    %v1754 = vpack.c.b16 %v1058, %v1050
    %v1755 = vpack.c.b16 %v1059, %v1051
    %v1756 = vpack.c.b16 %v1060, %v1052
    %v1757 = vpack.c.b16 %v1061, %v1053
    %v1758 = vpack.c.b16 %v1062, %v1054
    %v1759 = vpack.c.b16 %v1063, %v1055
    %v1760 = vpack.c.b16 %v1064, %v1056
    %v1761 = vpack.c.b16 %v1065, %v1057
    %v1762 = vpack.c.b16 %v1074, %v1066
    %v1763 = vpack.c.b16 %v1075, %v1067
    %v1764 = vpack.c.b16 %v1076, %v1068
    %v1765 = vpack.c.b16 %v1077, %v1069
    %v1766 = vpack.c.b16 %v1078, %v1070
    %v1767 = vpack.c.b16 %v1079, %v1071
    %v1768 = vpack.c.b16 %v1080, %v1072
    %v1769 = vpack.c.b16 %v1081, %v1073
    %v1770 = vpack.c.b16 %v1090, %v1082
    %v1771 = vpack.c.b16 %v1091, %v1083
    %v1772 = vpack.c.b16 %v1092, %v1084
    %v1773 = vpack.c.b16 %v1093, %v1085
    %v1774 = vpack.c.b16 %v1094, %v1086
    %v1775 = vpack.c.b16 %v1095, %v1087
    %v1776 = vpack.c.b16 %v1096, %v1088
    %v1777 = vpack.c.b16 %v1097, %v1089
    %v1778 = vpack.c.b16 %v1106, %v1098
    %v1779 = vpack.c.b16 %v1107, %v1099
    %v1780 = vpack.c.b16 %v1108, %v1100
    %v1781 = vpack.c.b16 %v1109, %v1101
    %v1782 = vpack.c.b16 %v1110, %v1102
    %v1783 = vpack.c.b16 %v1111, %v1103
    %v1784 = vpack.c.b16 %v1112, %v1104
    %v1785 = vpack.c.b16 %v1113, %v1105
    %v1786 = vpack.c.b16 %v1122, %v1114
    %v1787 = vpack.c.b16 %v1123, %v1115
    %v1788 = vpack.c.b16 %v1124, %v1116
    %v1789 = vpack.c.b16 %v1125, %v1117
    %v1790 = vpack.c.b16 %v1126, %v1118
    %v1791 = vpack.c.b16 %v1127, %v1119
    %v1792 = vpack.c.b16 %v1128, %v1120
    %v1793 = vpack.c.b16 %v1129, %v1121
    %v1794 = vpack.c.b16 %v1138, %v1130
    %v1795 = vpack.c.b16 %v1139, %v1131
    %v1796 = vpack.c.b16 %v1140, %v1132
    %v1797 = vpack.c.b16 %v1141, %v1133
    %v1798 = vpack.c.b16 %v1142, %v1134
    %v1799 = vpack.c.b16 %v1143, %v1135
    %v1800 = vpack.c.b16 %v1144, %v1136
    %v1801 = vpack.c.b16 %v1145, %v1137
    %v1802 = vpack.c.b16 %v1154, %v1146
    %v1803 = vpack.c.b16 %v1155, %v1147
    %v1804 = vpack.c.b16 %v1156, %v1148
    %v1805 = vpack.c.b16 %v1157, %v1149
    %v1806 = vpack.c.b16 %v1158, %v1150
    %v1807 = vpack.c.b16 %v1159, %v1151
    %v1808 = vpack.c.b16 %v1160, %v1152
    %v1809 = vpack.c.b16 %v1161, %v1153
    %v1810 = vpack.c.b16 %v1170, %v1162
    %v1811 = vpack.c.b16 %v1171, %v1163
    %v1812 = vpack.c.b16 %v1172, %v1164
    %v1813 = vpack.c.b16 %v1173, %v1165
    %v1814 = vpack.c.b16 %v1174, %v1166
    %v1815 = vpack.c.b16 %v1175, %v1167
    %v1816 = vpack.c.b16 %v1176, %v1168
    %v1817 = vpack.c.b16 %v1177, %v1169
    %v1818 = vpack.c.b16 %v1186, %v1178
    %v1819 = vpack.c.b16 %v1187, %v1179
    %v1820 = vpack.c.b16 %v1188, %v1180
    %v1821 = vpack.c.b16 %v1189, %v1181
    %v1822 = vpack.c.b16 %v1190, %v1182
    %v1823 = vpack.c.b16 %v1191, %v1183
    %v1824 = vpack.c.b16 %v1192, %v1184
    %v1825 = vpack.c.b16 %v1193, %v1185
    %v1826 = vpack.c.b16 %v1202, %v1194
    %v1827 = vpack.c.b16 %v1203, %v1195
    %v1828 = vpack.c.b16 %v1204, %v1196
    %v1829 = vpack.c.b16 %v1205, %v1197
    %v1830 = vpack.c.b16 %v1206, %v1198
    %v1831 = vpack.c.b16 %v1207, %v1199
    %v1832 = vpack.c.b16 %v1208, %v1200
    %v1833 = vpack.c.b16 %v1209, %v1201
    %v1834 = vpack.c.b16 %v1218, %v1210
    %v1835 = vpack.c.b16 %v1219, %v1211
    %v1836 = vpack.c.b16 %v1220, %v1212
    %v1837 = vpack.c.b16 %v1221, %v1213
    %v1838 = vpack.c.b16 %v1222, %v1214
    %v1839 = vpack.c.b16 %v1223, %v1215
    %v1840 = vpack.c.b16 %v1224, %v1216
    %v1841 = vpack.c.b16 %v1225, %v1217
    %v1842 = vpack.c.b16 %v1234, %v1226
    %v1843 = vpack.c.b16 %v1235, %v1227
    %v1844 = vpack.c.b16 %v1236, %v1228
    %v1845 = vpack.c.b16 %v1237, %v1229
    %v1846 = vpack.c.b16 %v1238, %v1230
    %v1847 = vpack.c.b16 %v1239, %v1231
    %v1848 = vpack.c.b16 %v1240, %v1232
    %v1849 = vpack.c.b16 %v1241, %v1233
    %v1850 = vpack.c.b16 %v1250, %v1242
    %v1851 = vpack.c.b16 %v1251, %v1243
    %v1852 = vpack.c.b16 %v1252, %v1244
    %v1853 = vpack.c.b16 %v1253, %v1245
    %v1854 = vpack.c.b16 %v1254, %v1246
    %v1855 = vpack.c.b16 %v1255, %v1247
    %v1856 = vpack.c.b16 %v1256, %v1248
    %v1857 = vpack.c.b16 %v1257, %v1249
    %v1858 = vpack.c.b16 %v1266, %v1258
    %v1859 = vpack.c.b16 %v1267, %v1259
    %v1860 = vpack.c.b16 %v1268, %v1260
    %v1861 = vpack.c.b16 %v1269, %v1261
    %v1862 = vpack.c.b16 %v1270, %v1262
    %v1863 = vpack.c.b16 %v1271, %v1263
    %v1864 = vpack.c.b16 %v1272, %v1264
    %v1865 = vpack.c.b16 %v1273, %v1265
    %v1866 = vpack.c.b16 %v1282, %v1274
    %v1867 = vpack.c.b16 %v1283, %v1275
    %v1868 = vpack.c.b16 %v1284, %v1276
    %v1869 = vpack.c.b16 %v1285, %v1277
    %v1870 = vpack.c.b16 %v1286, %v1278
    %v1871 = vpack.c.b16 %v1287, %v1279
    %v1872 = vpack.c.b16 %v1288, %v1280
    %v1873 = vpack.c.b16 %v1289, %v1281
    %v1874 = vpack.c.b16 %v1298, %v1290
    %v1875 = vpack.c.b16 %v1299, %v1291
    %v1876 = vpack.c.b16 %v1300, %v1292
    %v1877 = vpack.c.b16 %v1301, %v1293
    %v1878 = vpack.c.b16 %v1302, %v1294
    %v1879 = vpack.c.b16 %v1303, %v1295
    %v1880 = vpack.c.b16 %v1304, %v1296
    %v1881 = vpack.c.b16 %v1305, %v1297
    %v1882 = vpack.c.b16 %v1314, %v1306
    %v1883 = vpack.c.b16 %v1315, %v1307
    %v1884 = vpack.c.b16 %v1316, %v1308
    %v1885 = vpack.c.b16 %v1317, %v1309
    %v1886 = vpack.c.b16 %v1318, %v1310
    %v1887 = vpack.c.b16 %v1319, %v1311
    %v1888 = vpack.c.b16 %v1320, %v1312
    %v1889 = vpack.c.b16 %v1321, %v1313
    %v1890 = vpack.c.b16 %v1330, %v1322
    %v1891 = vpack.c.b16 %v1331, %v1323
    %v1892 = vpack.c.b16 %v1332, %v1324
    %v1893 = vpack.c.b16 %v1333, %v1325
    %v1894 = vpack.c.b16 %v1334, %v1326
    %v1895 = vpack.c.b16 %v1335, %v1327
    %v1896 = vpack.c.b16 %v1336, %v1328
    %v1897 = vpack.c.b16 %v1337, %v1329
    %v1898 = vpack.c.b16 %v1346, %v1338
    %v1899 = vpack.c.b16 %v1347, %v1339
    %v1900 = vpack.c.b16 %v1348, %v1340
    %v1901 = vpack.c.b16 %v1349, %v1341
    %v1902 = vpack.c.b16 %v1350, %v1342
    %v1903 = vpack.c.b16 %v1351, %v1343
    %v1904 = vpack.c.b16 %v1352, %v1344
    %v1905 = vpack.c.b16 %v1353, %v1345
    %v1906 = vpack.c.b16 %v1362, %v1354
    %v1907 = vpack.c.b16 %v1363, %v1355
    %v1908 = vpack.c.b16 %v1364, %v1356
    %v1909 = vpack.c.b16 %v1365, %v1357
    %v1910 = vpack.c.b16 %v1366, %v1358
    %v1911 = vpack.c.b16 %v1367, %v1359
    %v1912 = vpack.c.b16 %v1368, %v1360
    %v1913 = vpack.c.b16 %v1369, %v1361
    %v1914 = vpack.c.b16 %v1378, %v1370
    %v1915 = vpack.c.b16 %v1379, %v1371
    %v1916 = vpack.c.b16 %v1380, %v1372
    %v1917 = vpack.c.b16 %v1381, %v1373
    %v1918 = vpack.c.b16 %v1382, %v1374
    %v1919 = vpack.c.b16 %v1383, %v1375
    %v1920 = vpack.c.b16 %v1384, %v1376
    %v1921 = vpack.c.b16 %v1385, %v1377
    %v1922 = vpack.c.b16 %v1394, %v1386
    %v1923 = vpack.c.b16 %v1395, %v1387
    %v1924 = vpack.c.b16 %v1396, %v1388
    %v1925 = vpack.c.b16 %v1397, %v1389
    %v1926 = vpack.c.b16 %v1398, %v1390
    %v1927 = vpack.c.b16 %v1399, %v1391
    %v1928 = vpack.c.b16 %v1400, %v1392
    %v1929 = vpack.c.b16 %v1401, %v1393
    %v1930 = vpack.c.b16 %v1410, %v1402
    %v1931 = vpack.c.b16 %v1411, %v1403
    %v1932 = vpack.c.b16 %v1412, %v1404
    %v1933 = vpack.c.b16 %v1413, %v1405
    %v1934 = vpack.c.b16 %v1414, %v1406
    %v1935 = vpack.c.b16 %v1415, %v1407
    %v1936 = vpack.c.b16 %v1416, %v1408
    %v1937 = vpack.c.b16 %v1417, %v1409
    %v1938 = vpack.c.b16 %v1426, %v1418
    %v1939 = vpack.c.b16 %v1427, %v1419
    %v1940 = vpack.c.b16 %v1428, %v1420
    %v1941 = vpack.c.b16 %v1429, %v1421
    %v1942 = vpack.c.b16 %v1430, %v1422
    %v1943 = vpack.c.b16 %v1431, %v1423
    %v1944 = vpack.c.b16 %v1432, %v1424
    %v1945 = vpack.c.b16 %v1433, %v1425
    %v1946 = vpack.c.b16 %v1442, %v1434
    %v1947 = vpack.c.b16 %v1443, %v1435
    %v1948 = vpack.c.b16 %v1444, %v1436
    %v1949 = vpack.c.b16 %v1445, %v1437
    %v1950 = vpack.c.b16 %v1446, %v1438
    %v1951 = vpack.c.b16 %v1447, %v1439
    %v1952 = vpack.c.b16 %v1448, %v1440
    %v1953 = vpack.c.b16 %v1449, %v1441
    %v1954 = vpack.c.b16 %v1458, %v1450
    %v1955 = vpack.c.b16 %v1459, %v1451
    %v1956 = vpack.c.b16 %v1460, %v1452
    %v1957 = vpack.c.b16 %v1461, %v1453
    %v1958 = vpack.c.b16 %v1462, %v1454
    %v1959 = vpack.c.b16 %v1463, %v1455
    %v1960 = vpack.c.b16 %v1464, %v1456
    %v1961 = vpack.c.b16 %v1465, %v1457
    %v1962 = vpack.c.b16 %v1474, %v1466
    %v1963 = vpack.c.b16 %v1475, %v1467
    %v1964 = vpack.c.b16 %v1476, %v1468
    %v1965 = vpack.c.b16 %v1477, %v1469
    %v1966 = vpack.c.b16 %v1478, %v1470
    %v1967 = vpack.c.b16 %v1479, %v1471
    %v1968 = vpack.c.b16 %v1480, %v1472
    %v1969 = vpack.c.b16 %v1481, %v1473
    %v1970 = vpack.c.b16 %v1490, %v1482
    %v1971 = vpack.c.b16 %v1491, %v1483
    %v1972 = vpack.c.b16 %v1492, %v1484
    %v1973 = vpack.c.b16 %v1493, %v1485
    %v1974 = vpack.c.b16 %v1494, %v1486
    %v1975 = vpack.c.b16 %v1495, %v1487
    %v1976 = vpack.c.b16 %v1496, %v1488
    %v1977 = vpack.c.b16 %v1497, %v1489
    %v1978 = vpack.c.b16 %v1506, %v1498
    %v1979 = vpack.c.b16 %v1507, %v1499
    %v1980 = vpack.c.b16 %v1508, %v1500
    %v1981 = vpack.c.b16 %v1509, %v1501
    %v1982 = vpack.c.b16 %v1510, %v1502
    %v1983 = vpack.c.b16 %v1511, %v1503
    %v1984 = vpack.c.b16 %v1512, %v1504
    %v1985 = vpack.c.b16 %v1513, %v1505
    %v1986 = vpack.c.b16 %v1522, %v1514
    %v1987 = vpack.c.b16 %v1523, %v1515
    %v1988 = vpack.c.b16 %v1524, %v1516
    %v1989 = vpack.c.b16 %v1525, %v1517
    %v1990 = vpack.c.b16 %v1526, %v1518
    %v1991 = vpack.c.b16 %v1527, %v1519
    %v1992 = vpack.c.b16 %v1528, %v1520
    %v1993 = vpack.c.b16 %v1529, %v1521
    %v1994 = vpack.c.b16 %v1538, %v1530
    %v1995 = vpack.c.b16 %v1539, %v1531
    %v1996 = vpack.c.b16 %v1540, %v1532
    %v1997 = vpack.c.b16 %v1541, %v1533
    %v1998 = vpack.c.b16 %v1542, %v1534
    %v1999 = vpack.c.b16 %v1543, %v1535
    %v2000 = vpack.c.b16 %v1544, %v1536
    %v2001 = vpack.c.b16 %v1545, %v1537
    %v2002 = vpack.c.b16 %v1554, %v1546
    %v2003 = vpack.c.b16 %v1555, %v1547
    %v2004 = vpack.c.b16 %v1556, %v1548
    %v2005 = vpack.c.b16 %v1557, %v1549
    %v2006 = vpack.c.b16 %v1558, %v1550
    %v2007 = vpack.c.b16 %v1559, %v1551
    %v2008 = vpack.c.b16 %v1560, %v1552
    %v2009 = vpack.c.b16 %v1561, %v1553
    %v2010 = vpack.c.b16 %v1570, %v1562
    %v2011 = vpack.c.b16 %v1571, %v1563
    %v2012 = vpack.c.b16 %v1572, %v1564
    %v2013 = vpack.c.b16 %v1573, %v1565
    %v2014 = vpack.c.b16 %v1574, %v1566
    %v2015 = vpack.c.b16 %v1575, %v1567
    %v2016 = vpack.c.b16 %v1576, %v1568
    %v2017 = vpack.c.b16 %v1577, %v1569
    %v2018 = vpack.c.b16 %v1586, %v1578
    %v2019 = vpack.c.b16 %v1587, %v1579
    %v2020 = vpack.c.b16 %v1588, %v1580
    %v2021 = vpack.c.b16 %v1589, %v1581
    %v2022 = vpack.c.b16 %v1590, %v1582
    %v2023 = vpack.c.b16 %v1591, %v1583
    %v2024 = vpack.c.b16 %v1592, %v1584
    %v2025 = vpack.c.b16 %v1593, %v1585
    %v2026 = vpack.c.b16 %v1602, %v1594
    %v2027 = vpack.c.b16 %v1603, %v1595
    %v2028 = vpack.c.b16 %v1604, %v1596
    %v2029 = vpack.c.b16 %v1605, %v1597
    %v2030 = vpack.c.b16 %v1606, %v1598
    %v2031 = vpack.c.b16 %v1607, %v1599
    %v2032 = vpack.c.b16 %v1608, %v1600
    %v2033 = vpack.c.b16 %v1609, %v1601
    %v2034 = vpack.c.b16 %v1618, %v1610
    %v2035 = vpack.c.b16 %v1619, %v1611
    %v2036 = vpack.c.b16 %v1620, %v1612
    %v2037 = vpack.c.b16 %v1621, %v1613
    %v2038 = vpack.c.b16 %v1622, %v1614
    %v2039 = vpack.c.b16 %v1623, %v1615
    %v2040 = vpack.c.b16 %v1624, %v1616
    %v2041 = vpack.c.b16 %v1625, %v1617
    %v2042 = vpack.c.b16 %v1634, %v1626
    %v2043 = vpack.c.b16 %v1635, %v1627
    %v2044 = vpack.c.b16 %v1636, %v1628
    %v2045 = vpack.c.b16 %v1637, %v1629
    %v2046 = vpack.c.b16 %v1638, %v1630
    %v2047 = vpack.c.b16 %v1639, %v1631
    %v2048 = vpack.c.b16 %v1640, %v1632
    %v2049 = vpack.c.b16 %v1641, %v1633
    %v2050 = vpack.c.b16 %v1650, %v1642
    %v2051 = vpack.c.b16 %v1651, %v1643
    %v2052 = vpack.c.b16 %v1652, %v1644
    %v2053 = vpack.c.b16 %v1653, %v1645
    %v2054 = vpack.c.b16 %v1654, %v1646
    %v2055 = vpack.c.b16 %v1655, %v1647
    %v2056 = vpack.c.b16 %v1656, %v1648
    %v2057 = vpack.c.b16 %v1657, %v1649
    %v2058 = vpack.c.b16 %v1666, %v1658
    %v2059 = vpack.c.b16 %v1667, %v1659
    %v2060 = vpack.c.b16 %v1668, %v1660
    %v2061 = vpack.c.b16 %v1669, %v1661
    %v2062 = vpack.c.b16 %v1670, %v1662
    %v2063 = vpack.c.b16 %v1671, %v1663
    %v2064 = vpack.c.b16 %v1672, %v1664
    %v2065 = vpack.c.b16 %v1673, %v1665
    %v2066 = vpack.c.b16 %v1682, %v1674
    %v2067 = vpack.c.b16 %v1683, %v1675
    %v2068 = vpack.c.b16 %v1684, %v1676
    %v2069 = vpack.c.b16 %v1685, %v1677
    %v2070 = vpack.c.b16 %v1686, %v1678
    %v2071 = vpack.c.b16 %v1687, %v1679
    %v2072 = vpack.c.b16 %v1688, %v1680
    %v2073 = vpack.c.b16 %v1689, %v1681
    %2458 = vmatprep.subr.bf16.mxu0 %v1747
    %2459 = vmatpush1.bf16.msra.mxu0 %v1746
    %2460 = vmatprep.subr.bf16.mxu0 %v1739
    %2461 = vmatpush1.bf16.msra.mxu0 %v1738
    %2462 = vmatprep.subr.bf16.mxu0 %v1731
    %2463 = vmatpush1.bf16.msra.mxu0 %v1730
    %2464 = vmatprep.subr.bf16.mxu0 %v1723
    %2465 = vmatpush1.bf16.msra.mxu0 %v1722
    %2466 = vmatprep.subr.bf16.mxu0 %v1715
    %2467 = vmatpush1.bf16.msra.mxu0 %v1714
    %2468 = vmatprep.subr.bf16.mxu0 %v1707
    %2469 = vmatpush1.bf16.msra.mxu0 %v1706
    %2470 = vmatprep.subr.bf16.mxu0 %v1699
    %2471 = vmatpush1.bf16.msra.mxu0 %v1698
    %2472 = vmatprep.subr.bf16.mxu0 %v1691
    %2473 = vmatpush1.bf16.msra.mxu0 %v1690
    %2474 = vmatprep.subr.bf16.mxu0 %v1811
    %2475 = vmatpush2.bf16.msra.mxu0 %v1810
    %2476 = vmatprep.subr.bf16.mxu0 %v1803
    %2477 = vmatpush2.bf16.msra.mxu0 %v1802
    %2478 = vmatprep.subr.bf16.mxu0 %v1795
    %2479 = vmatpush2.bf16.msra.mxu0 %v1794
    %2480 = vmatprep.subr.bf16.mxu0 %v1787
    %2481 = vmatpush2.bf16.msra.mxu0 %v1786
    %2482 = vmatprep.subr.bf16.mxu0 %v1779
    %2483 = vmatpush2.bf16.msra.mxu0 %v1778
    %2484 = vmatprep.subr.bf16.mxu0 %v1771
    %2485 = vmatpush2.bf16.msra.mxu0 %v1770
    %2486 = vmatprep.subr.bf16.mxu0 %v1763
    %2487 = vmatpush2.bf16.msra.mxu0 %v1762
    %2488 = vmatprep.subr.bf16.mxu0 %v1755
    %2489 = vmatpush2.bf16.msra.mxu0 %v1754
    %2490 = vmatprep.mubr.bf16.mxu0 %v527
    %2491 = vmatmul.mubr.bf16.gmra.mxu0 %v526
    %v2492 = vpop.f32.mrf.mxu0
    %v2493 = vadd.f32 %v471, %v2492
    %v2494 = vpop.f32.mrf.mxu0
    %v2495 = vadd.f32 %v475, %v2494
    %v2496 = vpop.f32.mrf.mxu0
    %v2497 = vadd.f32 %v471, %v2496
    %v2498 = vpop.f32.mrf.mxu0
    %v2499 = vadd.f32 %v475, %v2498
    %2500 = vdwg.mxu0
    %2501 = vmatprep.subr.bf16.mxu0 %v1875
    %2502 = vmatpush1.bf16.msra.mxu0 %v1874
    %2503 = vmatprep.subr.bf16.mxu0 %v1867
    %2504 = vmatpush1.bf16.msra.mxu0 %v1866
    %2505 = vmatprep.subr.bf16.mxu0 %v1859
    %2506 = vmatpush1.bf16.msra.mxu0 %v1858
    %2507 = vmatprep.subr.bf16.mxu0 %v1851
    %2508 = vmatpush1.bf16.msra.mxu0 %v1850
    %2509 = vmatprep.subr.bf16.mxu0 %v1843
    %2510 = vmatpush1.bf16.msra.mxu0 %v1842
    %2511 = vmatprep.subr.bf16.mxu0 %v1835
    %2512 = vmatpush1.bf16.msra.mxu0 %v1834
    %2513 = vmatprep.subr.bf16.mxu0 %v1827
    %2514 = vmatpush1.bf16.msra.mxu0 %v1826
    %2515 = vmatprep.subr.bf16.mxu0 %v1819
    %2516 = vmatpush1.bf16.msra.mxu0 %v1818
    %2517 = vmatprep.subr.bf16.mxu0 %v1939
    %2518 = vmatpush2.bf16.msra.mxu0 %v1938
    %2519 = vmatprep.subr.bf16.mxu0 %v1931
    %2520 = vmatpush2.bf16.msra.mxu0 %v1930
    %2521 = vmatprep.subr.bf16.mxu0 %v1923
    %2522 = vmatpush2.bf16.msra.mxu0 %v1922
    %2523 = vmatprep.subr.bf16.mxu0 %v1915
    %2524 = vmatpush2.bf16.msra.mxu0 %v1914
    %2525 = vmatprep.subr.bf16.mxu0 %v1907
    %2526 = vmatpush2.bf16.msra.mxu0 %v1906
    %2527 = vmatprep.subr.bf16.mxu0 %v1899
    %2528 = vmatpush2.bf16.msra.mxu0 %v1898
    %2529 = vmatprep.subr.bf16.mxu0 %v1891
    %2530 = vmatpush2.bf16.msra.mxu0 %v1890
    %2531 = vmatprep.subr.bf16.mxu0 %v1883
    %2532 = vmatpush2.bf16.msra.mxu0 %v1882
    %2533 = vmatprep.mubr.bf16.mxu0 %v529
    %2534 = vmatmul.mubr.bf16.gmra.mxu0 %v528
    %v2535 = vpop.f32.mrf.mxu0
    %v2536 = vadd.f32 %v2493, %v2535
    %v2537 = vpop.f32.mrf.mxu0
    %v2538 = vadd.f32 %v2495, %v2537
    %v2539 = vpop.f32.mrf.mxu0
    %v2540 = vadd.f32 %v2497, %v2539
    %v2541 = vpop.f32.mrf.mxu0
    %v2542 = vadd.f32 %v2499, %v2541
    %2543 = vdwg.mxu0
    %2544 = vmatprep.subr.bf16.mxu0 %v2003
    %2545 = vmatpush1.bf16.msra.mxu0 %v2002
    %2546 = vmatprep.subr.bf16.mxu0 %v1995
    %2547 = vmatpush1.bf16.msra.mxu0 %v1994
    %2548 = vmatprep.subr.bf16.mxu0 %v1987
    %2549 = vmatpush1.bf16.msra.mxu0 %v1986
    %2550 = vmatprep.subr.bf16.mxu0 %v1979
    %2551 = vmatpush1.bf16.msra.mxu0 %v1978
    %2552 = vmatprep.subr.bf16.mxu0 %v1971
    %2553 = vmatpush1.bf16.msra.mxu0 %v1970
    %2554 = vmatprep.subr.bf16.mxu0 %v1963
    %2555 = vmatpush1.bf16.msra.mxu0 %v1962
    %2556 = vmatprep.subr.bf16.mxu0 %v1955
    %2557 = vmatpush1.bf16.msra.mxu0 %v1954
    %2558 = vmatprep.subr.bf16.mxu0 %v1947
    %2559 = vmatpush1.bf16.msra.mxu0 %v1946
    %2560 = vmatprep.subr.bf16.mxu0 %v2067
    %2561 = vmatpush2.bf16.msra.mxu0 %v2066
    %2562 = vmatprep.subr.bf16.mxu0 %v2059
    %2563 = vmatpush2.bf16.msra.mxu0 %v2058
    %2564 = vmatprep.subr.bf16.mxu0 %v2051
    %2565 = vmatpush2.bf16.msra.mxu0 %v2050
    %2566 = vmatprep.subr.bf16.mxu0 %v2043
    %2567 = vmatpush2.bf16.msra.mxu0 %v2042
    %2568 = vmatprep.subr.bf16.mxu0 %v2035
    %2569 = vmatpush2.bf16.msra.mxu0 %v2034
    %2570 = vmatprep.subr.bf16.mxu0 %v2027
    %2571 = vmatpush2.bf16.msra.mxu0 %v2026
    %2572 = vmatprep.subr.bf16.mxu0 %v2019
    %2573 = vmatpush2.bf16.msra.mxu0 %v2018
    %2574 = vmatprep.subr.bf16.mxu0 %v2011
    %2575 = vmatpush2.bf16.msra.mxu0 %v2010
    %2576 = vmatprep.mubr.bf16.mxu0 %v531
    %2577 = vmatmul.mubr.bf16.gmra.mxu0 %v530
    %v2578 = vpop.f32.mrf.mxu0
    %v2579 = vadd.f32 %v2536, %v2578
    %v2580 = vpop.f32.mrf.mxu0
    %v2581 = vadd.f32 %v2538, %v2580
    %v2582 = vpop.f32.mrf.mxu0
    %v2583 = vadd.f32 %v2540, %v2582
    %v2584 = vpop.f32.mrf.mxu0
    %v2585 = vadd.f32 %v2542, %v2584
    %2586 = vdwg.mxu0
    %2587 = vmatprep.subr.bf16.mxu0 %v1749
    %2588 = vmatpush1.bf16.msra.mxu0 %v1748
    %2589 = vmatprep.subr.bf16.mxu0 %v1741
    %2590 = vmatpush1.bf16.msra.mxu0 %v1740
    %2591 = vmatprep.subr.bf16.mxu0 %v1733
    %2592 = vmatpush1.bf16.msra.mxu0 %v1732
    %2593 = vmatprep.subr.bf16.mxu0 %v1725
    %2594 = vmatpush1.bf16.msra.mxu0 %v1724
    %2595 = vmatprep.subr.bf16.mxu0 %v1717
    %2596 = vmatpush1.bf16.msra.mxu0 %v1716
    %2597 = vmatprep.subr.bf16.mxu0 %v1709
    %2598 = vmatpush1.bf16.msra.mxu0 %v1708
    %2599 = vmatprep.subr.bf16.mxu0 %v1701
    %2600 = vmatpush1.bf16.msra.mxu0 %v1700
    %2601 = vmatprep.subr.bf16.mxu0 %v1693
    %2602 = vmatpush1.bf16.msra.mxu0 %v1692
    %2603 = vmatprep.subr.bf16.mxu0 %v1813
    %2604 = vmatpush2.bf16.msra.mxu0 %v1812
    %2605 = vmatprep.subr.bf16.mxu0 %v1805
    %2606 = vmatpush2.bf16.msra.mxu0 %v1804
    %2607 = vmatprep.subr.bf16.mxu0 %v1797
    %2608 = vmatpush2.bf16.msra.mxu0 %v1796
    %2609 = vmatprep.subr.bf16.mxu0 %v1789
    %2610 = vmatpush2.bf16.msra.mxu0 %v1788
    %2611 = vmatprep.subr.bf16.mxu0 %v1781
    %2612 = vmatpush2.bf16.msra.mxu0 %v1780
    %2613 = vmatprep.subr.bf16.mxu0 %v1773
    %2614 = vmatpush2.bf16.msra.mxu0 %v1772
    %2615 = vmatprep.subr.bf16.mxu0 %v1765
    %2616 = vmatpush2.bf16.msra.mxu0 %v1764
    %2617 = vmatprep.subr.bf16.mxu0 %v1757
    %2618 = vmatpush2.bf16.msra.mxu0 %v1756
    %2619 = vmatprep.mubr.bf16.mxu0 %v527
    %2620 = vmatmul.mubr.bf16.gmra.mxu0 %v526
    %v2621 = vpop.f32.mrf.mxu0
    %v2622 = vadd.f32 %v479, %v2621
    %v2623 = vpop.f32.mrf.mxu0
    %v2624 = vadd.f32 %v483, %v2623
    %v2625 = vpop.f32.mrf.mxu0
    %v2626 = vadd.f32 %v479, %v2625
    %v2627 = vpop.f32.mrf.mxu0
    %v2628 = vadd.f32 %v483, %v2627
    %2629 = vdwg.mxu0
    %2630 = vmatprep.subr.bf16.mxu0 %v1877
    %2631 = vmatpush1.bf16.msra.mxu0 %v1876
    %2632 = vmatprep.subr.bf16.mxu0 %v1869
    %2633 = vmatpush1.bf16.msra.mxu0 %v1868
    %2634 = vmatprep.subr.bf16.mxu0 %v1861
    %2635 = vmatpush1.bf16.msra.mxu0 %v1860
    %2636 = vmatprep.subr.bf16.mxu0 %v1853
    %2637 = vmatpush1.bf16.msra.mxu0 %v1852
    %2638 = vmatprep.subr.bf16.mxu0 %v1845
    %2639 = vmatpush1.bf16.msra.mxu0 %v1844
    %2640 = vmatprep.subr.bf16.mxu0 %v1837
    %2641 = vmatpush1.bf16.msra.mxu0 %v1836
    %2642 = vmatprep.subr.bf16.mxu0 %v1829
    %2643 = vmatpush1.bf16.msra.mxu0 %v1828
    %2644 = vmatprep.subr.bf16.mxu0 %v1821
    %2645 = vmatpush1.bf16.msra.mxu0 %v1820
    %2646 = vmatprep.subr.bf16.mxu0 %v1941
    %2647 = vmatpush2.bf16.msra.mxu0 %v1940
    %2648 = vmatprep.subr.bf16.mxu0 %v1933
    %2649 = vmatpush2.bf16.msra.mxu0 %v1932
    %2650 = vmatprep.subr.bf16.mxu0 %v1925
    %2651 = vmatpush2.bf16.msra.mxu0 %v1924
    %2652 = vmatprep.subr.bf16.mxu0 %v1917
    %2653 = vmatpush2.bf16.msra.mxu0 %v1916
    %2654 = vmatprep.subr.bf16.mxu0 %v1909
    %2655 = vmatpush2.bf16.msra.mxu0 %v1908
    %2656 = vmatprep.subr.bf16.mxu0 %v1901
    %2657 = vmatpush2.bf16.msra.mxu0 %v1900
    %2658 = vmatprep.subr.bf16.mxu0 %v1893
    %2659 = vmatpush2.bf16.msra.mxu0 %v1892
    %2660 = vmatprep.subr.bf16.mxu0 %v1885
    %2661 = vmatpush2.bf16.msra.mxu0 %v1884
    %2662 = vmatprep.mubr.bf16.mxu0 %v529
    %2663 = vmatmul.mubr.bf16.gmra.mxu0 %v528
    %v2664 = vpop.f32.mrf.mxu0
    %v2665 = vadd.f32 %v2622, %v2664
    %v2666 = vpop.f32.mrf.mxu0
    %v2667 = vadd.f32 %v2624, %v2666
    %v2668 = vpop.f32.mrf.mxu0
    %v2669 = vadd.f32 %v2626, %v2668
    %v2670 = vpop.f32.mrf.mxu0
    %v2671 = vadd.f32 %v2628, %v2670
    %2672 = vdwg.mxu0
    %2673 = vmatprep.subr.bf16.mxu0 %v2005
    %2674 = vmatpush1.bf16.msra.mxu0 %v2004
    %2675 = vmatprep.subr.bf16.mxu0 %v1997
    %2676 = vmatpush1.bf16.msra.mxu0 %v1996
    %2677 = vmatprep.subr.bf16.mxu0 %v1989
    %2678 = vmatpush1.bf16.msra.mxu0 %v1988
    %2679 = vmatprep.subr.bf16.mxu0 %v1981
    %2680 = vmatpush1.bf16.msra.mxu0 %v1980
    %2681 = vmatprep.subr.bf16.mxu0 %v1973
    %2682 = vmatpush1.bf16.msra.mxu0 %v1972
    %2683 = vmatprep.subr.bf16.mxu0 %v1965
    %2684 = vmatpush1.bf16.msra.mxu0 %v1964
    %2685 = vmatprep.subr.bf16.mxu0 %v1957
    %2686 = vmatpush1.bf16.msra.mxu0 %v1956
    %2687 = vmatprep.subr.bf16.mxu0 %v1949
    %2688 = vmatpush1.bf16.msra.mxu0 %v1948
    %2689 = vmatprep.subr.bf16.mxu0 %v2069
    %2690 = vmatpush2.bf16.msra.mxu0 %v2068
    %2691 = vmatprep.subr.bf16.mxu0 %v2061
    %2692 = vmatpush2.bf16.msra.mxu0 %v2060
    %2693 = vmatprep.subr.bf16.mxu0 %v2053
    %2694 = vmatpush2.bf16.msra.mxu0 %v2052
    %2695 = vmatprep.subr.bf16.mxu0 %v2045
    %2696 = vmatpush2.bf16.msra.mxu0 %v2044
    %2697 = vmatprep.subr.bf16.mxu0 %v2037
    %2698 = vmatpush2.bf16.msra.mxu0 %v2036
    %2699 = vmatprep.subr.bf16.mxu0 %v2029
    %2700 = vmatpush2.bf16.msra.mxu0 %v2028
    %2701 = vmatprep.subr.bf16.mxu0 %v2021
    %2702 = vmatpush2.bf16.msra.mxu0 %v2020
    %2703 = vmatprep.subr.bf16.mxu0 %v2013
    %2704 = vmatpush2.bf16.msra.mxu0 %v2012
    %2705 = vmatprep.mubr.bf16.mxu0 %v531
    %2706 = vmatmul.mubr.bf16.gmra.mxu0 %v530
    %v2707 = vpop.f32.mrf.mxu0
    %v2708 = vadd.f32 %v2665, %v2707
    %v2709 = vpop.f32.mrf.mxu0
    %v2710 = vadd.f32 %v2667, %v2709
    %v2711 = vpop.f32.mrf.mxu0
    %v2712 = vadd.f32 %v2669, %v2711
    %v2713 = vpop.f32.mrf.mxu0
    %v2714 = vadd.f32 %v2671, %v2713
    %2715 = vdwg.mxu0
    %2716 = vmatprep.subr.bf16.mxu0 %v1751
    %2717 = vmatpush1.bf16.msra.mxu0 %v1750
    %2718 = vmatprep.subr.bf16.mxu0 %v1743
    %2719 = vmatpush1.bf16.msra.mxu0 %v1742
    %2720 = vmatprep.subr.bf16.mxu0 %v1735
    %2721 = vmatpush1.bf16.msra.mxu0 %v1734
    %2722 = vmatprep.subr.bf16.mxu0 %v1727
    %2723 = vmatpush1.bf16.msra.mxu0 %v1726
    %2724 = vmatprep.subr.bf16.mxu0 %v1719
    %2725 = vmatpush1.bf16.msra.mxu0 %v1718
    %2726 = vmatprep.subr.bf16.mxu0 %v1711
    %2727 = vmatpush1.bf16.msra.mxu0 %v1710
    %2728 = vmatprep.subr.bf16.mxu0 %v1703
    %2729 = vmatpush1.bf16.msra.mxu0 %v1702
    %2730 = vmatprep.subr.bf16.mxu0 %v1695
    %2731 = vmatpush1.bf16.msra.mxu0 %v1694
    %2732 = vmatprep.subr.bf16.mxu0 %v1815
    %2733 = vmatpush2.bf16.msra.mxu0 %v1814
    %2734 = vmatprep.subr.bf16.mxu0 %v1807
    %2735 = vmatpush2.bf16.msra.mxu0 %v1806
    %2736 = vmatprep.subr.bf16.mxu0 %v1799
    %2737 = vmatpush2.bf16.msra.mxu0 %v1798
    %2738 = vmatprep.subr.bf16.mxu0 %v1791
    %2739 = vmatpush2.bf16.msra.mxu0 %v1790
    %2740 = vmatprep.subr.bf16.mxu0 %v1783
    %2741 = vmatpush2.bf16.msra.mxu0 %v1782
    %2742 = vmatprep.subr.bf16.mxu0 %v1775
    %2743 = vmatpush2.bf16.msra.mxu0 %v1774
    %2744 = vmatprep.subr.bf16.mxu0 %v1767
    %2745 = vmatpush2.bf16.msra.mxu0 %v1766
    %2746 = vmatprep.subr.bf16.mxu0 %v1759
    %2747 = vmatpush2.bf16.msra.mxu0 %v1758
    %2748 = vmatprep.mubr.bf16.mxu0 %v527
    %2749 = vmatmul.mubr.bf16.gmra.mxu0 %v526
    %v2750 = vpop.f32.mrf.mxu0
    %v2751 = vadd.f32 %v487, %v2750
    %v2752 = vpop.f32.mrf.mxu0
    %v2753 = vadd.f32 %v491, %v2752
    %v2754 = vpop.f32.mrf.mxu0
    %v2755 = vadd.f32 %v487, %v2754
    %v2756 = vpop.f32.mrf.mxu0
    %v2757 = vadd.f32 %v491, %v2756
    %2758 = vdwg.mxu0
    %2759 = vmatprep.subr.bf16.mxu0 %v1879
    %2760 = vmatpush1.bf16.msra.mxu0 %v1878
    %2761 = vmatprep.subr.bf16.mxu0 %v1871
    %2762 = vmatpush1.bf16.msra.mxu0 %v1870
    %2763 = vmatprep.subr.bf16.mxu0 %v1863
    %2764 = vmatpush1.bf16.msra.mxu0 %v1862
    %2765 = vmatprep.subr.bf16.mxu0 %v1855
    %2766 = vmatpush1.bf16.msra.mxu0 %v1854
    %2767 = vmatprep.subr.bf16.mxu0 %v1847
    %2768 = vmatpush1.bf16.msra.mxu0 %v1846
    %2769 = vmatprep.subr.bf16.mxu0 %v1839
    %2770 = vmatpush1.bf16.msra.mxu0 %v1838
    %2771 = vmatprep.subr.bf16.mxu0 %v1831
    %2772 = vmatpush1.bf16.msra.mxu0 %v1830
    %2773 = vmatprep.subr.bf16.mxu0 %v1823
    %2774 = vmatpush1.bf16.msra.mxu0 %v1822
    %2775 = vmatprep.subr.bf16.mxu0 %v1943
    %2776 = vmatpush2.bf16.msra.mxu0 %v1942
    %2777 = vmatprep.subr.bf16.mxu0 %v1935
    %2778 = vmatpush2.bf16.msra.mxu0 %v1934
    %2779 = vmatprep.subr.bf16.mxu0 %v1927
    %2780 = vmatpush2.bf16.msra.mxu0 %v1926
    %2781 = vmatprep.subr.bf16.mxu0 %v1919
    %2782 = vmatpush2.bf16.msra.mxu0 %v1918
    %2783 = vmatprep.subr.bf16.mxu0 %v1911
    %2784 = vmatpush2.bf16.msra.mxu0 %v1910
    %2785 = vmatprep.subr.bf16.mxu0 %v1903
    %2786 = vmatpush2.bf16.msra.mxu0 %v1902
    %2787 = vmatprep.subr.bf16.mxu0 %v1895
    %2788 = vmatpush2.bf16.msra.mxu0 %v1894
    %2789 = vmatprep.subr.bf16.mxu0 %v1887
    %2790 = vmatpush2.bf16.msra.mxu0 %v1886
    %2791 = vmatprep.mubr.bf16.mxu0 %v529
    %2792 = vmatmul.mubr.bf16.gmra.mxu0 %v528
    %v2793 = vpop.f32.mrf.mxu0
    %v2794 = vadd.f32 %v2751, %v2793
    %v2795 = vpop.f32.mrf.mxu0
    %v2796 = vadd.f32 %v2753, %v2795
    %v2797 = vpop.f32.mrf.mxu0
    %v2798 = vadd.f32 %v2755, %v2797
    %v2799 = vpop.f32.mrf.mxu0
    %v2800 = vadd.f32 %v2757, %v2799
    %2801 = vdwg.mxu0
    %2802 = vmatprep.subr.bf16.mxu0 %v2007
    %2803 = vmatpush1.bf16.msra.mxu0 %v2006
    %2804 = vmatprep.subr.bf16.mxu0 %v1999
    %2805 = vmatpush1.bf16.msra.mxu0 %v1998
    %2806 = vmatprep.subr.bf16.mxu0 %v1991
    %2807 = vmatpush1.bf16.msra.mxu0 %v1990
    %2808 = vmatprep.subr.bf16.mxu0 %v1983
    %2809 = vmatpush1.bf16.msra.mxu0 %v1982
    %2810 = vmatprep.subr.bf16.mxu0 %v1975
    %2811 = vmatpush1.bf16.msra.mxu0 %v1974
    %2812 = vmatprep.subr.bf16.mxu0 %v1967
    %2813 = vmatpush1.bf16.msra.mxu0 %v1966
    %2814 = vmatprep.subr.bf16.mxu0 %v1959
    %2815 = vmatpush1.bf16.msra.mxu0 %v1958
    %2816 = vmatprep.subr.bf16.mxu0 %v1951
    %2817 = vmatpush1.bf16.msra.mxu0 %v1950
    %2818 = vmatprep.subr.bf16.mxu0 %v2071
    %2819 = vmatpush2.bf16.msra.mxu0 %v2070
    %2820 = vmatprep.subr.bf16.mxu0 %v2063
    %2821 = vmatpush2.bf16.msra.mxu0 %v2062
    %2822 = vmatprep.subr.bf16.mxu0 %v2055
    %2823 = vmatpush2.bf16.msra.mxu0 %v2054
    %2824 = vmatprep.subr.bf16.mxu0 %v2047
    %2825 = vmatpush2.bf16.msra.mxu0 %v2046
    %2826 = vmatprep.subr.bf16.mxu0 %v2039
    %2827 = vmatpush2.bf16.msra.mxu0 %v2038
    %2828 = vmatprep.subr.bf16.mxu0 %v2031
    %2829 = vmatpush2.bf16.msra.mxu0 %v2030
    %2830 = vmatprep.subr.bf16.mxu0 %v2023
    %2831 = vmatpush2.bf16.msra.mxu0 %v2022
    %2832 = vmatprep.subr.bf16.mxu0 %v2015
    %2833 = vmatpush2.bf16.msra.mxu0 %v2014
    %2834 = vmatprep.mubr.bf16.mxu0 %v531
    %2835 = vmatmul.mubr.bf16.gmra.mxu0 %v530
    %v2836 = vpop.f32.mrf.mxu0
    %v2837 = vadd.f32 %v2794, %v2836
    %v2838 = vpop.f32.mrf.mxu0
    %v2839 = vadd.f32 %v2796, %v2838
    %v2840 = vpop.f32.mrf.mxu0
    %v2841 = vadd.f32 %v2798, %v2840
    %v2842 = vpop.f32.mrf.mxu0
    %v2843 = vadd.f32 %v2800, %v2842
    %2844 = vdwg.mxu0
    %2845 = vmatprep.subr.bf16.mxu0 %v1753
    %2846 = vmatpush1.bf16.msra.mxu0 %v1752
    %2847 = vmatprep.subr.bf16.mxu0 %v1745
    %2848 = vmatpush1.bf16.msra.mxu0 %v1744
    %2849 = vmatprep.subr.bf16.mxu0 %v1737
    %2850 = vmatpush1.bf16.msra.mxu0 %v1736
    %2851 = vmatprep.subr.bf16.mxu0 %v1729
    %2852 = vmatpush1.bf16.msra.mxu0 %v1728
    %2853 = vmatprep.subr.bf16.mxu0 %v1721
    %2854 = vmatpush1.bf16.msra.mxu0 %v1720
    %2855 = vmatprep.subr.bf16.mxu0 %v1713
    %2856 = vmatpush1.bf16.msra.mxu0 %v1712
    %2857 = vmatprep.subr.bf16.mxu0 %v1705
    %2858 = vmatpush1.bf16.msra.mxu0 %v1704
    %2859 = vmatprep.subr.bf16.mxu0 %v1697
    %2860 = vmatpush1.bf16.msra.mxu0 %v1696
    %2861 = vmatprep.subr.bf16.mxu0 %v1817
    %2862 = vmatpush2.bf16.msra.mxu0 %v1816
    %2863 = vmatprep.subr.bf16.mxu0 %v1809
    %2864 = vmatpush2.bf16.msra.mxu0 %v1808
    %2865 = vmatprep.subr.bf16.mxu0 %v1801
    %2866 = vmatpush2.bf16.msra.mxu0 %v1800
    %2867 = vmatprep.subr.bf16.mxu0 %v1793
    %2868 = vmatpush2.bf16.msra.mxu0 %v1792
    %2869 = vmatprep.subr.bf16.mxu0 %v1785
    %2870 = vmatpush2.bf16.msra.mxu0 %v1784
    %2871 = vmatprep.subr.bf16.mxu0 %v1777
    %2872 = vmatpush2.bf16.msra.mxu0 %v1776
    %2873 = vmatprep.subr.bf16.mxu0 %v1769
    %2874 = vmatpush2.bf16.msra.mxu0 %v1768
    %2875 = vmatprep.subr.bf16.mxu0 %v1761
    %2876 = vmatpush2.bf16.msra.mxu0 %v1760
    %2877 = vmatprep.mubr.bf16.mxu0 %v527
    %2878 = vmatmul.mubr.bf16.gmra.mxu0 %v526
    %v2879 = vpop.f32.mrf.mxu0
    %v2880 = vadd.f32 %v495, %v2879
    %v2881 = vpop.f32.mrf.mxu0
    %v2882 = vadd.f32 %v499, %v2881
    %v2883 = vpop.f32.mrf.mxu0
    %v2884 = vadd.f32 %v495, %v2883
    %v2885 = vpop.f32.mrf.mxu0
    %v2886 = vadd.f32 %v499, %v2885
    %2887 = vdwg.mxu0
    %2888 = vmatprep.subr.bf16.mxu0 %v1881
    %2889 = vmatpush1.bf16.msra.mxu0 %v1880
    %2890 = vmatprep.subr.bf16.mxu0 %v1873
    %2891 = vmatpush1.bf16.msra.mxu0 %v1872
    %2892 = vmatprep.subr.bf16.mxu0 %v1865
    %2893 = vmatpush1.bf16.msra.mxu0 %v1864
    %2894 = vmatprep.subr.bf16.mxu0 %v1857
    %2895 = vmatpush1.bf16.msra.mxu0 %v1856
    %2896 = vmatprep.subr.bf16.mxu0 %v1849
    %2897 = vmatpush1.bf16.msra.mxu0 %v1848
    %2898 = vmatprep.subr.bf16.mxu0 %v1841
    %2899 = vmatpush1.bf16.msra.mxu0 %v1840
    %2900 = vmatprep.subr.bf16.mxu0 %v1833
    %2901 = vmatpush1.bf16.msra.mxu0 %v1832
    %2902 = vmatprep.subr.bf16.mxu0 %v1825
    %2903 = vmatpush1.bf16.msra.mxu0 %v1824
    %2904 = vmatprep.subr.bf16.mxu0 %v1945
    %2905 = vmatpush2.bf16.msra.mxu0 %v1944
    %2906 = vmatprep.subr.bf16.mxu0 %v1937
    %2907 = vmatpush2.bf16.msra.mxu0 %v1936
    %2908 = vmatprep.subr.bf16.mxu0 %v1929
    %2909 = vmatpush2.bf16.msra.mxu0 %v1928
    %2910 = vmatprep.subr.bf16.mxu0 %v1921
    %2911 = vmatpush2.bf16.msra.mxu0 %v1920
    %2912 = vmatprep.subr.bf16.mxu0 %v1913
    %2913 = vmatpush2.bf16.msra.mxu0 %v1912
    %2914 = vmatprep.subr.bf16.mxu0 %v1905
    %2915 = vmatpush2.bf16.msra.mxu0 %v1904
    %2916 = vmatprep.subr.bf16.mxu0 %v1897
    %2917 = vmatpush2.bf16.msra.mxu0 %v1896
    %2918 = vmatprep.subr.bf16.mxu0 %v1889
    %2919 = vmatpush2.bf16.msra.mxu0 %v1888
    %2920 = vmatprep.mubr.bf16.mxu0 %v529
    %2921 = vmatmul.mubr.bf16.gmra.mxu0 %v528
    %v2922 = vpop.f32.mrf.mxu0
    %v2923 = vadd.f32 %v2880, %v2922
    %v2924 = vpop.f32.mrf.mxu0
    %v2925 = vadd.f32 %v2882, %v2924
    %v2926 = vpop.f32.mrf.mxu0
    %v2927 = vadd.f32 %v2884, %v2926
    %v2928 = vpop.f32.mrf.mxu0
    %v2929 = vadd.f32 %v2886, %v2928
    %2930 = vdwg.mxu0
    %2931 = vmatprep.subr.bf16.mxu0 %v2009
    %2932 = vmatpush1.bf16.msra.mxu0 %v2008
    %2933 = vmatprep.subr.bf16.mxu0 %v2001
    %2934 = vmatpush1.bf16.msra.mxu0 %v2000
    %2935 = vmatprep.subr.bf16.mxu0 %v1993
    %2936 = vmatpush1.bf16.msra.mxu0 %v1992
    %2937 = vmatprep.subr.bf16.mxu0 %v1985
    %2938 = vmatpush1.bf16.msra.mxu0 %v1984
    %2939 = vmatprep.subr.bf16.mxu0 %v1977
    %2940 = vmatpush1.bf16.msra.mxu0 %v1976
    %2941 = vmatprep.subr.bf16.mxu0 %v1969
    %2942 = vmatpush1.bf16.msra.mxu0 %v1968
    %2943 = vmatprep.subr.bf16.mxu0 %v1961
    %2944 = vmatpush1.bf16.msra.mxu0 %v1960
    %2945 = vmatprep.subr.bf16.mxu0 %v1953
    %2946 = vmatpush1.bf16.msra.mxu0 %v1952
    %2947 = vmatprep.subr.bf16.mxu0 %v2073
    %2948 = vmatpush2.bf16.msra.mxu0 %v2072
    %2949 = vmatprep.subr.bf16.mxu0 %v2065
    %2950 = vmatpush2.bf16.msra.mxu0 %v2064
    %2951 = vmatprep.subr.bf16.mxu0 %v2057
    %2952 = vmatpush2.bf16.msra.mxu0 %v2056
    %2953 = vmatprep.subr.bf16.mxu0 %v2049
    %2954 = vmatpush2.bf16.msra.mxu0 %v2048
    %2955 = vmatprep.subr.bf16.mxu0 %v2041
    %2956 = vmatpush2.bf16.msra.mxu0 %v2040
    %2957 = vmatprep.subr.bf16.mxu0 %v2033
    %2958 = vmatpush2.bf16.msra.mxu0 %v2032
    %2959 = vmatprep.subr.bf16.mxu0 %v2025
    %2960 = vmatpush2.bf16.msra.mxu0 %v2024
    %2961 = vmatprep.subr.bf16.mxu0 %v2017
    %2962 = vmatpush2.bf16.msra.mxu0 %v2016
    %2963 = vmatprep.mubr.bf16.mxu0 %v531
    %2964 = vmatmul.mubr.bf16.gmra.mxu0 %v530
    %v2965 = vpop.f32.mrf.mxu0
    %v2966 = vadd.f32 %v2923, %v2965
    %v2967 = vpop.f32.mrf.mxu0
    %v2968 = vadd.f32 %v2925, %v2967
    %v2969 = vpop.f32.mrf.mxu0
    %v2970 = vadd.f32 %v2927, %v2969
    %v2971 = vpop.f32.mrf.mxu0
    %v2972 = vadd.f32 %v2929, %v2971
    %2973 = vdwg.mxu0
    %v2974 = vmax.f32 %v2579, 0.0
    %v2975 = vmax.f32 %v2581, 0.0
    %v2976 = vmax.f32 %v2708, 0.0
    %v2977 = vmax.f32 %v2710, 0.0
    %v2978 = vmax.f32 %v2837, 0.0
    %v2979 = vmax.f32 %v2839, 0.0
    %v2980 = vmax.f32 %v2966, 0.0
    %v2981 = vmax.f32 %v2968, 0.0
    %v2982 = vmax.f32 %v2583, 0.0
    %v2983 = vmax.f32 %v2585, 0.0
    %v2984 = vmax.f32 %v2712, 0.0
    %v2985 = vmax.f32 %v2714, 0.0
    %v2986 = vmax.f32 %v2841, 0.0
    %v2987 = vmax.f32 %v2843, 0.0
    %v2988 = vmax.f32 %v2970, 0.0
    %v2989 = vmax.f32 %v2972, 0.0
    %v2990 = vpack.c.bf16 %v2982, %v2974
    %v2991 = vpack.c.bf16 %v2983, %v2975
    %v2992 = vpack.c.bf16 %v2984, %v2976
    %v2993 = vpack.c.bf16 %v2985, %v2977
    %v2994 = vpack.c.bf16 %v2986, %v2978
    %v2995 = vpack.c.bf16 %v2987, %v2979
    %v2996 = vpack.c.bf16 %v2988, %v2980
    %v2997 = vpack.c.bf16 %v2989, %v2981
    %v2998 = vld [vmem:[#allocation4] sm:$0xff]
    %v2999 = vld [vmem:[#allocation4 + $0x8] sm:$0xff]
    %v3000 = vld [vmem:[#allocation4 + $0x10] sm:$0xff]
    %v3001 = vld [vmem:[#allocation4 + $0x18] sm:$0xff]
    %v3002 = vld [vmem:[#allocation4 + $0x20] sm:$0xff]
    %v3003 = vld [vmem:[#allocation4 + $0x28] sm:$0xff]
    %v3004 = vld [vmem:[#allocation4 + $0x30] sm:$0xff]
    %v3005 = vld [vmem:[#allocation4 + $0x38] sm:$0xff]
    %v3006 = vld [vmem:[#allocation4 + $0x40] sm:$0xff]
    %v3007 = vld [vmem:[#allocation4 + $0x48] sm:$0xff]
    %v3008 = vld [vmem:[#allocation4 + $0x50] sm:$0xff]
    %v3009 = vld [vmem:[#allocation4 + $0x58] sm:$0xff]
    %v3010 = vld [vmem:[#allocation4 + $0x60] sm:$0xff]
    %v3011 = vld [vmem:[#allocation4 + $0x68] sm:$0xff]
    %v3012 = vld [vmem:[#allocation4 + $0x70] sm:$0xff]
    %v3013 = vld [vmem:[#allocation4 + $0x78] sm:$0xff]
    %v3014 = vld [vmem:[#allocation4 + $0x80] sm:$0xff]
    %v3015 = vld [vmem:[#allocation4 + $0x88] sm:$0xff]
    %v3016 = vld [vmem:[#allocation4 + $0x90] sm:$0xff]
    %v3017 = vld [vmem:[#allocation4 + $0x98] sm:$0xff]
    %v3018 = vld [vmem:[#allocation4 + $0xa0] sm:$0xff]
    %v3019 = vld [vmem:[#allocation4 + $0xa8] sm:$0xff]
    %v3020 = vld [vmem:[#allocation4 + $0xb0] sm:$0xff]
    %v3021 = vld [vmem:[#allocation4 + $0xb8] sm:$0xff]
    %v3022 = vld [vmem:[#allocation4 + $0xc0] sm:$0xff]
    %v3023 = vld [vmem:[#allocation4 + $0xc8] sm:$0xff]
    %v3024 = vld [vmem:[#allocation4 + $0xd0] sm:$0xff]
    %v3025 = vld [vmem:[#allocation4 + $0xd8] sm:$0xff]
    %v3026 = vld [vmem:[#allocation4 + $0xe0] sm:$0xff]
    %v3027 = vld [vmem:[#allocation4 + $0xe8] sm:$0xff]
    %v3028 = vld [vmem:[#allocation4 + $0xf0] sm:$0xff]
    %v3029 = vld [vmem:[#allocation4 + $0xf8] sm:$0xff]
    %v3030 = vld [vmem:[#allocation4 + $0x100] sm:$0xff]
    %v3031 = vld [vmem:[#allocation4 + $0x108] sm:$0xff]
    %v3032 = vld [vmem:[#allocation4 + $0x110] sm:$0xff]
    %v3033 = vld [vmem:[#allocation4 + $0x118] sm:$0xff]
    %v3034 = vld [vmem:[#allocation4 + $0x120] sm:$0xff]
    %v3035 = vld [vmem:[#allocation4 + $0x128] sm:$0xff]
    %v3036 = vld [vmem:[#allocation4 + $0x130] sm:$0xff]
    %v3037 = vld [vmem:[#allocation4 + $0x138] sm:$0xff]
    %v3038 = vld [vmem:[#allocation4 + $0x140] sm:$0xff]
    %v3039 = vld [vmem:[#allocation4 + $0x148] sm:$0xff]
    %v3040 = vld [vmem:[#allocation4 + $0x150] sm:$0xff]
    %v3041 = vld [vmem:[#allocation4 + $0x158] sm:$0xff]
    %v3042 = vld [vmem:[#allocation4 + $0x160] sm:$0xff]
    %v3043 = vld [vmem:[#allocation4 + $0x168] sm:$0xff]
    %v3044 = vld [vmem:[#allocation4 + $0x170] sm:$0xff]
    %v3045 = vld [vmem:[#allocation4 + $0x178] sm:$0xff]
    %v3046 = vld [vmem:[#allocation4 + $0x180] sm:$0xff]
    %v3047 = vld [vmem:[#allocation4 + $0x188] sm:$0xff]
    %v3048 = vld [vmem:[#allocation4 + $0x190] sm:$0xff]
    %v3049 = vld [vmem:[#allocation4 + $0x198] sm:$0xff]
    %v3050 = vld [vmem:[#allocation4 + $0x1a0] sm:$0xff]
    %v3051 = vld [vmem:[#allocation4 + $0x1a8] sm:$0xff]
    %v3052 = vld [vmem:[#allocation4 + $0x1b0] sm:$0xff]
    %v3053 = vld [vmem:[#allocation4 + $0x1b8] sm:$0xff]
    %v3054 = vld [vmem:[#allocation4 + $0x1c0] sm:$0xff]
    %v3055 = vld [vmem:[#allocation4 + $0x1c8] sm:$0xff]
    %v3056 = vld [vmem:[#allocation4 + $0x1d0] sm:$0xff]
    %v3057 = vld [vmem:[#allocation4 + $0x1d8] sm:$0xff]
    %v3058 = vld [vmem:[#allocation4 + $0x1e0] sm:$0xff]
    %v3059 = vld [vmem:[#allocation4 + $0x1e8] sm:$0xff]
    %v3060 = vld [vmem:[#allocation4 + $0x1f0] sm:$0xff]
    %v3061 = vld [vmem:[#allocation4 + $0x1f8] sm:$0xff]
    %v3062 = vld [vmem:[#allocation4 + $0x200] sm:$0xff]
    %v3063 = vld [vmem:[#allocation4 + $0x208] sm:$0xff]
    %v3064 = vld [vmem:[#allocation4 + $0x210] sm:$0xff]
    %v3065 = vld [vmem:[#allocation4 + $0x218] sm:$0xff]
    %v3066 = vld [vmem:[#allocation4 + $0x220] sm:$0xff]
    %v3067 = vld [vmem:[#allocation4 + $0x228] sm:$0xff]
    %v3068 = vld [vmem:[#allocation4 + $0x230] sm:$0xff]
    %v3069 = vld [vmem:[#allocation4 + $0x238] sm:$0xff]
    %v3070 = vld [vmem:[#allocation4 + $0x240] sm:$0xff]
    %v3071 = vld [vmem:[#allocation4 + $0x248] sm:$0xff]
    %v3072 = vld [vmem:[#allocation4 + $0x250] sm:$0xff]
    %v3073 = vld [vmem:[#allocation4 + $0x258] sm:$0xff]
    %v3074 = vld [vmem:[#allocation4 + $0x260] sm:$0xff]
    %v3075 = vld [vmem:[#allocation4 + $0x268] sm:$0xff]
    %v3076 = vld [vmem:[#allocation4 + $0x270] sm:$0xff]
    %v3077 = vld [vmem:[#allocation4 + $0x278] sm:$0xff]
    %v3078 = vld [vmem:[#allocation4 + $0x280] sm:$0xff]
    %v3079 = vld [vmem:[#allocation4 + $0x288] sm:$0xff]
    %v3080 = vld [vmem:[#allocation4 + $0x290] sm:$0xff]
    %v3081 = vld [vmem:[#allocation4 + $0x298] sm:$0xff]
    %v3082 = vld [vmem:[#allocation4 + $0x2a0] sm:$0xff]
    %v3083 = vld [vmem:[#allocation4 + $0x2a8] sm:$0xff]
    %v3084 = vld [vmem:[#allocation4 + $0x2b0] sm:$0xff]
    %v3085 = vld [vmem:[#allocation4 + $0x2b8] sm:$0xff]
    %v3086 = vld [vmem:[#allocation4 + $0x2c0] sm:$0xff]
    %v3087 = vld [vmem:[#allocation4 + $0x2c8] sm:$0xff]
    %v3088 = vld [vmem:[#allocation4 + $0x2d0] sm:$0xff]
    %v3089 = vld [vmem:[#allocation4 + $0x2d8] sm:$0xff]
    %v3090 = vld [vmem:[#allocation4 + $0x2e0] sm:$0xff]
    %v3091 = vld [vmem:[#allocation4 + $0x2e8] sm:$0xff]
    %v3092 = vld [vmem:[#allocation4 + $0x2f0] sm:$0xff]
    %v3093 = vld [vmem:[#allocation4 + $0x2f8] sm:$0xff]
    %v3094 = vld [vmem:[#allocation4 + $0x300] sm:$0xff]
    %v3095 = vld [vmem:[#allocation4 + $0x308] sm:$0xff]
    %v3096 = vld [vmem:[#allocation4 + $0x310] sm:$0xff]
    %v3097 = vld [vmem:[#allocation4 + $0x318] sm:$0xff]
    %v3098 = vld [vmem:[#allocation4 + $0x320] sm:$0xff]
    %v3099 = vld [vmem:[#allocation4 + $0x328] sm:$0xff]
    %v3100 = vld [vmem:[#allocation4 + $0x330] sm:$0xff]
    %v3101 = vld [vmem:[#allocation4 + $0x338] sm:$0xff]
    %v3102 = vld [vmem:[#allocation4 + $0x340] sm:$0xff]
    %v3103 = vld [vmem:[#allocation4 + $0x348] sm:$0xff]
    %v3104 = vld [vmem:[#allocation4 + $0x350] sm:$0xff]
    %v3105 = vld [vmem:[#allocation4 + $0x358] sm:$0xff]
    %v3106 = vld [vmem:[#allocation4 + $0x360] sm:$0xff]
    %v3107 = vld [vmem:[#allocation4 + $0x368] sm:$0xff]
    %v3108 = vld [vmem:[#allocation4 + $0x370] sm:$0xff]
    %v3109 = vld [vmem:[#allocation4 + $0x378] sm:$0xff]
    %v3110 = vld [vmem:[#allocation4 + $0x380] sm:$0xff]
    %v3111 = vld [vmem:[#allocation4 + $0x388] sm:$0xff]
    %v3112 = vld [vmem:[#allocation4 + $0x390] sm:$0xff]
    %v3113 = vld [vmem:[#allocation4 + $0x398] sm:$0xff]
    %v3114 = vld [vmem:[#allocation4 + $0x3a0] sm:$0xff]
    %v3115 = vld [vmem:[#allocation4 + $0x3a8] sm:$0xff]
    %v3116 = vld [vmem:[#allocation4 + $0x3b0] sm:$0xff]
    %v3117 = vld [vmem:[#allocation4 + $0x3b8] sm:$0xff]
    %v3118 = vld [vmem:[#allocation4 + $0x3c0] sm:$0xff]
    %v3119 = vld [vmem:[#allocation4 + $0x3c8] sm:$0xff]
    %v3120 = vld [vmem:[#allocation4 + $0x3d0] sm:$0xff]
    %v3121 = vld [vmem:[#allocation4 + $0x3d8] sm:$0xff]
    %v3122 = vld [vmem:[#allocation4 + $0x3e0] sm:$0xff]
    %v3123 = vld [vmem:[#allocation4 + $0x3e8] sm:$0xff]
    %v3124 = vld [vmem:[#allocation4 + $0x3f0] sm:$0xff]
    %v3125 = vld [vmem:[#allocation4 + $0x3f8] sm:$0xff]
    %v3126 = vld [vmem:[#allocation4 + $0x400] sm:$0xff]
    %v3127 = vld [vmem:[#allocation4 + $0x408] sm:$0xff]
    %v3128 = vld [vmem:[#allocation4 + $0x410] sm:$0xff]
    %v3129 = vld [vmem:[#allocation4 + $0x418] sm:$0xff]
    %v3130 = vld [vmem:[#allocation4 + $0x420] sm:$0xff]
    %v3131 = vld [vmem:[#allocation4 + $0x428] sm:$0xff]
    %v3132 = vld [vmem:[#allocation4 + $0x430] sm:$0xff]
    %v3133 = vld [vmem:[#allocation4 + $0x438] sm:$0xff]
    %v3134 = vld [vmem:[#allocation4 + $0x440] sm:$0xff]
    %v3135 = vld [vmem:[#allocation4 + $0x448] sm:$0xff]
    %v3136 = vld [vmem:[#allocation4 + $0x450] sm:$0xff]
    %v3137 = vld [vmem:[#allocation4 + $0x458] sm:$0xff]
    %v3138 = vld [vmem:[#allocation4 + $0x460] sm:$0xff]
    %v3139 = vld [vmem:[#allocation4 + $0x468] sm:$0xff]
    %v3140 = vld [vmem:[#allocation4 + $0x470] sm:$0xff]
    %v3141 = vld [vmem:[#allocation4 + $0x478] sm:$0xff]
    %v3142 = vld [vmem:[#allocation4 + $0x480] sm:$0xff]
    %v3143 = vld [vmem:[#allocation4 + $0x488] sm:$0xff]
    %v3144 = vld [vmem:[#allocation4 + $0x490] sm:$0xff]
    %v3145 = vld [vmem:[#allocation4 + $0x498] sm:$0xff]
    %v3146 = vld [vmem:[#allocation4 + $0x4a0] sm:$0xff]
    %v3147 = vld [vmem:[#allocation4 + $0x4a8] sm:$0xff]
    %v3148 = vld [vmem:[#allocation4 + $0x4b0] sm:$0xff]
    %v3149 = vld [vmem:[#allocation4 + $0x4b8] sm:$0xff]
    %v3150 = vld [vmem:[#allocation4 + $0x4c0] sm:$0xff]
    %v3151 = vld [vmem:[#allocation4 + $0x4c8] sm:$0xff]
    %v3152 = vld [vmem:[#allocation4 + $0x4d0] sm:$0xff]
    %v3153 = vld [vmem:[#allocation4 + $0x4d8] sm:$0xff]
    %v3154 = vld [vmem:[#allocation4 + $0x4e0] sm:$0xff]
    %v3155 = vld [vmem:[#allocation4 + $0x4e8] sm:$0xff]
    %v3156 = vld [vmem:[#allocation4 + $0x4f0] sm:$0xff]
    %v3157 = vld [vmem:[#allocation4 + $0x4f8] sm:$0xff]
    %v3158 = vld [vmem:[#allocation4 + $0x500] sm:$0xff]
    %v3159 = vld [vmem:[#allocation4 + $0x508] sm:$0xff]
    %v3160 = vld [vmem:[#allocation4 + $0x510] sm:$0xff]
    %v3161 = vld [vmem:[#allocation4 + $0x518] sm:$0xff]
    %v3162 = vld [vmem:[#allocation4 + $0x520] sm:$0xff]
    %v3163 = vld [vmem:[#allocation4 + $0x528] sm:$0xff]
    %v3164 = vld [vmem:[#allocation4 + $0x530] sm:$0xff]
    %v3165 = vld [vmem:[#allocation4 + $0x538] sm:$0xff]
    %v3166 = vld [vmem:[#allocation4 + $0x540] sm:$0xff]
    %v3167 = vld [vmem:[#allocation4 + $0x548] sm:$0xff]
    %v3168 = vld [vmem:[#allocation4 + $0x550] sm:$0xff]
    %v3169 = vld [vmem:[#allocation4 + $0x558] sm:$0xff]
    %v3170 = vld [vmem:[#allocation4 + $0x560] sm:$0xff]
    %v3171 = vld [vmem:[#allocation4 + $0x568] sm:$0xff]
    %v3172 = vld [vmem:[#allocation4 + $0x570] sm:$0xff]
    %v3173 = vld [vmem:[#allocation4 + $0x578] sm:$0xff]
    %v3174 = vld [vmem:[#allocation4 + $0x580] sm:$0xff]
    %v3175 = vld [vmem:[#allocation4 + $0x588] sm:$0xff]
    %v3176 = vld [vmem:[#allocation4 + $0x590] sm:$0xff]
    %v3177 = vld [vmem:[#allocation4 + $0x598] sm:$0xff]
    %v3178 = vld [vmem:[#allocation4 + $0x5a0] sm:$0xff]
    %v3179 = vld [vmem:[#allocation4 + $0x5a8] sm:$0xff]
    %v3180 = vld [vmem:[#allocation4 + $0x5b0] sm:$0xff]
    %v3181 = vld [vmem:[#allocation4 + $0x5b8] sm:$0xff]
    %v3182 = vld [vmem:[#allocation4 + $0x5c0] sm:$0xff]
    %v3183 = vld [vmem:[#allocation4 + $0x5c8] sm:$0xff]
    %v3184 = vld [vmem:[#allocation4 + $0x5d0] sm:$0xff]
    %v3185 = vld [vmem:[#allocation4 + $0x5d8] sm:$0xff]
    %v3186 = vld [vmem:[#allocation4 + $0x5e0] sm:$0xff]
    %v3187 = vld [vmem:[#allocation4 + $0x5e8] sm:$0xff]
    %v3188 = vld [vmem:[#allocation4 + $0x5f0] sm:$0xff]
    %v3189 = vld [vmem:[#allocation4 + $0x5f8] sm:$0xff]
    %v3190 = vld [vmem:[#allocation4 + $0x600] sm:$0xff]
    %v3191 = vld [vmem:[#allocation4 + $0x608] sm:$0xff]
    %v3192 = vld [vmem:[#allocation4 + $0x610] sm:$0xff]
    %v3193 = vld [vmem:[#allocation4 + $0x618] sm:$0xff]
    %v3194 = vld [vmem:[#allocation4 + $0x620] sm:$0xff]
    %v3195 = vld [vmem:[#allocation4 + $0x628] sm:$0xff]
    %v3196 = vld [vmem:[#allocation4 + $0x630] sm:$0xff]
    %v3197 = vld [vmem:[#allocation4 + $0x638] sm:$0xff]
    %v3198 = vld [vmem:[#allocation4 + $0x640] sm:$0xff]
    %v3199 = vld [vmem:[#allocation4 + $0x648] sm:$0xff]
    %v3200 = vld [vmem:[#allocation4 + $0x650] sm:$0xff]
    %v3201 = vld [vmem:[#allocation4 + $0x658] sm:$0xff]
    %v3202 = vld [vmem:[#allocation4 + $0x660] sm:$0xff]
    %v3203 = vld [vmem:[#allocation4 + $0x668] sm:$0xff]
    %v3204 = vld [vmem:[#allocation4 + $0x670] sm:$0xff]
    %v3205 = vld [vmem:[#allocation4 + $0x678] sm:$0xff]
    %v3206 = vld [vmem:[#allocation4 + $0x680] sm:$0xff]
    %v3207 = vld [vmem:[#allocation4 + $0x688] sm:$0xff]
    %v3208 = vld [vmem:[#allocation4 + $0x690] sm:$0xff]
    %v3209 = vld [vmem:[#allocation4 + $0x698] sm:$0xff]
    %v3210 = vld [vmem:[#allocation4 + $0x6a0] sm:$0xff]
    %v3211 = vld [vmem:[#allocation4 + $0x6a8] sm:$0xff]
    %v3212 = vld [vmem:[#allocation4 + $0x6b0] sm:$0xff]
    %v3213 = vld [vmem:[#allocation4 + $0x6b8] sm:$0xff]
    %v3214 = vld [vmem:[#allocation4 + $0x6c0] sm:$0xff]
    %v3215 = vld [vmem:[#allocation4 + $0x6c8] sm:$0xff]
    %v3216 = vld [vmem:[#allocation4 + $0x6d0] sm:$0xff]
    %v3217 = vld [vmem:[#allocation4 + $0x6d8] sm:$0xff]
    %v3218 = vld [vmem:[#allocation4 + $0x6e0] sm:$0xff]
    %v3219 = vld [vmem:[#allocation4 + $0x6e8] sm:$0xff]
    %v3220 = vld [vmem:[#allocation4 + $0x6f0] sm:$0xff]
    %v3221 = vld [vmem:[#allocation4 + $0x6f8] sm:$0xff]
    %v3222 = vld [vmem:[#allocation4 + $0x700] sm:$0xff]
    %v3223 = vld [vmem:[#allocation4 + $0x708] sm:$0xff]
    %v3224 = vld [vmem:[#allocation4 + $0x710] sm:$0xff]
    %v3225 = vld [vmem:[#allocation4 + $0x718] sm:$0xff]
    %v3226 = vld [vmem:[#allocation4 + $0x720] sm:$0xff]
    %v3227 = vld [vmem:[#allocation4 + $0x728] sm:$0xff]
    %v3228 = vld [vmem:[#allocation4 + $0x730] sm:$0xff]
    %v3229 = vld [vmem:[#allocation4 + $0x738] sm:$0xff]
    %v3230 = vld [vmem:[#allocation4 + $0x740] sm:$0xff]
    %v3231 = vld [vmem:[#allocation4 + $0x748] sm:$0xff]
    %v3232 = vld [vmem:[#allocation4 + $0x750] sm:$0xff]
    %v3233 = vld [vmem:[#allocation4 + $0x758] sm:$0xff]
    %v3234 = vld [vmem:[#allocation4 + $0x760] sm:$0xff]
    %v3235 = vld [vmem:[#allocation4 + $0x768] sm:$0xff]
    %v3236 = vld [vmem:[#allocation4 + $0x770] sm:$0xff]
    %v3237 = vld [vmem:[#allocation4 + $0x778] sm:$0xff]
    %v3238 = vld [vmem:[#allocation4 + $0x780] sm:$0xff]
    %v3239 = vld [vmem:[#allocation4 + $0x788] sm:$0xff]
    %v3240 = vld [vmem:[#allocation4 + $0x790] sm:$0xff]
    %v3241 = vld [vmem:[#allocation4 + $0x798] sm:$0xff]
    %v3242 = vld [vmem:[#allocation4 + $0x7a0] sm:$0xff]
    %v3243 = vld [vmem:[#allocation4 + $0x7a8] sm:$0xff]
    %v3244 = vld [vmem:[#allocation4 + $0x7b0] sm:$0xff]
    %v3245 = vld [vmem:[#allocation4 + $0x7b8] sm:$0xff]
    %v3246 = vld [vmem:[#allocation4 + $0x7c0] sm:$0xff]
    %v3247 = vld [vmem:[#allocation4 + $0x7c8] sm:$0xff]
    %v3248 = vld [vmem:[#allocation4 + $0x7d0] sm:$0xff]
    %v3249 = vld [vmem:[#allocation4 + $0x7d8] sm:$0xff]
    %v3250 = vld [vmem:[#allocation4 + $0x7e0] sm:$0xff]
    %v3251 = vld [vmem:[#allocation4 + $0x7e8] sm:$0xff]
    %v3252 = vld [vmem:[#allocation4 + $0x7f0] sm:$0xff]
    %v3253 = vld [vmem:[#allocation4 + $0x7f8] sm:$0xff]
    %v3255 = vlaneseq
    %v3256 = vshrl.u32 %v3255, 7
    %v3257 = vsub.s32 0, %v3256
    %v3258 = vrot.slane %v81, %v3257
    %v3259 = vlaneseq
    %v3260 = vshrl.u32 %v3259, 7
    %v3261 = vsub.s32 1, %v3260
    %v3262 = vrot.slane %v81, %v3261
    %v3263 = vlaneseq
    %v3264 = vshrl.u32 %v3263, 7
    %v3265 = vsub.s32 2, %v3264
    %v3266 = vrot.slane %v81, %v3265
    %v3267 = vlaneseq
    %v3268 = vshrl.u32 %v3267, 7
    %v3269 = vsub.s32 3, %v3268
    %v3270 = vrot.slane %v81, %v3269
    %v3531 = vunpack.c.l.b16 %v2998
    %v3532 = vunpack.c.h.b16 %v2998
    %v3533 = vunpack.c.l.b16 %v2999
    %v3534 = vunpack.c.h.b16 %v2999
    %v3535 = vunpack.c.l.b16 %v3000
    %v3536 = vunpack.c.h.b16 %v3000
    %v3537 = vunpack.c.l.b16 %v3001
    %v3538 = vunpack.c.h.b16 %v3001
    %v3539 = vunpack.c.l.b16 %v3002
    %v3540 = vunpack.c.h.b16 %v3002
    %v3541 = vunpack.c.l.b16 %v3003
    %v3542 = vunpack.c.h.b16 %v3003
    %v3543 = vunpack.c.l.b16 %v3004
    %v3544 = vunpack.c.h.b16 %v3004
    %v3545 = vunpack.c.l.b16 %v3005
    %v3546 = vunpack.c.h.b16 %v3005
    %v3547 = vunpack.c.l.b16 %v3006
    %v3548 = vunpack.c.h.b16 %v3006
    %v3549 = vunpack.c.l.b16 %v3007
    %v3550 = vunpack.c.h.b16 %v3007
    %v3551 = vunpack.c.l.b16 %v3008
    %v3552 = vunpack.c.h.b16 %v3008
    %v3553 = vunpack.c.l.b16 %v3009
    %v3554 = vunpack.c.h.b16 %v3009
    %v3555 = vunpack.c.l.b16 %v3010
    %v3556 = vunpack.c.h.b16 %v3010
    %v3557 = vunpack.c.l.b16 %v3011
    %v3558 = vunpack.c.h.b16 %v3011
    %v3559 = vunpack.c.l.b16 %v3012
    %v3560 = vunpack.c.h.b16 %v3012
    %v3561 = vunpack.c.l.b16 %v3013
    %v3562 = vunpack.c.h.b16 %v3013
    %v3563 = vunpack.c.l.b16 %v3014
    %v3564 = vunpack.c.h.b16 %v3014
    %v3565 = vunpack.c.l.b16 %v3015
    %v3566 = vunpack.c.h.b16 %v3015
    %v3567 = vunpack.c.l.b16 %v3016
    %v3568 = vunpack.c.h.b16 %v3016
    %v3569 = vunpack.c.l.b16 %v3017
    %v3570 = vunpack.c.h.b16 %v3017
    %v3571 = vunpack.c.l.b16 %v3018
    %v3572 = vunpack.c.h.b16 %v3018
    %v3573 = vunpack.c.l.b16 %v3019
    %v3574 = vunpack.c.h.b16 %v3019
    %v3575 = vunpack.c.l.b16 %v3020
    %v3576 = vunpack.c.h.b16 %v3020
    %v3577 = vunpack.c.l.b16 %v3021
    %v3578 = vunpack.c.h.b16 %v3021
    %v3579 = vunpack.c.l.b16 %v3022
    %v3580 = vunpack.c.h.b16 %v3022
    %v3581 = vunpack.c.l.b16 %v3023
    %v3582 = vunpack.c.h.b16 %v3023
    %v3583 = vunpack.c.l.b16 %v3024
    %v3584 = vunpack.c.h.b16 %v3024
    %v3585 = vunpack.c.l.b16 %v3025
    %v3586 = vunpack.c.h.b16 %v3025
    %v3587 = vunpack.c.l.b16 %v3026
    %v3588 = vunpack.c.h.b16 %v3026
    %v3589 = vunpack.c.l.b16 %v3027
    %v3590 = vunpack.c.h.b16 %v3027
    %v3591 = vunpack.c.l.b16 %v3028
    %v3592 = vunpack.c.h.b16 %v3028
    %v3593 = vunpack.c.l.b16 %v3029
    %v3594 = vunpack.c.h.b16 %v3029
    %v3595 = vunpack.c.l.b16 %v3030
    %v3596 = vunpack.c.h.b16 %v3030
    %v3597 = vunpack.c.l.b16 %v3031
    %v3598 = vunpack.c.h.b16 %v3031
    %v3599 = vunpack.c.l.b16 %v3032
    %v3600 = vunpack.c.h.b16 %v3032
    %v3601 = vunpack.c.l.b16 %v3033
    %v3602 = vunpack.c.h.b16 %v3033
    %v3603 = vunpack.c.l.b16 %v3034
    %v3604 = vunpack.c.h.b16 %v3034
    %v3605 = vunpack.c.l.b16 %v3035
    %v3606 = vunpack.c.h.b16 %v3035
    %v3607 = vunpack.c.l.b16 %v3036
    %v3608 = vunpack.c.h.b16 %v3036
    %v3609 = vunpack.c.l.b16 %v3037
    %v3610 = vunpack.c.h.b16 %v3037
    %v3611 = vunpack.c.l.b16 %v3038
    %v3612 = vunpack.c.h.b16 %v3038
    %v3613 = vunpack.c.l.b16 %v3039
    %v3614 = vunpack.c.h.b16 %v3039
    %v3615 = vunpack.c.l.b16 %v3040
    %v3616 = vunpack.c.h.b16 %v3040
    %v3617 = vunpack.c.l.b16 %v3041
    %v3618 = vunpack.c.h.b16 %v3041
    %v3619 = vunpack.c.l.b16 %v3042
    %v3620 = vunpack.c.h.b16 %v3042
    %v3621 = vunpack.c.l.b16 %v3043
    %v3622 = vunpack.c.h.b16 %v3043
    %v3623 = vunpack.c.l.b16 %v3044
    %v3624 = vunpack.c.h.b16 %v3044
    %v3625 = vunpack.c.l.b16 %v3045
    %v3626 = vunpack.c.h.b16 %v3045
    %v3627 = vunpack.c.l.b16 %v3046
    %v3628 = vunpack.c.h.b16 %v3046
    %v3629 = vunpack.c.l.b16 %v3047
    %v3630 = vunpack.c.h.b16 %v3047
    %v3631 = vunpack.c.l.b16 %v3048
    %v3632 = vunpack.c.h.b16 %v3048
    %v3633 = vunpack.c.l.b16 %v3049
    %v3634 = vunpack.c.h.b16 %v3049
    %v3635 = vunpack.c.l.b16 %v3050
    %v3636 = vunpack.c.h.b16 %v3050
    %v3637 = vunpack.c.l.b16 %v3051
    %v3638 = vunpack.c.h.b16 %v3051
    %v3639 = vunpack.c.l.b16 %v3052
    %v3640 = vunpack.c.h.b16 %v3052
    %v3641 = vunpack.c.l.b16 %v3053
    %v3642 = vunpack.c.h.b16 %v3053
    %v3643 = vunpack.c.l.b16 %v3054
    %v3644 = vunpack.c.h.b16 %v3054
    %v3645 = vunpack.c.l.b16 %v3055
    %v3646 = vunpack.c.h.b16 %v3055
    %v3647 = vunpack.c.l.b16 %v3056
    %v3648 = vunpack.c.h.b16 %v3056
    %v3649 = vunpack.c.l.b16 %v3057
    %v3650 = vunpack.c.h.b16 %v3057
    %v3651 = vunpack.c.l.b16 %v3058
    %v3652 = vunpack.c.h.b16 %v3058
    %v3653 = vunpack.c.l.b16 %v3059
    %v3654 = vunpack.c.h.b16 %v3059
    %v3655 = vunpack.c.l.b16 %v3060
    %v3656 = vunpack.c.h.b16 %v3060
    %v3657 = vunpack.c.l.b16 %v3061
    %v3658 = vunpack.c.h.b16 %v3061
    %v3659 = vunpack.c.l.b16 %v3062
    %v3660 = vunpack.c.h.b16 %v3062
    %v3661 = vunpack.c.l.b16 %v3063
    %v3662 = vunpack.c.h.b16 %v3063
    %v3663 = vunpack.c.l.b16 %v3064
    %v3664 = vunpack.c.h.b16 %v3064
    %v3665 = vunpack.c.l.b16 %v3065
    %v3666 = vunpack.c.h.b16 %v3065
    %v3667 = vunpack.c.l.b16 %v3066
    %v3668 = vunpack.c.h.b16 %v3066
    %v3669 = vunpack.c.l.b16 %v3067
    %v3670 = vunpack.c.h.b16 %v3067
    %v3671 = vunpack.c.l.b16 %v3068
    %v3672 = vunpack.c.h.b16 %v3068
    %v3673 = vunpack.c.l.b16 %v3069
    %v3674 = vunpack.c.h.b16 %v3069
    %v3675 = vunpack.c.l.b16 %v3070
    %v3676 = vunpack.c.h.b16 %v3070
    %v3677 = vunpack.c.l.b16 %v3071
    %v3678 = vunpack.c.h.b16 %v3071
    %v3679 = vunpack.c.l.b16 %v3072
    %v3680 = vunpack.c.h.b16 %v3072
    %v3681 = vunpack.c.l.b16 %v3073
    %v3682 = vunpack.c.h.b16 %v3073
    %v3683 = vunpack.c.l.b16 %v3074
    %v3684 = vunpack.c.h.b16 %v3074
    %v3685 = vunpack.c.l.b16 %v3075
    %v3686 = vunpack.c.h.b16 %v3075
    %v3687 = vunpack.c.l.b16 %v3076
    %v3688 = vunpack.c.h.b16 %v3076
    %v3689 = vunpack.c.l.b16 %v3077
    %v3690 = vunpack.c.h.b16 %v3077
    %v3691 = vunpack.c.l.b16 %v3078
    %v3692 = vunpack.c.h.b16 %v3078
    %v3693 = vunpack.c.l.b16 %v3079
    %v3694 = vunpack.c.h.b16 %v3079
    %v3695 = vunpack.c.l.b16 %v3080
    %v3696 = vunpack.c.h.b16 %v3080
    %v3697 = vunpack.c.l.b16 %v3081
    %v3698 = vunpack.c.h.b16 %v3081
    %v3699 = vunpack.c.l.b16 %v3082
    %v3700 = vunpack.c.h.b16 %v3082
    %v3701 = vunpack.c.l.b16 %v3083
    %v3702 = vunpack.c.h.b16 %v3083
    %v3703 = vunpack.c.l.b16 %v3084
    %v3704 = vunpack.c.h.b16 %v3084
    %v3705 = vunpack.c.l.b16 %v3085
    %v3706 = vunpack.c.h.b16 %v3085
    %v3707 = vunpack.c.l.b16 %v3086
    %v3708 = vunpack.c.h.b16 %v3086
    %v3709 = vunpack.c.l.b16 %v3087
    %v3710 = vunpack.c.h.b16 %v3087
    %v3711 = vunpack.c.l.b16 %v3088
    %v3712 = vunpack.c.h.b16 %v3088
    %v3713 = vunpack.c.l.b16 %v3089
    %v3714 = vunpack.c.h.b16 %v3089
    %v3715 = vunpack.c.l.b16 %v3090
    %v3716 = vunpack.c.h.b16 %v3090
    %v3717 = vunpack.c.l.b16 %v3091
    %v3718 = vunpack.c.h.b16 %v3091
    %v3719 = vunpack.c.l.b16 %v3092
    %v3720 = vunpack.c.h.b16 %v3092
    %v3721 = vunpack.c.l.b16 %v3093
    %v3722 = vunpack.c.h.b16 %v3093
    %v3723 = vunpack.c.l.b16 %v3094
    %v3724 = vunpack.c.h.b16 %v3094
    %v3725 = vunpack.c.l.b16 %v3095
    %v3726 = vunpack.c.h.b16 %v3095
    %v3727 = vunpack.c.l.b16 %v3096
    %v3728 = vunpack.c.h.b16 %v3096
    %v3729 = vunpack.c.l.b16 %v3097
    %v3730 = vunpack.c.h.b16 %v3097
    %v3731 = vunpack.c.l.b16 %v3098
    %v3732 = vunpack.c.h.b16 %v3098
    %v3733 = vunpack.c.l.b16 %v3099
    %v3734 = vunpack.c.h.b16 %v3099
    %v3735 = vunpack.c.l.b16 %v3100
    %v3736 = vunpack.c.h.b16 %v3100
    %v3737 = vunpack.c.l.b16 %v3101
    %v3738 = vunpack.c.h.b16 %v3101
    %v3739 = vunpack.c.l.b16 %v3102
    %v3740 = vunpack.c.h.b16 %v3102
    %v3741 = vunpack.c.l.b16 %v3103
    %v3742 = vunpack.c.h.b16 %v3103
    %v3743 = vunpack.c.l.b16 %v3104
    %v3744 = vunpack.c.h.b16 %v3104
    %v3745 = vunpack.c.l.b16 %v3105
    %v3746 = vunpack.c.h.b16 %v3105
    %v3747 = vunpack.c.l.b16 %v3106
    %v3748 = vunpack.c.h.b16 %v3106
    %v3749 = vunpack.c.l.b16 %v3107
    %v3750 = vunpack.c.h.b16 %v3107
    %v3751 = vunpack.c.l.b16 %v3108
    %v3752 = vunpack.c.h.b16 %v3108
    %v3753 = vunpack.c.l.b16 %v3109
    %v3754 = vunpack.c.h.b16 %v3109
    %v3755 = vunpack.c.l.b16 %v3110
    %v3756 = vunpack.c.h.b16 %v3110
    %v3757 = vunpack.c.l.b16 %v3111
    %v3758 = vunpack.c.h.b16 %v3111
    %v3759 = vunpack.c.l.b16 %v3112
    %v3760 = vunpack.c.h.b16 %v3112
    %v3761 = vunpack.c.l.b16 %v3113
    %v3762 = vunpack.c.h.b16 %v3113
    %v3763 = vunpack.c.l.b16 %v3114
    %v3764 = vunpack.c.h.b16 %v3114
    %v3765 = vunpack.c.l.b16 %v3115
    %v3766 = vunpack.c.h.b16 %v3115
    %v3767 = vunpack.c.l.b16 %v3116
    %v3768 = vunpack.c.h.b16 %v3116
    %v3769 = vunpack.c.l.b16 %v3117
    %v3770 = vunpack.c.h.b16 %v3117
    %v3771 = vunpack.c.l.b16 %v3118
    %v3772 = vunpack.c.h.b16 %v3118
    %v3773 = vunpack.c.l.b16 %v3119
    %v3774 = vunpack.c.h.b16 %v3119
    %v3775 = vunpack.c.l.b16 %v3120
    %v3776 = vunpack.c.h.b16 %v3120
    %v3777 = vunpack.c.l.b16 %v3121
    %v3778 = vunpack.c.h.b16 %v3121
    %v3779 = vunpack.c.l.b16 %v3122
    %v3780 = vunpack.c.h.b16 %v3122
    %v3781 = vunpack.c.l.b16 %v3123
    %v3782 = vunpack.c.h.b16 %v3123
    %v3783 = vunpack.c.l.b16 %v3124
    %v3784 = vunpack.c.h.b16 %v3124
    %v3785 = vunpack.c.l.b16 %v3125
    %v3786 = vunpack.c.h.b16 %v3125
    %v3787 = vunpack.c.l.b16 %v3126
    %v3788 = vunpack.c.h.b16 %v3126
    %v3789 = vunpack.c.l.b16 %v3127
    %v3790 = vunpack.c.h.b16 %v3127
    %v3791 = vunpack.c.l.b16 %v3128
    %v3792 = vunpack.c.h.b16 %v3128
    %v3793 = vunpack.c.l.b16 %v3129
    %v3794 = vunpack.c.h.b16 %v3129
    %v3795 = vunpack.c.l.b16 %v3130
    %v3796 = vunpack.c.h.b16 %v3130
    %v3797 = vunpack.c.l.b16 %v3131
    %v3798 = vunpack.c.h.b16 %v3131
    %v3799 = vunpack.c.l.b16 %v3132
    %v3800 = vunpack.c.h.b16 %v3132
    %v3801 = vunpack.c.l.b16 %v3133
    %v3802 = vunpack.c.h.b16 %v3133
    %v3803 = vunpack.c.l.b16 %v3134
    %v3804 = vunpack.c.h.b16 %v3134
    %v3805 = vunpack.c.l.b16 %v3135
    %v3806 = vunpack.c.h.b16 %v3135
    %v3807 = vunpack.c.l.b16 %v3136
    %v3808 = vunpack.c.h.b16 %v3136
    %v3809 = vunpack.c.l.b16 %v3137
    %v3810 = vunpack.c.h.b16 %v3137
    %v3811 = vunpack.c.l.b16 %v3138
    %v3812 = vunpack.c.h.b16 %v3138
    %v3813 = vunpack.c.l.b16 %v3139
    %v3814 = vunpack.c.h.b16 %v3139
    %v3815 = vunpack.c.l.b16 %v3140
    %v3816 = vunpack.c.h.b16 %v3140
    %v3817 = vunpack.c.l.b16 %v3141
    %v3818 = vunpack.c.h.b16 %v3141
    %v3819 = vunpack.c.l.b16 %v3142
    %v3820 = vunpack.c.h.b16 %v3142
    %v3821 = vunpack.c.l.b16 %v3143
    %v3822 = vunpack.c.h.b16 %v3143
    %v3823 = vunpack.c.l.b16 %v3144
    %v3824 = vunpack.c.h.b16 %v3144
    %v3825 = vunpack.c.l.b16 %v3145
    %v3826 = vunpack.c.h.b16 %v3145
    %v3827 = vunpack.c.l.b16 %v3146
    %v3828 = vunpack.c.h.b16 %v3146
    %v3829 = vunpack.c.l.b16 %v3147
    %v3830 = vunpack.c.h.b16 %v3147
    %v3831 = vunpack.c.l.b16 %v3148
    %v3832 = vunpack.c.h.b16 %v3148
    %v3833 = vunpack.c.l.b16 %v3149
    %v3834 = vunpack.c.h.b16 %v3149
    %v3835 = vunpack.c.l.b16 %v3150
    %v3836 = vunpack.c.h.b16 %v3150
    %v3837 = vunpack.c.l.b16 %v3151
    %v3838 = vunpack.c.h.b16 %v3151
    %v3839 = vunpack.c.l.b16 %v3152
    %v3840 = vunpack.c.h.b16 %v3152
    %v3841 = vunpack.c.l.b16 %v3153
    %v3842 = vunpack.c.h.b16 %v3153
    %v3843 = vunpack.c.l.b16 %v3154
    %v3844 = vunpack.c.h.b16 %v3154
    %v3845 = vunpack.c.l.b16 %v3155
    %v3846 = vunpack.c.h.b16 %v3155
    %v3847 = vunpack.c.l.b16 %v3156
    %v3848 = vunpack.c.h.b16 %v3156
    %v3849 = vunpack.c.l.b16 %v3157
    %v3850 = vunpack.c.h.b16 %v3157
    %v3851 = vunpack.c.l.b16 %v3158
    %v3852 = vunpack.c.h.b16 %v3158
    %v3853 = vunpack.c.l.b16 %v3159
    %v3854 = vunpack.c.h.b16 %v3159
    %v3855 = vunpack.c.l.b16 %v3160
    %v3856 = vunpack.c.h.b16 %v3160
    %v3857 = vunpack.c.l.b16 %v3161
    %v3858 = vunpack.c.h.b16 %v3161
    %v3859 = vunpack.c.l.b16 %v3162
    %v3860 = vunpack.c.h.b16 %v3162
    %v3861 = vunpack.c.l.b16 %v3163
    %v3862 = vunpack.c.h.b16 %v3163
    %v3863 = vunpack.c.l.b16 %v3164
    %v3864 = vunpack.c.h.b16 %v3164
    %v3865 = vunpack.c.l.b16 %v3165
    %v3866 = vunpack.c.h.b16 %v3165
    %v3867 = vunpack.c.l.b16 %v3166
    %v3868 = vunpack.c.h.b16 %v3166
    %v3869 = vunpack.c.l.b16 %v3167
    %v3870 = vunpack.c.h.b16 %v3167
    %v3871 = vunpack.c.l.b16 %v3168
    %v3872 = vunpack.c.h.b16 %v3168
    %v3873 = vunpack.c.l.b16 %v3169
    %v3874 = vunpack.c.h.b16 %v3169
    %v3875 = vunpack.c.l.b16 %v3170
    %v3876 = vunpack.c.h.b16 %v3170
    %v3877 = vunpack.c.l.b16 %v3171
    %v3878 = vunpack.c.h.b16 %v3171
    %v3879 = vunpack.c.l.b16 %v3172
    %v3880 = vunpack.c.h.b16 %v3172
    %v3881 = vunpack.c.l.b16 %v3173
    %v3882 = vunpack.c.h.b16 %v3173
    %v3883 = vunpack.c.l.b16 %v3174
    %v3884 = vunpack.c.h.b16 %v3174
    %v3885 = vunpack.c.l.b16 %v3175
    %v3886 = vunpack.c.h.b16 %v3175
    %v3887 = vunpack.c.l.b16 %v3176
    %v3888 = vunpack.c.h.b16 %v3176
    %v3889 = vunpack.c.l.b16 %v3177
    %v3890 = vunpack.c.h.b16 %v3177
    %v3891 = vunpack.c.l.b16 %v3178
    %v3892 = vunpack.c.h.b16 %v3178
    %v3893 = vunpack.c.l.b16 %v3179
    %v3894 = vunpack.c.h.b16 %v3179
    %v3895 = vunpack.c.l.b16 %v3180
    %v3896 = vunpack.c.h.b16 %v3180
    %v3897 = vunpack.c.l.b16 %v3181
    %v3898 = vunpack.c.h.b16 %v3181
    %v3899 = vunpack.c.l.b16 %v3182
    %v3900 = vunpack.c.h.b16 %v3182
    %v3901 = vunpack.c.l.b16 %v3183
    %v3902 = vunpack.c.h.b16 %v3183
    %v3903 = vunpack.c.l.b16 %v3184
    %v3904 = vunpack.c.h.b16 %v3184
    %v3905 = vunpack.c.l.b16 %v3185
    %v3906 = vunpack.c.h.b16 %v3185
    %v3907 = vunpack.c.l.b16 %v3186
    %v3908 = vunpack.c.h.b16 %v3186
    %v3909 = vunpack.c.l.b16 %v3187
    %v3910 = vunpack.c.h.b16 %v3187
    %v3911 = vunpack.c.l.b16 %v3188
    %v3912 = vunpack.c.h.b16 %v3188
    %v3913 = vunpack.c.l.b16 %v3189
    %v3914 = vunpack.c.h.b16 %v3189
    %v3915 = vunpack.c.l.b16 %v3190
    %v3916 = vunpack.c.h.b16 %v3190
    %v3917 = vunpack.c.l.b16 %v3191
    %v3918 = vunpack.c.h.b16 %v3191
    %v3919 = vunpack.c.l.b16 %v3192
    %v3920 = vunpack.c.h.b16 %v3192
    %v3921 = vunpack.c.l.b16 %v3193
    %v3922 = vunpack.c.h.b16 %v3193
    %v3923 = vunpack.c.l.b16 %v3194
    %v3924 = vunpack.c.h.b16 %v3194
    %v3925 = vunpack.c.l.b16 %v3195
    %v3926 = vunpack.c.h.b16 %v3195
    %v3927 = vunpack.c.l.b16 %v3196
    %v3928 = vunpack.c.h.b16 %v3196
    %v3929 = vunpack.c.l.b16 %v3197
    %v3930 = vunpack.c.h.b16 %v3197
    %v3931 = vunpack.c.l.b16 %v3198
    %v3932 = vunpack.c.h.b16 %v3198
    %v3933 = vunpack.c.l.b16 %v3199
    %v3934 = vunpack.c.h.b16 %v3199
    %v3935 = vunpack.c.l.b16 %v3200
    %v3936 = vunpack.c.h.b16 %v3200
    %v3937 = vunpack.c.l.b16 %v3201
    %v3938 = vunpack.c.h.b16 %v3201
    %v3939 = vunpack.c.l.b16 %v3202
    %v3940 = vunpack.c.h.b16 %v3202
    %v3941 = vunpack.c.l.b16 %v3203
    %v3942 = vunpack.c.h.b16 %v3203
    %v3943 = vunpack.c.l.b16 %v3204
    %v3944 = vunpack.c.h.b16 %v3204
    %v3945 = vunpack.c.l.b16 %v3205
    %v3946 = vunpack.c.h.b16 %v3205
    %v3947 = vunpack.c.l.b16 %v3206
    %v3948 = vunpack.c.h.b16 %v3206
    %v3949 = vunpack.c.l.b16 %v3207
    %v3950 = vunpack.c.h.b16 %v3207
    %v3951 = vunpack.c.l.b16 %v3208
    %v3952 = vunpack.c.h.b16 %v3208
    %v3953 = vunpack.c.l.b16 %v3209
    %v3954 = vunpack.c.h.b16 %v3209
    %v3955 = vunpack.c.l.b16 %v3210
    %v3956 = vunpack.c.h.b16 %v3210
    %v3957 = vunpack.c.l.b16 %v3211
    %v3958 = vunpack.c.h.b16 %v3211
    %v3959 = vunpack.c.l.b16 %v3212
    %v3960 = vunpack.c.h.b16 %v3212
    %v3961 = vunpack.c.l.b16 %v3213
    %v3962 = vunpack.c.h.b16 %v3213
    %v3963 = vunpack.c.l.b16 %v3214
    %v3964 = vunpack.c.h.b16 %v3214
    %v3965 = vunpack.c.l.b16 %v3215
    %v3966 = vunpack.c.h.b16 %v3215
    %v3967 = vunpack.c.l.b16 %v3216
    %v3968 = vunpack.c.h.b16 %v3216
    %v3969 = vunpack.c.l.b16 %v3217
    %v3970 = vunpack.c.h.b16 %v3217
    %v3971 = vunpack.c.l.b16 %v3218
    %v3972 = vunpack.c.h.b16 %v3218
    %v3973 = vunpack.c.l.b16 %v3219
    %v3974 = vunpack.c.h.b16 %v3219
    %v3975 = vunpack.c.l.b16 %v3220
    %v3976 = vunpack.c.h.b16 %v3220
    %v3977 = vunpack.c.l.b16 %v3221
    %v3978 = vunpack.c.h.b16 %v3221
    %v3979 = vunpack.c.l.b16 %v3222
    %v3980 = vunpack.c.h.b16 %v3222
    %v3981 = vunpack.c.l.b16 %v3223
    %v3982 = vunpack.c.h.b16 %v3223
    %v3983 = vunpack.c.l.b16 %v3224
    %v3984 = vunpack.c.h.b16 %v3224
    %v3985 = vunpack.c.l.b16 %v3225
    %v3986 = vunpack.c.h.b16 %v3225
    %v3987 = vunpack.c.l.b16 %v3226
    %v3988 = vunpack.c.h.b16 %v3226
    %v3989 = vunpack.c.l.b16 %v3227
    %v3990 = vunpack.c.h.b16 %v3227
    %v3991 = vunpack.c.l.b16 %v3228
    %v3992 = vunpack.c.h.b16 %v3228
    %v3993 = vunpack.c.l.b16 %v3229
    %v3994 = vunpack.c.h.b16 %v3229
    %v3995 = vunpack.c.l.b16 %v3230
    %v3996 = vunpack.c.h.b16 %v3230
    %v3997 = vunpack.c.l.b16 %v3231
    %v3998 = vunpack.c.h.b16 %v3231
    %v3999 = vunpack.c.l.b16 %v3232
    %v4000 = vunpack.c.h.b16 %v3232
    %v4001 = vunpack.c.l.b16 %v3233
    %v4002 = vunpack.c.h.b16 %v3233
    %v4003 = vunpack.c.l.b16 %v3234
    %v4004 = vunpack.c.h.b16 %v3234
    %v4005 = vunpack.c.l.b16 %v3235
    %v4006 = vunpack.c.h.b16 %v3235
    %v4007 = vunpack.c.l.b16 %v3236
    %v4008 = vunpack.c.h.b16 %v3236
    %v4009 = vunpack.c.l.b16 %v3237
    %v4010 = vunpack.c.h.b16 %v3237
    %v4011 = vunpack.c.l.b16 %v3238
    %v4012 = vunpack.c.h.b16 %v3238
    %v4013 = vunpack.c.l.b16 %v3239
    %v4014 = vunpack.c.h.b16 %v3239
    %v4015 = vunpack.c.l.b16 %v3240
    %v4016 = vunpack.c.h.b16 %v3240
    %v4017 = vunpack.c.l.b16 %v3241
    %v4018 = vunpack.c.h.b16 %v3241
    %v4019 = vunpack.c.l.b16 %v3242
    %v4020 = vunpack.c.h.b16 %v3242
    %v4021 = vunpack.c.l.b16 %v3243
    %v4022 = vunpack.c.h.b16 %v3243
    %v4023 = vunpack.c.l.b16 %v3244
    %v4024 = vunpack.c.h.b16 %v3244
    %v4025 = vunpack.c.l.b16 %v3245
    %v4026 = vunpack.c.h.b16 %v3245
    %v4027 = vunpack.c.l.b16 %v3246
    %v4028 = vunpack.c.h.b16 %v3246
    %v4029 = vunpack.c.l.b16 %v3247
    %v4030 = vunpack.c.h.b16 %v3247
    %v4031 = vunpack.c.l.b16 %v3248
    %v4032 = vunpack.c.h.b16 %v3248
    %v4033 = vunpack.c.l.b16 %v3249
    %v4034 = vunpack.c.h.b16 %v3249
    %v4035 = vunpack.c.l.b16 %v3250
    %v4036 = vunpack.c.h.b16 %v3250
    %v4037 = vunpack.c.l.b16 %v3251
    %v4038 = vunpack.c.h.b16 %v3251
    %v4039 = vunpack.c.l.b16 %v3252
    %v4040 = vunpack.c.h.b16 %v3252
    %v4041 = vunpack.c.l.b16 %v3253
    %v4042 = vunpack.c.h.b16 %v3253
    %v4043 = vpack.c.b16 %v3535, %v3531
    %v4044 = vpack.c.b16 %v3536, %v3532
    %v4045 = vpack.c.b16 %v3537, %v3533
    %v4046 = vpack.c.b16 %v3538, %v3534
    %v4047 = vpack.c.b16 %v3543, %v3539
    %v4048 = vpack.c.b16 %v3544, %v3540
    %v4049 = vpack.c.b16 %v3545, %v3541
    %v4050 = vpack.c.b16 %v3546, %v3542
    %v4051 = vpack.c.b16 %v3551, %v3547
    %v4052 = vpack.c.b16 %v3552, %v3548
    %v4053 = vpack.c.b16 %v3553, %v3549
    %v4054 = vpack.c.b16 %v3554, %v3550
    %v4055 = vpack.c.b16 %v3559, %v3555
    %v4056 = vpack.c.b16 %v3560, %v3556
    %v4057 = vpack.c.b16 %v3561, %v3557
    %v4058 = vpack.c.b16 %v3562, %v3558
    %v4059 = vpack.c.b16 %v3567, %v3563
    %v4060 = vpack.c.b16 %v3568, %v3564
    %v4061 = vpack.c.b16 %v3569, %v3565
    %v4062 = vpack.c.b16 %v3570, %v3566
    %v4063 = vpack.c.b16 %v3575, %v3571
    %v4064 = vpack.c.b16 %v3576, %v3572
    %v4065 = vpack.c.b16 %v3577, %v3573
    %v4066 = vpack.c.b16 %v3578, %v3574
    %v4067 = vpack.c.b16 %v3583, %v3579
    %v4068 = vpack.c.b16 %v3584, %v3580
    %v4069 = vpack.c.b16 %v3585, %v3581
    %v4070 = vpack.c.b16 %v3586, %v3582
    %v4071 = vpack.c.b16 %v3591, %v3587
    %v4072 = vpack.c.b16 %v3592, %v3588
    %v4073 = vpack.c.b16 %v3593, %v3589
    %v4074 = vpack.c.b16 %v3594, %v3590
    %v4075 = vpack.c.b16 %v3599, %v3595
    %v4076 = vpack.c.b16 %v3600, %v3596
    %v4077 = vpack.c.b16 %v3601, %v3597
    %v4078 = vpack.c.b16 %v3602, %v3598
    %v4079 = vpack.c.b16 %v3607, %v3603
    %v4080 = vpack.c.b16 %v3608, %v3604
    %v4081 = vpack.c.b16 %v3609, %v3605
    %v4082 = vpack.c.b16 %v3610, %v3606
    %v4083 = vpack.c.b16 %v3615, %v3611
    %v4084 = vpack.c.b16 %v3616, %v3612
    %v4085 = vpack.c.b16 %v3617, %v3613
    %v4086 = vpack.c.b16 %v3618, %v3614
    %v4087 = vpack.c.b16 %v3623, %v3619
    %v4088 = vpack.c.b16 %v3624, %v3620
    %v4089 = vpack.c.b16 %v3625, %v3621
    %v4090 = vpack.c.b16 %v3626, %v3622
    %v4091 = vpack.c.b16 %v3631, %v3627
    %v4092 = vpack.c.b16 %v3632, %v3628
    %v4093 = vpack.c.b16 %v3633, %v3629
    %v4094 = vpack.c.b16 %v3634, %v3630
    %v4095 = vpack.c.b16 %v3639, %v3635
    %v4096 = vpack.c.b16 %v3640, %v3636
    %v4097 = vpack.c.b16 %v3641, %v3637
    %v4098 = vpack.c.b16 %v3642, %v3638
    %v4099 = vpack.c.b16 %v3647, %v3643
    %v4100 = vpack.c.b16 %v3648, %v3644
    %v4101 = vpack.c.b16 %v3649, %v3645
    %v4102 = vpack.c.b16 %v3650, %v3646
    %v4103 = vpack.c.b16 %v3655, %v3651
    %v4104 = vpack.c.b16 %v3656, %v3652
    %v4105 = vpack.c.b16 %v3657, %v3653
    %v4106 = vpack.c.b16 %v3658, %v3654
    %v4107 = vpack.c.b16 %v3663, %v3659
    %v4108 = vpack.c.b16 %v3664, %v3660
    %v4109 = vpack.c.b16 %v3665, %v3661
    %v4110 = vpack.c.b16 %v3666, %v3662
    %v4111 = vpack.c.b16 %v3671, %v3667
    %v4112 = vpack.c.b16 %v3672, %v3668
    %v4113 = vpack.c.b16 %v3673, %v3669
    %v4114 = vpack.c.b16 %v3674, %v3670
    %v4115 = vpack.c.b16 %v3679, %v3675
    %v4116 = vpack.c.b16 %v3680, %v3676
    %v4117 = vpack.c.b16 %v3681, %v3677
    %v4118 = vpack.c.b16 %v3682, %v3678
    %v4119 = vpack.c.b16 %v3687, %v3683
    %v4120 = vpack.c.b16 %v3688, %v3684
    %v4121 = vpack.c.b16 %v3689, %v3685
    %v4122 = vpack.c.b16 %v3690, %v3686
    %v4123 = vpack.c.b16 %v3695, %v3691
    %v4124 = vpack.c.b16 %v3696, %v3692
    %v4125 = vpack.c.b16 %v3697, %v3693
    %v4126 = vpack.c.b16 %v3698, %v3694
    %v4127 = vpack.c.b16 %v3703, %v3699
    %v4128 = vpack.c.b16 %v3704, %v3700
    %v4129 = vpack.c.b16 %v3705, %v3701
    %v4130 = vpack.c.b16 %v3706, %v3702
    %v4131 = vpack.c.b16 %v3711, %v3707
    %v4132 = vpack.c.b16 %v3712, %v3708
    %v4133 = vpack.c.b16 %v3713, %v3709
    %v4134 = vpack.c.b16 %v3714, %v3710
    %v4135 = vpack.c.b16 %v3719, %v3715
    %v4136 = vpack.c.b16 %v3720, %v3716
    %v4137 = vpack.c.b16 %v3721, %v3717
    %v4138 = vpack.c.b16 %v3722, %v3718
    %v4139 = vpack.c.b16 %v3727, %v3723
    %v4140 = vpack.c.b16 %v3728, %v3724
    %v4141 = vpack.c.b16 %v3729, %v3725
    %v4142 = vpack.c.b16 %v3730, %v3726
    %v4143 = vpack.c.b16 %v3735, %v3731
    %v4144 = vpack.c.b16 %v3736, %v3732
    %v4145 = vpack.c.b16 %v3737, %v3733
    %v4146 = vpack.c.b16 %v3738, %v3734
    %v4147 = vpack.c.b16 %v3743, %v3739
    %v4148 = vpack.c.b16 %v3744, %v3740
    %v4149 = vpack.c.b16 %v3745, %v3741
    %v4150 = vpack.c.b16 %v3746, %v3742
    %v4151 = vpack.c.b16 %v3751, %v3747
    %v4152 = vpack.c.b16 %v3752, %v3748
    %v4153 = vpack.c.b16 %v3753, %v3749
    %v4154 = vpack.c.b16 %v3754, %v3750
    %v4155 = vpack.c.b16 %v3759, %v3755
    %v4156 = vpack.c.b16 %v3760, %v3756
    %v4157 = vpack.c.b16 %v3761, %v3757
    %v4158 = vpack.c.b16 %v3762, %v3758
    %v4159 = vpack.c.b16 %v3767, %v3763
    %v4160 = vpack.c.b16 %v3768, %v3764
    %v4161 = vpack.c.b16 %v3769, %v3765
    %v4162 = vpack.c.b16 %v3770, %v3766
    %v4163 = vpack.c.b16 %v3775, %v3771
    %v4164 = vpack.c.b16 %v3776, %v3772
    %v4165 = vpack.c.b16 %v3777, %v3773
    %v4166 = vpack.c.b16 %v3778, %v3774
    %v4167 = vpack.c.b16 %v3783, %v3779
    %v4168 = vpack.c.b16 %v3784, %v3780
    %v4169 = vpack.c.b16 %v3785, %v3781
    %v4170 = vpack.c.b16 %v3786, %v3782
    %v4171 = vpack.c.b16 %v3791, %v3787
    %v4172 = vpack.c.b16 %v3792, %v3788
    %v4173 = vpack.c.b16 %v3793, %v3789
    %v4174 = vpack.c.b16 %v3794, %v3790
    %v4175 = vpack.c.b16 %v3799, %v3795
    %v4176 = vpack.c.b16 %v3800, %v3796
    %v4177 = vpack.c.b16 %v3801, %v3797
    %v4178 = vpack.c.b16 %v3802, %v3798
    %v4179 = vpack.c.b16 %v3807, %v3803
    %v4180 = vpack.c.b16 %v3808, %v3804
    %v4181 = vpack.c.b16 %v3809, %v3805
    %v4182 = vpack.c.b16 %v3810, %v3806
    %v4183 = vpack.c.b16 %v3815, %v3811
    %v4184 = vpack.c.b16 %v3816, %v3812
    %v4185 = vpack.c.b16 %v3817, %v3813
    %v4186 = vpack.c.b16 %v3818, %v3814
    %v4187 = vpack.c.b16 %v3823, %v3819
    %v4188 = vpack.c.b16 %v3824, %v3820
    %v4189 = vpack.c.b16 %v3825, %v3821
    %v4190 = vpack.c.b16 %v3826, %v3822
    %v4191 = vpack.c.b16 %v3831, %v3827
    %v4192 = vpack.c.b16 %v3832, %v3828
    %v4193 = vpack.c.b16 %v3833, %v3829
    %v4194 = vpack.c.b16 %v3834, %v3830
    %v4195 = vpack.c.b16 %v3839, %v3835
    %v4196 = vpack.c.b16 %v3840, %v3836
    %v4197 = vpack.c.b16 %v3841, %v3837
    %v4198 = vpack.c.b16 %v3842, %v3838
    %v4199 = vpack.c.b16 %v3847, %v3843
    %v4200 = vpack.c.b16 %v3848, %v3844
    %v4201 = vpack.c.b16 %v3849, %v3845
    %v4202 = vpack.c.b16 %v3850, %v3846
    %v4203 = vpack.c.b16 %v3855, %v3851
    %v4204 = vpack.c.b16 %v3856, %v3852
    %v4205 = vpack.c.b16 %v3857, %v3853
    %v4206 = vpack.c.b16 %v3858, %v3854
    %v4207 = vpack.c.b16 %v3863, %v3859
    %v4208 = vpack.c.b16 %v3864, %v3860
    %v4209 = vpack.c.b16 %v3865, %v3861
    %v4210 = vpack.c.b16 %v3866, %v3862
    %v4211 = vpack.c.b16 %v3871, %v3867
    %v4212 = vpack.c.b16 %v3872, %v3868
    %v4213 = vpack.c.b16 %v3873, %v3869
    %v4214 = vpack.c.b16 %v3874, %v3870
    %v4215 = vpack.c.b16 %v3879, %v3875
    %v4216 = vpack.c.b16 %v3880, %v3876
    %v4217 = vpack.c.b16 %v3881, %v3877
    %v4218 = vpack.c.b16 %v3882, %v3878
    %v4219 = vpack.c.b16 %v3887, %v3883
    %v4220 = vpack.c.b16 %v3888, %v3884
    %v4221 = vpack.c.b16 %v3889, %v3885
    %v4222 = vpack.c.b16 %v3890, %v3886
    %v4223 = vpack.c.b16 %v3895, %v3891
    %v4224 = vpack.c.b16 %v3896, %v3892
    %v4225 = vpack.c.b16 %v3897, %v3893
    %v4226 = vpack.c.b16 %v3898, %v3894
    %v4227 = vpack.c.b16 %v3903, %v3899
    %v4228 = vpack.c.b16 %v3904, %v3900
    %v4229 = vpack.c.b16 %v3905, %v3901
    %v4230 = vpack.c.b16 %v3906, %v3902
    %v4231 = vpack.c.b16 %v3911, %v3907
    %v4232 = vpack.c.b16 %v3912, %v3908
    %v4233 = vpack.c.b16 %v3913, %v3909
    %v4234 = vpack.c.b16 %v3914, %v3910
    %v4235 = vpack.c.b16 %v3919, %v3915
    %v4236 = vpack.c.b16 %v3920, %v3916
    %v4237 = vpack.c.b16 %v3921, %v3917
    %v4238 = vpack.c.b16 %v3922, %v3918
    %v4239 = vpack.c.b16 %v3927, %v3923
    %v4240 = vpack.c.b16 %v3928, %v3924
    %v4241 = vpack.c.b16 %v3929, %v3925
    %v4242 = vpack.c.b16 %v3930, %v3926
    %v4243 = vpack.c.b16 %v3935, %v3931
    %v4244 = vpack.c.b16 %v3936, %v3932
    %v4245 = vpack.c.b16 %v3937, %v3933
    %v4246 = vpack.c.b16 %v3938, %v3934
    %v4247 = vpack.c.b16 %v3943, %v3939
    %v4248 = vpack.c.b16 %v3944, %v3940
    %v4249 = vpack.c.b16 %v3945, %v3941
    %v4250 = vpack.c.b16 %v3946, %v3942
    %v4251 = vpack.c.b16 %v3951, %v3947
    %v4252 = vpack.c.b16 %v3952, %v3948
    %v4253 = vpack.c.b16 %v3953, %v3949
    %v4254 = vpack.c.b16 %v3954, %v3950
    %v4255 = vpack.c.b16 %v3959, %v3955
    %v4256 = vpack.c.b16 %v3960, %v3956
    %v4257 = vpack.c.b16 %v3961, %v3957
    %v4258 = vpack.c.b16 %v3962, %v3958
    %v4259 = vpack.c.b16 %v3967, %v3963
    %v4260 = vpack.c.b16 %v3968, %v3964
    %v4261 = vpack.c.b16 %v3969, %v3965
    %v4262 = vpack.c.b16 %v3970, %v3966
    %v4263 = vpack.c.b16 %v3975, %v3971
    %v4264 = vpack.c.b16 %v3976, %v3972
    %v4265 = vpack.c.b16 %v3977, %v3973
    %v4266 = vpack.c.b16 %v3978, %v3974
    %v4267 = vpack.c.b16 %v3983, %v3979
    %v4268 = vpack.c.b16 %v3984, %v3980
    %v4269 = vpack.c.b16 %v3985, %v3981
    %v4270 = vpack.c.b16 %v3986, %v3982
    %v4271 = vpack.c.b16 %v3991, %v3987
    %v4272 = vpack.c.b16 %v3992, %v3988
    %v4273 = vpack.c.b16 %v3993, %v3989
    %v4274 = vpack.c.b16 %v3994, %v3990
    %v4275 = vpack.c.b16 %v3999, %v3995
    %v4276 = vpack.c.b16 %v4000, %v3996
    %v4277 = vpack.c.b16 %v4001, %v3997
    %v4278 = vpack.c.b16 %v4002, %v3998
    %v4279 = vpack.c.b16 %v4007, %v4003
    %v4280 = vpack.c.b16 %v4008, %v4004
    %v4281 = vpack.c.b16 %v4009, %v4005
    %v4282 = vpack.c.b16 %v4010, %v4006
    %v4283 = vpack.c.b16 %v4015, %v4011
    %v4284 = vpack.c.b16 %v4016, %v4012
    %v4285 = vpack.c.b16 %v4017, %v4013
    %v4286 = vpack.c.b16 %v4018, %v4014
    %v4287 = vpack.c.b16 %v4023, %v4019
    %v4288 = vpack.c.b16 %v4024, %v4020
    %v4289 = vpack.c.b16 %v4025, %v4021
    %v4290 = vpack.c.b16 %v4026, %v4022
    %v4291 = vpack.c.b16 %v4031, %v4027
    %v4292 = vpack.c.b16 %v4032, %v4028
    %v4293 = vpack.c.b16 %v4033, %v4029
    %v4294 = vpack.c.b16 %v4034, %v4030
    %v4295 = vpack.c.b16 %v4039, %v4035
    %v4296 = vpack.c.b16 %v4040, %v4036
    %v4297 = vpack.c.b16 %v4041, %v4037
    %v4298 = vpack.c.b16 %v4042, %v4038
    %4555 = vmatprep.subr.bf16.mxu0 %v4072
    %4556 = vmatpush1.bf16.msra.mxu0 %v4071
    %4557 = vmatprep.subr.bf16.mxu0 %v4068
    %4558 = vmatpush1.bf16.msra.mxu0 %v4067
    %4559 = vmatprep.subr.bf16.mxu0 %v4064
    %4560 = vmatpush1.bf16.msra.mxu0 %v4063
    %4561 = vmatprep.subr.bf16.mxu0 %v4060
    %4562 = vmatpush1.bf16.msra.mxu0 %v4059
    %4563 = vmatprep.subr.bf16.mxu0 %v4056
    %4564 = vmatpush1.bf16.msra.mxu0 %v4055
    %4565 = vmatprep.subr.bf16.mxu0 %v4052
    %4566 = vmatpush1.bf16.msra.mxu0 %v4051
    %4567 = vmatprep.subr.bf16.mxu0 %v4048
    %4568 = vmatpush1.bf16.msra.mxu0 %v4047
    %4569 = vmatprep.subr.bf16.mxu0 %v4044
    %4570 = vmatpush1.bf16.msra.mxu0 %v4043
    %4571 = vmatprep.subr.bf16.mxu0 %v4104
    %4572 = vmatpush2.bf16.msra.mxu0 %v4103
    %4573 = vmatprep.subr.bf16.mxu0 %v4100
    %4574 = vmatpush2.bf16.msra.mxu0 %v4099
    %4575 = vmatprep.subr.bf16.mxu0 %v4096
    %4576 = vmatpush2.bf16.msra.mxu0 %v4095
    %4577 = vmatprep.subr.bf16.mxu0 %v4092
    %4578 = vmatpush2.bf16.msra.mxu0 %v4091
    %4579 = vmatprep.subr.bf16.mxu0 %v4088
    %4580 = vmatpush2.bf16.msra.mxu0 %v4087
    %4581 = vmatprep.subr.bf16.mxu0 %v4084
    %4582 = vmatpush2.bf16.msra.mxu0 %v4083
    %4583 = vmatprep.subr.bf16.mxu0 %v4080
    %4584 = vmatpush2.bf16.msra.mxu0 %v4079
    %4585 = vmatprep.subr.bf16.mxu0 %v4076
    %4586 = vmatpush2.bf16.msra.mxu0 %v4075
    %4587 = vmatprep.mubr.bf16.mxu0 %v2991
    %4588 = vmatmul.mubr.bf16.gmra.mxu0 %v2990
    %v4589 = vpop.f32.mrf.mxu0
    %v4590 = vadd.f32 %v3258, %v4589
    %v4591 = vpop.f32.mrf.mxu0
    %v4592 = vadd.f32 %v3262, %v4591
    %v4593 = vpop.f32.mrf.mxu0
    %v4594 = vadd.f32 %v3258, %v4593
    %v4595 = vpop.f32.mrf.mxu0
    %v4596 = vadd.f32 %v3262, %v4595
    %4597 = vdwg.mxu0
    %4598 = vmatprep.subr.bf16.mxu0 %v4136
    %4599 = vmatpush1.bf16.msra.mxu0 %v4135
    %4600 = vmatprep.subr.bf16.mxu0 %v4132
    %4601 = vmatpush1.bf16.msra.mxu0 %v4131
    %4602 = vmatprep.subr.bf16.mxu0 %v4128
    %4603 = vmatpush1.bf16.msra.mxu0 %v4127
    %4604 = vmatprep.subr.bf16.mxu0 %v4124
    %4605 = vmatpush1.bf16.msra.mxu0 %v4123
    %4606 = vmatprep.subr.bf16.mxu0 %v4120
    %4607 = vmatpush1.bf16.msra.mxu0 %v4119
    %4608 = vmatprep.subr.bf16.mxu0 %v4116
    %4609 = vmatpush1.bf16.msra.mxu0 %v4115
    %4610 = vmatprep.subr.bf16.mxu0 %v4112
    %4611 = vmatpush1.bf16.msra.mxu0 %v4111
    %4612 = vmatprep.subr.bf16.mxu0 %v4108
    %4613 = vmatpush1.bf16.msra.mxu0 %v4107
    %4614 = vmatprep.subr.bf16.mxu0 %v4168
    %4615 = vmatpush2.bf16.msra.mxu0 %v4167
    %4616 = vmatprep.subr.bf16.mxu0 %v4164
    %4617 = vmatpush2.bf16.msra.mxu0 %v4163
    %4618 = vmatprep.subr.bf16.mxu0 %v4160
    %4619 = vmatpush2.bf16.msra.mxu0 %v4159
    %4620 = vmatprep.subr.bf16.mxu0 %v4156
    %4621 = vmatpush2.bf16.msra.mxu0 %v4155
    %4622 = vmatprep.subr.bf16.mxu0 %v4152
    %4623 = vmatpush2.bf16.msra.mxu0 %v4151
    %4624 = vmatprep.subr.bf16.mxu0 %v4148
    %4625 = vmatpush2.bf16.msra.mxu0 %v4147
    %4626 = vmatprep.subr.bf16.mxu0 %v4144
    %4627 = vmatpush2.bf16.msra.mxu0 %v4143
    %4628 = vmatprep.subr.bf16.mxu0 %v4140
    %4629 = vmatpush2.bf16.msra.mxu0 %v4139
    %4630 = vmatprep.mubr.bf16.mxu0 %v2993
    %4631 = vmatmul.mubr.bf16.gmra.mxu0 %v2992
    %v4632 = vpop.f32.mrf.mxu0
    %v4633 = vadd.f32 %v4590, %v4632
    %v4634 = vpop.f32.mrf.mxu0
    %v4635 = vadd.f32 %v4592, %v4634
    %v4636 = vpop.f32.mrf.mxu0
    %v4637 = vadd.f32 %v4594, %v4636
    %v4638 = vpop.f32.mrf.mxu0
    %v4639 = vadd.f32 %v4596, %v4638
    %4640 = vdwg.mxu0
    %4641 = vmatprep.subr.bf16.mxu0 %v4200
    %4642 = vmatpush1.bf16.msra.mxu0 %v4199
    %4643 = vmatprep.subr.bf16.mxu0 %v4196
    %4644 = vmatpush1.bf16.msra.mxu0 %v4195
    %4645 = vmatprep.subr.bf16.mxu0 %v4192
    %4646 = vmatpush1.bf16.msra.mxu0 %v4191
    %4647 = vmatprep.subr.bf16.mxu0 %v4188
    %4648 = vmatpush1.bf16.msra.mxu0 %v4187
    %4649 = vmatprep.subr.bf16.mxu0 %v4184
    %4650 = vmatpush1.bf16.msra.mxu0 %v4183
    %4651 = vmatprep.subr.bf16.mxu0 %v4180
    %4652 = vmatpush1.bf16.msra.mxu0 %v4179
    %4653 = vmatprep.subr.bf16.mxu0 %v4176
    %4654 = vmatpush1.bf16.msra.mxu0 %v4175
    %4655 = vmatprep.subr.bf16.mxu0 %v4172
    %4656 = vmatpush1.bf16.msra.mxu0 %v4171
    %4657 = vmatprep.subr.bf16.mxu0 %v4232
    %4658 = vmatpush2.bf16.msra.mxu0 %v4231
    %4659 = vmatprep.subr.bf16.mxu0 %v4228
    %4660 = vmatpush2.bf16.msra.mxu0 %v4227
    %4661 = vmatprep.subr.bf16.mxu0 %v4224
    %4662 = vmatpush2.bf16.msra.mxu0 %v4223
    %4663 = vmatprep.subr.bf16.mxu0 %v4220
    %4664 = vmatpush2.bf16.msra.mxu0 %v4219
    %4665 = vmatprep.subr.bf16.mxu0 %v4216
    %4666 = vmatpush2.bf16.msra.mxu0 %v4215
    %4667 = vmatprep.subr.bf16.mxu0 %v4212
    %4668 = vmatpush2.bf16.msra.mxu0 %v4211
    %4669 = vmatprep.subr.bf16.mxu0 %v4208
    %4670 = vmatpush2.bf16.msra.mxu0 %v4207
    %4671 = vmatprep.subr.bf16.mxu0 %v4204
    %4672 = vmatpush2.bf16.msra.mxu0 %v4203
    %4673 = vmatprep.mubr.bf16.mxu0 %v2995
    %4674 = vmatmul.mubr.bf16.gmra.mxu0 %v2994
    %v4675 = vpop.f32.mrf.mxu0
    %v4676 = vadd.f32 %v4633, %v4675
    %v4677 = vpop.f32.mrf.mxu0
    %v4678 = vadd.f32 %v4635, %v4677
    %v4679 = vpop.f32.mrf.mxu0
    %v4680 = vadd.f32 %v4637, %v4679
    %v4681 = vpop.f32.mrf.mxu0
    %v4682 = vadd.f32 %v4639, %v4681
    %4683 = vdwg.mxu0
    %4684 = vmatprep.subr.bf16.mxu0 %v4264
    %4685 = vmatpush1.bf16.msra.mxu0 %v4263
    %4686 = vmatprep.subr.bf16.mxu0 %v4260
    %4687 = vmatpush1.bf16.msra.mxu0 %v4259
    %4688 = vmatprep.subr.bf16.mxu0 %v4256
    %4689 = vmatpush1.bf16.msra.mxu0 %v4255
    %4690 = vmatprep.subr.bf16.mxu0 %v4252
    %4691 = vmatpush1.bf16.msra.mxu0 %v4251
    %4692 = vmatprep.subr.bf16.mxu0 %v4248
    %4693 = vmatpush1.bf16.msra.mxu0 %v4247
    %4694 = vmatprep.subr.bf16.mxu0 %v4244
    %4695 = vmatpush1.bf16.msra.mxu0 %v4243
    %4696 = vmatprep.subr.bf16.mxu0 %v4240
    %4697 = vmatpush1.bf16.msra.mxu0 %v4239
    %4698 = vmatprep.subr.bf16.mxu0 %v4236
    %4699 = vmatpush1.bf16.msra.mxu0 %v4235
    %4700 = vmatprep.subr.bf16.mxu0 %v4296
    %4701 = vmatpush2.bf16.msra.mxu0 %v4295
    %4702 = vmatprep.subr.bf16.mxu0 %v4292
    %4703 = vmatpush2.bf16.msra.mxu0 %v4291
    %4704 = vmatprep.subr.bf16.mxu0 %v4288
    %4705 = vmatpush2.bf16.msra.mxu0 %v4287
    %4706 = vmatprep.subr.bf16.mxu0 %v4284
    %4707 = vmatpush2.bf16.msra.mxu0 %v4283
    %4708 = vmatprep.subr.bf16.mxu0 %v4280
    %4709 = vmatpush2.bf16.msra.mxu0 %v4279
    %4710 = vmatprep.subr.bf16.mxu0 %v4276
    %4711 = vmatpush2.bf16.msra.mxu0 %v4275
    %4712 = vmatprep.subr.bf16.mxu0 %v4272
    %4713 = vmatpush2.bf16.msra.mxu0 %v4271
    %4714 = vmatprep.subr.bf16.mxu0 %v4268
    %4715 = vmatpush2.bf16.msra.mxu0 %v4267
    %4716 = vmatprep.mubr.bf16.mxu0 %v2997
    %4717 = vmatmul.mubr.bf16.gmra.mxu0 %v2996
    %v4718 = vpop.f32.mrf.mxu0
    %v4719 = vadd.f32 %v4676, %v4718
    %v4720 = vpop.f32.mrf.mxu0
    %v4721 = vadd.f32 %v4678, %v4720
    %v4722 = vpop.f32.mrf.mxu0
    %v4723 = vadd.f32 %v4680, %v4722
    %v4724 = vpop.f32.mrf.mxu0
    %v4725 = vadd.f32 %v4682, %v4724
    %4726 = vdwg.mxu0
    %4727 = vmatprep.subr.bf16.mxu0 %v4074
    %4728 = vmatpush1.bf16.msra.mxu0 %v4073
    %4729 = vmatprep.subr.bf16.mxu0 %v4070
    %4730 = vmatpush1.bf16.msra.mxu0 %v4069
    %4731 = vmatprep.subr.bf16.mxu0 %v4066
    %4732 = vmatpush1.bf16.msra.mxu0 %v4065
    %4733 = vmatprep.subr.bf16.mxu0 %v4062
    %4734 = vmatpush1.bf16.msra.mxu0 %v4061
    %4735 = vmatprep.subr.bf16.mxu0 %v4058
    %4736 = vmatpush1.bf16.msra.mxu0 %v4057
    %4737 = vmatprep.subr.bf16.mxu0 %v4054
    %4738 = vmatpush1.bf16.msra.mxu0 %v4053
    %4739 = vmatprep.subr.bf16.mxu0 %v4050
    %4740 = vmatpush1.bf16.msra.mxu0 %v4049
    %4741 = vmatprep.subr.bf16.mxu0 %v4046
    %4742 = vmatpush1.bf16.msra.mxu0 %v4045
    %4743 = vmatprep.subr.bf16.mxu0 %v4106
    %4744 = vmatpush2.bf16.msra.mxu0 %v4105
    %4745 = vmatprep.subr.bf16.mxu0 %v4102
    %4746 = vmatpush2.bf16.msra.mxu0 %v4101
    %4747 = vmatprep.subr.bf16.mxu0 %v4098
    %4748 = vmatpush2.bf16.msra.mxu0 %v4097
    %4749 = vmatprep.subr.bf16.mxu0 %v4094
    %4750 = vmatpush2.bf16.msra.mxu0 %v4093
    %4751 = vmatprep.subr.bf16.mxu0 %v4090
    %4752 = vmatpush2.bf16.msra.mxu0 %v4089
    %4753 = vmatprep.subr.bf16.mxu0 %v4086
    %4754 = vmatpush2.bf16.msra.mxu0 %v4085
    %4755 = vmatprep.subr.bf16.mxu0 %v4082
    %4756 = vmatpush2.bf16.msra.mxu0 %v4081
    %4757 = vmatprep.subr.bf16.mxu0 %v4078
    %4758 = vmatpush2.bf16.msra.mxu0 %v4077
    %4759 = vmatprep.mubr.bf16.mxu0 %v2991
    %4760 = vmatmul.mubr.bf16.gmra.mxu0 %v2990
    %v4761 = vpop.f32.mrf.mxu0
    %v4762 = vadd.f32 %v3266, %v4761
    %v4763 = vpop.f32.mrf.mxu0
    %v4764 = vadd.f32 %v3270, %v4763
    %v4765 = vpop.f32.mrf.mxu0
    %v4766 = vadd.f32 %v3266, %v4765
    %v4767 = vpop.f32.mrf.mxu0
    %v4768 = vadd.f32 %v3270, %v4767
    %4769 = vdwg.mxu0
    %4770 = vmatprep.subr.bf16.mxu0 %v4138
    %4771 = vmatpush1.bf16.msra.mxu0 %v4137
    %4772 = vmatprep.subr.bf16.mxu0 %v4134
    %4773 = vmatpush1.bf16.msra.mxu0 %v4133
    %4774 = vmatprep.subr.bf16.mxu0 %v4130
    %4775 = vmatpush1.bf16.msra.mxu0 %v4129
    %4776 = vmatprep.subr.bf16.mxu0 %v4126
    %4777 = vmatpush1.bf16.msra.mxu0 %v4125
    %4778 = vmatprep.subr.bf16.mxu0 %v4122
    %4779 = vmatpush1.bf16.msra.mxu0 %v4121
    %4780 = vmatprep.subr.bf16.mxu0 %v4118
    %4781 = vmatpush1.bf16.msra.mxu0 %v4117
    %4782 = vmatprep.subr.bf16.mxu0 %v4114
    %4783 = vmatpush1.bf16.msra.mxu0 %v4113
    %4784 = vmatprep.subr.bf16.mxu0 %v4110
    %4785 = vmatpush1.bf16.msra.mxu0 %v4109
    %4786 = vmatprep.subr.bf16.mxu0 %v4170
    %4787 = vmatpush2.bf16.msra.mxu0 %v4169
    %4788 = vmatprep.subr.bf16.mxu0 %v4166
    %4789 = vmatpush2.bf16.msra.mxu0 %v4165
    %4790 = vmatprep.subr.bf16.mxu0 %v4162
    %4791 = vmatpush2.bf16.msra.mxu0 %v4161
    %4792 = vmatprep.subr.bf16.mxu0 %v4158
    %4793 = vmatpush2.bf16.msra.mxu0 %v4157
    %4794 = vmatprep.subr.bf16.mxu0 %v4154
    %4795 = vmatpush2.bf16.msra.mxu0 %v4153
    %4796 = vmatprep.subr.bf16.mxu0 %v4150
    %4797 = vmatpush2.bf16.msra.mxu0 %v4149
    %4798 = vmatprep.subr.bf16.mxu0 %v4146
    %4799 = vmatpush2.bf16.msra.mxu0 %v4145
    %4800 = vmatprep.subr.bf16.mxu0 %v4142
    %4801 = vmatpush2.bf16.msra.mxu0 %v4141
    %4802 = vmatprep.mubr.bf16.mxu0 %v2993
    %4803 = vmatmul.mubr.bf16.gmra.mxu0 %v2992
    %v4804 = vpop.f32.mrf.mxu0
    %v4805 = vadd.f32 %v4762, %v4804
    %v4806 = vpop.f32.mrf.mxu0
    %v4807 = vadd.f32 %v4764, %v4806
    %v4808 = vpop.f32.mrf.mxu0
    %v4809 = vadd.f32 %v4766, %v4808
    %v4810 = vpop.f32.mrf.mxu0
    %v4811 = vadd.f32 %v4768, %v4810
    %4812 = vdwg.mxu0
    %4813 = vmatprep.subr.bf16.mxu0 %v4202
    %4814 = vmatpush1.bf16.msra.mxu0 %v4201
    %4815 = vmatprep.subr.bf16.mxu0 %v4198
    %4816 = vmatpush1.bf16.msra.mxu0 %v4197
    %4817 = vmatprep.subr.bf16.mxu0 %v4194
    %4818 = vmatpush1.bf16.msra.mxu0 %v4193
    %4819 = vmatprep.subr.bf16.mxu0 %v4190
    %4820 = vmatpush1.bf16.msra.mxu0 %v4189
    %4821 = vmatprep.subr.bf16.mxu0 %v4186
    %4822 = vmatpush1.bf16.msra.mxu0 %v4185
    %4823 = vmatprep.subr.bf16.mxu0 %v4182
    %4824 = vmatpush1.bf16.msra.mxu0 %v4181
    %4825 = vmatprep.subr.bf16.mxu0 %v4178
    %4826 = vmatpush1.bf16.msra.mxu0 %v4177
    %4827 = vmatprep.subr.bf16.mxu0 %v4174
    %4828 = vmatpush1.bf16.msra.mxu0 %v4173
    %4829 = vmatprep.subr.bf16.mxu0 %v4234
    %4830 = vmatpush2.bf16.msra.mxu0 %v4233
    %4831 = vmatprep.subr.bf16.mxu0 %v4230
    %4832 = vmatpush2.bf16.msra.mxu0 %v4229
    %4833 = vmatprep.subr.bf16.mxu0 %v4226
    %4834 = vmatpush2.bf16.msra.mxu0 %v4225
    %4835 = vmatprep.subr.bf16.mxu0 %v4222
    %4836 = vmatpush2.bf16.msra.mxu0 %v4221
    %4837 = vmatprep.subr.bf16.mxu0 %v4218
    %4838 = vmatpush2.bf16.msra.mxu0 %v4217
    %4839 = vmatprep.subr.bf16.mxu0 %v4214
    %4840 = vmatpush2.bf16.msra.mxu0 %v4213
    %4841 = vmatprep.subr.bf16.mxu0 %v4210
    %4842 = vmatpush2.bf16.msra.mxu0 %v4209
    %4843 = vmatprep.subr.bf16.mxu0 %v4206
    %4844 = vmatpush2.bf16.msra.mxu0 %v4205
    %4845 = vmatprep.mubr.bf16.mxu0 %v2995
    %4846 = vmatmul.mubr.bf16.gmra.mxu0 %v2994
    %v4847 = vpop.f32.mrf.mxu0
    %v4848 = vadd.f32 %v4805, %v4847
    %v4849 = vpop.f32.mrf.mxu0
    %v4850 = vadd.f32 %v4807, %v4849
    %v4851 = vpop.f32.mrf.mxu0
    %v4852 = vadd.f32 %v4809, %v4851
    %v4853 = vpop.f32.mrf.mxu0
    %v4854 = vadd.f32 %v4811, %v4853
    %4855 = vdwg.mxu0
    %4856 = vmatprep.subr.bf16.mxu0 %v4266
    %4857 = vmatpush1.bf16.msra.mxu0 %v4265
    %4858 = vmatprep.subr.bf16.mxu0 %v4262
    %4859 = vmatpush1.bf16.msra.mxu0 %v4261
    %4860 = vmatprep.subr.bf16.mxu0 %v4258
    %4861 = vmatpush1.bf16.msra.mxu0 %v4257
    %4862 = vmatprep.subr.bf16.mxu0 %v4254
    %4863 = vmatpush1.bf16.msra.mxu0 %v4253
    %4864 = vmatprep.subr.bf16.mxu0 %v4250
    %4865 = vmatpush1.bf16.msra.mxu0 %v4249
    %4866 = vmatprep.subr.bf16.mxu0 %v4246
    %4867 = vmatpush1.bf16.msra.mxu0 %v4245
    %4868 = vmatprep.subr.bf16.mxu0 %v4242
    %4869 = vmatpush1.bf16.msra.mxu0 %v4241
    %4870 = vmatprep.subr.bf16.mxu0 %v4238
    %4871 = vmatpush1.bf16.msra.mxu0 %v4237
    %4872 = vmatprep.subr.bf16.mxu0 %v4298
    %4873 = vmatpush2.bf16.msra.mxu0 %v4297
    %4874 = vmatprep.subr.bf16.mxu0 %v4294
    %4875 = vmatpush2.bf16.msra.mxu0 %v4293
    %4876 = vmatprep.subr.bf16.mxu0 %v4290
    %4877 = vmatpush2.bf16.msra.mxu0 %v4289
    %4878 = vmatprep.subr.bf16.mxu0 %v4286
    %4879 = vmatpush2.bf16.msra.mxu0 %v4285
    %4880 = vmatprep.subr.bf16.mxu0 %v4282
    %4881 = vmatpush2.bf16.msra.mxu0 %v4281
    %4882 = vmatprep.subr.bf16.mxu0 %v4278
    %4883 = vmatpush2.bf16.msra.mxu0 %v4277
    %4884 = vmatprep.subr.bf16.mxu0 %v4274
    %4885 = vmatpush2.bf16.msra.mxu0 %v4273
    %4886 = vmatprep.subr.bf16.mxu0 %v4270
    %4887 = vmatpush2.bf16.msra.mxu0 %v4269
    %4888 = vmatprep.mubr.bf16.mxu0 %v2997
    %4889 = vmatmul.mubr.bf16.gmra.mxu0 %v2996
    %v4890 = vpop.f32.mrf.mxu0
    %v4891 = vadd.f32 %v4848, %v4890
    %v4892 = vpop.f32.mrf.mxu0
    %v4893 = vadd.f32 %v4850, %v4892
    %v4894 = vpop.f32.mrf.mxu0
    %v4895 = vadd.f32 %v4852, %v4894
    %v4896 = vpop.f32.mrf.mxu0
    %v4897 = vadd.f32 %v4854, %v4896
    %4898 = vdwg.mxu0
    %v4899 = vmax.f32 %v4719, 0.0
    %v4900 = vmax.f32 %v4721, 0.0
    %v4901 = vmax.f32 %v4891, 0.0
    %v4902 = vmax.f32 %v4893, 0.0
    %v4903 = vmax.f32 %v4723, 0.0
    %v4904 = vmax.f32 %v4725, 0.0
    %v4905 = vmax.f32 %v4895, 0.0
    %v4906 = vmax.f32 %v4897, 0.0
    %v4907 = vpack.c.bf16 %v4903, %v4899
    %v4908 = vpack.c.bf16 %v4904, %v4900
    %v4909 = vpack.c.bf16 %v4905, %v4901
    %v4910 = vpack.c.bf16 %v4906, %v4902
    %v4911 = vld [vmem:[#allocation6] sm:$0xf]
    %v4912 = vld [vmem:[#allocation6 + $0x4] sm:$0xf]
    %v4913 = vld [vmem:[#allocation6 + $0x8] sm:$0xf]
    %v4914 = vld [vmem:[#allocation6 + $0xc] sm:$0xf]
    %v4915 = vld [vmem:[#allocation6 + $0x10] sm:$0xf]
    %v4916 = vld [vmem:[#allocation6 + $0x14] sm:$0xf]
    %v4917 = vld [vmem:[#allocation6 + $0x18] sm:$0xf]
    %v4918 = vld [vmem:[#allocation6 + $0x1c] sm:$0xf]
    %v4919 = vld [vmem:[#allocation6 + $0x20] sm:$0xf]
    %v4920 = vld [vmem:[#allocation6 + $0x24] sm:$0xf]
    %v4921 = vld [vmem:[#allocation6 + $0x28] sm:$0xf]
    %v4922 = vld [vmem:[#allocation6 + $0x2c] sm:$0xf]
    %v4923 = vld [vmem:[#allocation6 + $0x30] sm:$0xf]
    %v4924 = vld [vmem:[#allocation6 + $0x34] sm:$0xf]
    %v4925 = vld [vmem:[#allocation6 + $0x38] sm:$0xf]
    %v4926 = vld [vmem:[#allocation6 + $0x3c] sm:$0xf]
    %v4927 = vld [vmem:[#allocation6 + $0x40] sm:$0xf]
    %v4928 = vld [vmem:[#allocation6 + $0x44] sm:$0xf]
    %v4929 = vld [vmem:[#allocation6 + $0x48] sm:$0xf]
    %v4930 = vld [vmem:[#allocation6 + $0x4c] sm:$0xf]
    %v4931 = vld [vmem:[#allocation6 + $0x50] sm:$0xf]
    %v4932 = vld [vmem:[#allocation6 + $0x54] sm:$0xf]
    %v4933 = vld [vmem:[#allocation6 + $0x58] sm:$0xf]
    %v4934 = vld [vmem:[#allocation6 + $0x5c] sm:$0xf]
    %v4935 = vld [vmem:[#allocation6 + $0x60] sm:$0xf]
    %v4936 = vld [vmem:[#allocation6 + $0x64] sm:$0xf]
    %v4937 = vld [vmem:[#allocation6 + $0x68] sm:$0xf]
    %v4938 = vld [vmem:[#allocation6 + $0x6c] sm:$0xf]
    %v4939 = vld [vmem:[#allocation6 + $0x70] sm:$0xf]
    %v4940 = vld [vmem:[#allocation6 + $0x74] sm:$0xf]
    %v4941 = vld [vmem:[#allocation6 + $0x78] sm:$0xf]
    %v4942 = vld [vmem:[#allocation6 + $0x7c] sm:$0xf]
    %v4943 = vld [vmem:[#allocation6 + $0x80] sm:$0xf]
    %v4944 = vld [vmem:[#allocation6 + $0x84] sm:$0xf]
    %v4945 = vld [vmem:[#allocation6 + $0x88] sm:$0xf]
    %v4946 = vld [vmem:[#allocation6 + $0x8c] sm:$0xf]
    %v4947 = vld [vmem:[#allocation6 + $0x90] sm:$0xf]
    %v4948 = vld [vmem:[#allocation6 + $0x94] sm:$0xf]
    %v4949 = vld [vmem:[#allocation6 + $0x98] sm:$0xf]
    %v4950 = vld [vmem:[#allocation6 + $0x9c] sm:$0xf]
    %v4951 = vld [vmem:[#allocation6 + $0xa0] sm:$0xf]
    %v4952 = vld [vmem:[#allocation6 + $0xa4] sm:$0xf]
    %v4953 = vld [vmem:[#allocation6 + $0xa8] sm:$0xf]
    %v4954 = vld [vmem:[#allocation6 + $0xac] sm:$0xf]
    %v4955 = vld [vmem:[#allocation6 + $0xb0] sm:$0xf]
    %v4956 = vld [vmem:[#allocation6 + $0xb4] sm:$0xf]
    %v4957 = vld [vmem:[#allocation6 + $0xb8] sm:$0xf]
    %v4958 = vld [vmem:[#allocation6 + $0xbc] sm:$0xf]
    %v4959 = vld [vmem:[#allocation6 + $0xc0] sm:$0xf]
    %v4960 = vld [vmem:[#allocation6 + $0xc4] sm:$0xf]
    %v4961 = vld [vmem:[#allocation6 + $0xc8] sm:$0xf]
    %v4962 = vld [vmem:[#allocation6 + $0xcc] sm:$0xf]
    %v4963 = vld [vmem:[#allocation6 + $0xd0] sm:$0xf]
    %v4964 = vld [vmem:[#allocation6 + $0xd4] sm:$0xf]
    %v4965 = vld [vmem:[#allocation6 + $0xd8] sm:$0xf]
    %v4966 = vld [vmem:[#allocation6 + $0xdc] sm:$0xf]
    %v4967 = vld [vmem:[#allocation6 + $0xe0] sm:$0xf]
    %v4968 = vld [vmem:[#allocation6 + $0xe4] sm:$0xf]
    %v4969 = vld [vmem:[#allocation6 + $0xe8] sm:$0xf]
    %v4970 = vld [vmem:[#allocation6 + $0xec] sm:$0xf]
    %v4971 = vld [vmem:[#allocation6 + $0xf0] sm:$0xf]
    %v4972 = vld [vmem:[#allocation6 + $0xf4] sm:$0xf]
    %v4973 = vld [vmem:[#allocation6 + $0xf8] sm:$0xf]
    %v4974 = vld [vmem:[#allocation6 + $0xfc] sm:$0xf]
    %v4976 = vlaneseq
    %v4977 = vshrl.u32 %v4976, 7
    %v4978 = vsub.s32 0, %v4977
    %v4979 = vrot.slane %v82, %v4978
    %v5045 = vunpack.c.l.b16 %v4911
    %v5046 = vunpack.c.l.b16 %v4912
    %v5047 = vunpack.c.l.b16 %v4913
    %v5048 = vunpack.c.l.b16 %v4914
    %v5049 = vunpack.c.l.b16 %v4915
    %v5050 = vunpack.c.l.b16 %v4916
    %v5051 = vunpack.c.l.b16 %v4917
    %v5052 = vunpack.c.l.b16 %v4918
    %v5053 = vunpack.c.l.b16 %v4919
    %v5054 = vunpack.c.l.b16 %v4920
    %v5055 = vunpack.c.l.b16 %v4921
    %v5056 = vunpack.c.l.b16 %v4922
    %v5057 = vunpack.c.l.b16 %v4923
    %v5058 = vunpack.c.l.b16 %v4924
    %v5059 = vunpack.c.l.b16 %v4925
    %v5060 = vunpack.c.l.b16 %v4926
    %v5061 = vunpack.c.l.b16 %v4927
    %v5062 = vunpack.c.l.b16 %v4928
    %v5063 = vunpack.c.l.b16 %v4929
    %v5064 = vunpack.c.l.b16 %v4930
    %v5065 = vunpack.c.l.b16 %v4931
    %v5066 = vunpack.c.l.b16 %v4932
    %v5067 = vunpack.c.l.b16 %v4933
    %v5068 = vunpack.c.l.b16 %v4934
    %v5069 = vunpack.c.l.b16 %v4935
    %v5070 = vunpack.c.l.b16 %v4936
    %v5071 = vunpack.c.l.b16 %v4937
    %v5072 = vunpack.c.l.b16 %v4938
    %v5073 = vunpack.c.l.b16 %v4939
    %v5074 = vunpack.c.l.b16 %v4940
    %v5075 = vunpack.c.l.b16 %v4941
    %v5076 = vunpack.c.l.b16 %v4942
    %v5077 = vunpack.c.l.b16 %v4943
    %v5078 = vunpack.c.l.b16 %v4944
    %v5079 = vunpack.c.l.b16 %v4945
    %v5080 = vunpack.c.l.b16 %v4946
    %v5081 = vunpack.c.l.b16 %v4947
    %v5082 = vunpack.c.l.b16 %v4948
    %v5083 = vunpack.c.l.b16 %v4949
    %v5084 = vunpack.c.l.b16 %v4950
    %v5085 = vunpack.c.l.b16 %v4951
    %v5086 = vunpack.c.l.b16 %v4952
    %v5087 = vunpack.c.l.b16 %v4953
    %v5088 = vunpack.c.l.b16 %v4954
    %v5089 = vunpack.c.l.b16 %v4955
    %v5090 = vunpack.c.l.b16 %v4956
    %v5091 = vunpack.c.l.b16 %v4957
    %v5092 = vunpack.c.l.b16 %v4958
    %v5093 = vunpack.c.l.b16 %v4959
    %v5094 = vunpack.c.l.b16 %v4960
    %v5095 = vunpack.c.l.b16 %v4961
    %v5096 = vunpack.c.l.b16 %v4962
    %v5097 = vunpack.c.l.b16 %v4963
    %v5098 = vunpack.c.l.b16 %v4964
    %v5099 = vunpack.c.l.b16 %v4965
    %v5100 = vunpack.c.l.b16 %v4966
    %v5101 = vunpack.c.l.b16 %v4967
    %v5102 = vunpack.c.l.b16 %v4968
    %v5103 = vunpack.c.l.b16 %v4969
    %v5104 = vunpack.c.l.b16 %v4970
    %v5105 = vunpack.c.l.b16 %v4971
    %v5106 = vunpack.c.l.b16 %v4972
    %v5107 = vunpack.c.l.b16 %v4973
    %v5108 = vunpack.c.l.b16 %v4974
    %v5109 = vpack.c.b16 %v5046, %v5045
    %v5110 = vpack.c.b16 %v5048, %v5047
    %v5111 = vpack.c.b16 %v5050, %v5049
    %v5112 = vpack.c.b16 %v5052, %v5051
    %v5113 = vpack.c.b16 %v5054, %v5053
    %v5114 = vpack.c.b16 %v5056, %v5055
    %v5115 = vpack.c.b16 %v5058, %v5057
    %v5116 = vpack.c.b16 %v5060, %v5059
    %v5117 = vpack.c.b16 %v5062, %v5061
    %v5118 = vpack.c.b16 %v5064, %v5063
    %v5119 = vpack.c.b16 %v5066, %v5065
    %v5120 = vpack.c.b16 %v5068, %v5067
    %v5121 = vpack.c.b16 %v5070, %v5069
    %v5122 = vpack.c.b16 %v5072, %v5071
    %v5123 = vpack.c.b16 %v5074, %v5073
    %v5124 = vpack.c.b16 %v5076, %v5075
    %v5125 = vpack.c.b16 %v5078, %v5077
    %v5126 = vpack.c.b16 %v5080, %v5079
    %v5127 = vpack.c.b16 %v5082, %v5081
    %v5128 = vpack.c.b16 %v5084, %v5083
    %v5129 = vpack.c.b16 %v5086, %v5085
    %v5130 = vpack.c.b16 %v5088, %v5087
    %v5131 = vpack.c.b16 %v5090, %v5089
    %v5132 = vpack.c.b16 %v5092, %v5091
    %v5133 = vpack.c.b16 %v5094, %v5093
    %v5134 = vpack.c.b16 %v5096, %v5095
    %v5135 = vpack.c.b16 %v5098, %v5097
    %v5136 = vpack.c.b16 %v5100, %v5099
    %v5137 = vpack.c.b16 %v5102, %v5101
    %v5138 = vpack.c.b16 %v5104, %v5103
    %v5139 = vpack.c.b16 %v5106, %v5105
    %v5140 = vpack.c.b16 %v5108, %v5107
    %5173 = vmatprep.subr.bf16.mxu0 0
    %5174 = vmatpush1.bf16.msra.mxu0 %v5116
    %5175 = vmatprep.subr.bf16.mxu0 0
    %5176 = vmatpush1.bf16.msra.mxu0 %v5115
    %5177 = vmatprep.subr.bf16.mxu0 0
    %5178 = vmatpush1.bf16.msra.mxu0 %v5114
    %5179 = vmatprep.subr.bf16.mxu0 0
    %5180 = vmatpush1.bf16.msra.mxu0 %v5113
    %5181 = vmatprep.subr.bf16.mxu0 0
    %5182 = vmatpush1.bf16.msra.mxu0 %v5112
    %5183 = vmatprep.subr.bf16.mxu0 0
    %5184 = vmatpush1.bf16.msra.mxu0 %v5111
    %5185 = vmatprep.subr.bf16.mxu0 0
    %5186 = vmatpush1.bf16.msra.mxu0 %v5110
    %5187 = vmatprep.subr.bf16.mxu0 0
    %5188 = vmatpush1.bf16.msra.mxu0 %v5109
    %5189 = vmatprep.subr.bf16.mxu0 0
    %5190 = vmatpush2.bf16.msra.mxu0 %v5124
    %5191 = vmatprep.subr.bf16.mxu0 0
    %5192 = vmatpush2.bf16.msra.mxu0 %v5123
    %5193 = vmatprep.subr.bf16.mxu0 0
    %5194 = vmatpush2.bf16.msra.mxu0 %v5122
    %5195 = vmatprep.subr.bf16.mxu0 0
    %5196 = vmatpush2.bf16.msra.mxu0 %v5121
    %5197 = vmatprep.subr.bf16.mxu0 0
    %5198 = vmatpush2.bf16.msra.mxu0 %v5120
    %5199 = vmatprep.subr.bf16.mxu0 0
    %5200 = vmatpush2.bf16.msra.mxu0 %v5119
    %5201 = vmatprep.subr.bf16.mxu0 0
    %5202 = vmatpush2.bf16.msra.mxu0 %v5118
    %5203 = vmatprep.subr.bf16.mxu0 0
    %5204 = vmatpush2.bf16.msra.mxu0 %v5117
    %5205 = vmatprep.mubr.bf16.mxu0 %v4908
    %5206 = vmatmul.mubr.bf16.gmra.mxu0 %v4907
    %v5207 = vpop.f32.mrf.mxu0
    %v5208 = vadd.f32 %v4979, %v5207
    %v5209 = vpop.f32.mrf.mxu0
    %v5210 = vpop.f32.mrf.mxu0
    %v5211 = vadd.f32 %v4979, %v5210
    %v5212 = vpop.f32.mrf.mxu0
    %5213 = vdwg.mxu0
    %5214 = vmatprep.subr.bf16.mxu0 0
    %5215 = vmatpush1.bf16.msra.mxu0 %v5132
    %5216 = vmatprep.subr.bf16.mxu0 0
    %5217 = vmatpush1.bf16.msra.mxu0 %v5131
    %5218 = vmatprep.subr.bf16.mxu0 0
    %5219 = vmatpush1.bf16.msra.mxu0 %v5130
    %5220 = vmatprep.subr.bf16.mxu0 0
    %5221 = vmatpush1.bf16.msra.mxu0 %v5129
    %5222 = vmatprep.subr.bf16.mxu0 0
    %5223 = vmatpush1.bf16.msra.mxu0 %v5128
    %5224 = vmatprep.subr.bf16.mxu0 0
    %5225 = vmatpush1.bf16.msra.mxu0 %v5127
    %5226 = vmatprep.subr.bf16.mxu0 0
    %5227 = vmatpush1.bf16.msra.mxu0 %v5126
    %5228 = vmatprep.subr.bf16.mxu0 0
    %5229 = vmatpush1.bf16.msra.mxu0 %v5125
    %5230 = vmatprep.subr.bf16.mxu0 0
    %5231 = vmatpush2.bf16.msra.mxu0 %v5140
    %5232 = vmatprep.subr.bf16.mxu0 0
    %5233 = vmatpush2.bf16.msra.mxu0 %v5139
    %5234 = vmatprep.subr.bf16.mxu0 0
    %5235 = vmatpush2.bf16.msra.mxu0 %v5138
    %5236 = vmatprep.subr.bf16.mxu0 0
    %5237 = vmatpush2.bf16.msra.mxu0 %v5137
    %5238 = vmatprep.subr.bf16.mxu0 0
    %5239 = vmatpush2.bf16.msra.mxu0 %v5136
    %5240 = vmatprep.subr.bf16.mxu0 0
    %5241 = vmatpush2.bf16.msra.mxu0 %v5135
    %5242 = vmatprep.subr.bf16.mxu0 0
    %5243 = vmatpush2.bf16.msra.mxu0 %v5134
    %5244 = vmatprep.subr.bf16.mxu0 0
    %5245 = vmatpush2.bf16.msra.mxu0 %v5133
    %5246 = vmatprep.mubr.bf16.mxu0 %v4910
    %5247 = vmatmul.mubr.bf16.gmra.mxu0 %v4909
    %v5248 = vpop.f32.mrf.mxu0
    %v5249 = vadd.f32 %v5208, %v5248
    %v5250 = vpop.f32.mrf.mxu0
    %v5251 = vpop.f32.mrf.mxu0
    %v5252 = vadd.f32 %v5211, %v5251
    %v5253 = vpop.f32.mrf.mxu0
    %5254 = vdwg.mxu0
    %5255 = vst [vmem:[%s5] sm:$0xff] %v5249
    %5256 = vst [vmem:[%s5 + $0x8] sm:$0xff] %v5252
    // Predicated region
    $region38: #{openclip_classifier_head.1} parent=1 // pred_check
      _
    $region39: #{openclip_classifier_head.1} parent=1 // pred_check_branch
      %5258 = sbr.rel (0) target = $region41
    $region40: #{openclip_classifier_head.1} parent=1 // pred_region
      _
    $region41: #{openclip_classifier_head.1} parent=1 // pred_fallthru
      _
    // Predicated region
    $region42: #{openclip_classifier_head.1} parent=1 // pred_check
      _
    $region43: #{openclip_classifier_head.1} parent=1 // pred_check_branch
      %5260 = sbr.rel (0) target = $region45
    $region44: #{openclip_classifier_head.1} parent=1 // pred_region
      _
    $region45: #{openclip_classifier_head.1} parent=1 // pred_fallthru
      _
    %5261 = vsyncpa [#allocation3], 1
    %5262 = vsyncpa [#allocation5], 1
    %5263 = vsyncpa [#allocation8], 1

</llo_original>
